<compile_context>
chip_gen: v6e
topology: v6e:2x2x1
jax: 0.10.0
libtpu: 0.0.40
codegen_flags: <defaults>
</compile_context>

<pallas_src>
import jax
import jax.numpy as jnp
from jax import lax
from jax.experimental import pallas as pl
from jax.experimental.pallas import tpu as pltpu


def _sigmoid(x):
    # single EUP op instead of exp + divide
    return 0.5 * jnp.tanh(0.5 * x) + 0.5


# ----------------------------------------------------------------------------
# Fused kernel: embedding -> LSTM x3 (wavefront) -> linear -> sigmoid
# Weight layout (prepared by prepare_params); gate order along 4Hp is (i,f,o,g),
# i/f/o columns pre-scaled by 0.5, padded gate lanes are exactly 0:
#   embproj : (V, 4Hp)   bf16   = emb_table @ W_ih1^T   (bias NOT included)
#   whh1    : (Hp, 4Hp)  bf16
#   w2c/w3c : (2Hp, 4Hp) bf16   = [[W_ih],[W_hh]] row-stacked
#   b1/2/3  : (1, 4Hp)   f32    b_ih + b_hh
#   wlin    : (1, Hp)    f32    Linear weight row, zero-padded
#   blin    : (1, 1)     f32
# ----------------------------------------------------------------------------
def _classifier_kernel(tok_ref, embproj_ref, whh1_ref, w2c_ref, w3c_ref,
                       b1_ref, b2_ref, b3_ref, wlin_ref, blin_ref,
                       out_ref, xproj_scr):
    TB, Hp4 = xproj_scr.shape
    Hp = Hp4 // 4
    B = out_ref.shape[0]
    T = TB // B
    V = embproj_ref.shape[0]

    # ---- embedding + layer-1 input projection, hoisted over the whole
    #      sequence; layer-1 bias folded in ONCE here (off the serial loop).
    tok = tok_ref[...]                                               # (TB, 1) int32
    onehot = jnp.where(
        tok == lax.broadcasted_iota(jnp.int32, (TB, V), 1), 1.0, 0.0
    ).astype(jnp.bfloat16)                                           # (TB, V)
    xproj_scr[...] = (jnp.dot(onehot, embproj_ref[...],
                              preferred_element_type=jnp.float32)
                      + b1_ref[...])                                 # (TB, 4Hp)

    # Loop-invariant bias broadcasts hoisted out of the unrolled waves
    # (JAX does not CSE broadcast_in_dim inside the unrolled loop).
    b2 = jnp.broadcast_to(b2_ref[...], (B, Hp4))
    b3 = jnp.broadcast_to(b3_ref[...], (B, Hp4))

    def activate(gates, c):
        # Gate order (i,f,o,g); i/f/o columns pre-scaled by 0.5 at pack time,
        # so sigmoid == 0.5*tanh(x) + 0.5 with no inner multiply.  One tanh on
        # the contiguous (B,3Hp) sigmoid slab + one tanh on the g slab.
        sig = 0.5 * jnp.tanh(gates[:, :3 * Hp]) + 0.5
        g_g = jnp.tanh(gates[:, 3 * Hp:])
        i_g = sig[:, 0 * Hp:1 * Hp]          # 128-lane aligned slices
        f_g = sig[:, 1 * Hp:2 * Hp]
        o_g = sig[:, 2 * Hp:3 * Hp]
        c_n = f_g * c + i_g * g_g
        h_n = o_g * jnp.tanh(c_n)
        return h_n, c_n

    z = jnp.zeros((B, Hp), jnp.float32)
    h1, c1, h2, c2, h3, c3 = z, z, z, z, z, z

    # Wavefront schedule: wave w computes layer-1 step w, layer-2 step w-1,
    # layer-3 step w-2.  Inputs of every matmul in a wave come from the
    # PREVIOUS wave's state, so the (up to 3) matmuls of a wave are mutually
    # independent and overlap in the MXU; critical path ~= T+2 waves.
    # T is small & static -> full Python unroll (bounded code size).
    for w in range(T + 2):
        do1 = w < T
        do2 = 1 <= w <= T
        do3 = 2 <= w <= T + 1
        if do1:
            g1 = (xproj_scr[w * B:(w + 1) * B, :]
                  + jnp.dot(h1.astype(jnp.bfloat16), whh1_ref[...],
                            preferred_element_type=jnp.float32))
            nh1, nc1 = activate(g1, c1)
        if do2:
            # fused input-projection + recurrence: [h1, h2] @ [[W_ih2],[W_hh2]]
            x2 = jnp.concatenate([h1, h2], axis=1).astype(jnp.bfloat16)  # (B,2Hp)
            g2 = jnp.dot(x2, w2c_ref[...],
                         preferred_element_type=jnp.float32) + b2
            nh2, nc2 = activate(g2, c2)
        if do3:
            x3 = jnp.concatenate([h2, h3], axis=1).astype(jnp.bfloat16)
            g3 = jnp.dot(x3, w3c_ref[...],
                         preferred_element_type=jnp.float32) + b3
            nh3, nc3 = activate(g3, c3)
        if do1:
            h1, c1 = nh1, nc1
        if do2:
            h2, c2 = nh2, nc2
        if do3:
            h3, c3 = nh3, nc3

    # ---- head: Linear(H, 1) + sigmoid, as VPU mul + lane reduction
    logits = (jnp.sum(h3 * wlin_ref[...], axis=-1, keepdims=True)
              + blin_ref[...])                                       # (B, 1)
    out_ref[...] = (0.5 * jnp.tanh(0.5 * logits) + 0.5).astype(out_ref.dtype)


def _full_vmem_spec(shape):
    zeros = (0,) * len(shape)
    return pl.BlockSpec(shape, lambda *_: zeros)


def _fused_forward(tok_flat, params, b_pad):
    (embproj, whh1, w2c, w3c, b1, b2, b3, wlin, blin) = params
    tb = tok_flat.shape[0]
    hp = whh1.shape[0]
    operands = (tok_flat, embproj, whh1, w2c, w3c, b1, b2, b3, wlin, blin)
    return pl.pallas_call(
        _classifier_kernel,
        out_shape=jax.ShapeDtypeStruct((b_pad, 1), jnp.float32),
        in_specs=[_full_vmem_spec(x.shape) for x in operands],
        out_specs=_full_vmem_spec((b_pad, 1)),
        scratch_shapes=[
            pltpu.VMEM((tb, 4 * hp), jnp.float32),   # hoisted layer-1 projections
        ],
        compiler_params=pltpu.CompilerParams(vmem_limit_bytes=32 * 1024 * 1024),
    )(*operands)


@jax.jit
def classifier_forward(tokens, params):
    """tokens: (T, B) int32 -> (B,) f32 probabilities (== Classifier.forward)."""
    T, B = tokens.shape
    b_pad = max(8, ((B + 7) // 8) * 8)               # fill f32 sublanes
    tok = jnp.pad(tokens, ((0, 0), (0, b_pad - B)))  # pad batch with token 0
    tok_flat = tok.reshape(T * b_pad, 1).astype(jnp.int32)
    probs = _fused_forward(tok_flat, params, b_pad)  # (b_pad, 1)
    return probs[:B, 0]


# ----------------------------------------------------------------------------
# Parameter packing: transpose to right-multiply form, pad H -> multiple of 128
# per gate (exact: padded lanes stay 0), reorder gates to (i,f,o,g), pre-scale
# the i/f/o columns by 0.5, fold embedding into layer-1 W_ih, row-stack
# W_ih/W_hh for layers 2/3, cast the big matrices to bf16.
# ----------------------------------------------------------------------------
def prepare_params(emb_table, lstm_raw, w_lin, b_lin):
    """lstm_raw: 3 x (w_ih (4H,Din), w_hh (4H,H), b_ih (4H,), b_hh (4H,)) torch layout."""
    H = lstm_raw[0][1].shape[1]
    Hp = ((H + 127) // 128) * 128

    def gate_pack_cols(w_t):
        # (D, 4H) torch gate order (i,f,g,o) -> (D, 4Hp) kernel order (i,f,o,g),
        # each gate zero-padded to Hp lanes; i/f/o columns pre-scaled by 0.5
        # (exact power-of-2 scale) so the kernel sigmoid has no inner multiply.
        i_b, f_b, g_b, o_b = (w_t[:, g * H:(g + 1) * H] for g in range(4))
        pad = lambda b: jnp.pad(b, ((0, 0), (0, Hp - H)))
        return jnp.concatenate(
            [0.5 * pad(i_b), 0.5 * pad(f_b), 0.5 * pad(o_b), pad(g_b)], axis=1)

    def pad_rows(w, rows):
        return jnp.pad(w, ((0, rows - w.shape[0]), (0, 0)))

    wih_t, whh_t, bias = [], [], []
    for (w_ih, w_hh, b_ih, b_hh) in lstm_raw:
        wih_t.append(gate_pack_cols(w_ih.T.astype(jnp.float32)))                 # (Din, 4Hp)
        whh_t.append(pad_rows(gate_pack_cols(w_hh.T.astype(jnp.float32)), Hp))   # (Hp, 4Hp)
        bias.append(gate_pack_cols((b_ih + b_hh).astype(jnp.float32)[None, :]))  # (1, 4Hp)

    # Fuse embedding with layer-1 input projection:  onehot @ (E_table @ W_ih1)
    embproj = (emb_table.astype(jnp.float32) @ wih_t[0]).astype(jnp.bfloat16)    # (V, 4Hp)
    whh1 = whh_t[0].astype(jnp.bfloat16)                                         # (Hp, 4Hp)
    # Layers 2/3: stack W_ih on top of W_hh so per-wave x-proj + recurrence is
    # ONE matmul:  [h_prev_layer, h_this_layer] @ [[W_ih],[W_hh]].
    w2c = jnp.concatenate([pad_rows(wih_t[1], Hp), whh_t[1]],
                          axis=0).astype(jnp.bfloat16)                           # (2Hp, 4Hp)
    w3c = jnp.concatenate([pad_rows(wih_t[2], Hp), whh_t[2]],
                          axis=0).astype(jnp.bfloat16)

    wlin = jnp.pad(w_lin.astype(jnp.float32), ((0, 0), (0, Hp - H)))             # (1, Hp)
    blin = b_lin.astype(jnp.float32).reshape(1, 1)

    return (embproj, whh1, w2c, w3c, bias[0], bias[1], bias[2], wlin, blin)


# ----------------------------------------------------------------------------
# Pure-JAX reference (mirrors the kernel's bf16-weight numerics) for checking.
# ----------------------------------------------------------------------------
def reference_forward(tokens, emb_table, lstm_raw, w_lin, b_lin):
    T, B = tokens.shape
    x_seq = None
    for li, (w_ih, w_hh, b_ih, b_hh) in enumerate(lstm_raw):
        H = w_hh.shape[1]
        w_ih_t = w_ih.T.astype(jnp.float32)
        w_hh_bf = w_hh.T.astype(jnp.float32).astype(jnp.bfloat16)
        bias = (b_ih + b_hh).astype(jnp.float32)
        if li == 0:
            embproj = (emb_table.astype(jnp.float32) @ w_ih_t).astype(jnp.bfloat16)
            xproj = embproj[tokens].astype(jnp.float32)                 # (T, B, 4H)
        else:
            xproj = jnp.einsum('tbh,hk->tbk',
                               x_seq.astype(jnp.bfloat16),
                               w_ih_t.astype(jnp.bfloat16),
                               preferred_element_type=jnp.float32)

        def step(carry, xp_t, _whh=w_hh_bf, _b=bias, _H=H):
            h, c = carry
            gates = xp_t + jnp.dot(h.astype(jnp.bfloat16), _whh,
                                   preferred_element_type=jnp.float32) + _b
            i = _sigmoid(gates[:, 0 * _H:1 * _H])
            f = _sigmoid(gates[:, 1 * _H:2 * _H])
            g = jnp.tanh(gates[:, 2 * _H:3 * _H])
            o = _sigmoid(gates[:, 3 * _H:4 * _H])
            c = f * c + i * g
            h = o * jnp.tanh(c)
            return (h, c), h

        init = (jnp.zeros((B, H), jnp.float32), jnp.zeros((B, H), jnp.float32))
        _, x_seq = lax.scan(step, init, xproj)                          # (T, B, H)

    h_last = x_seq[-1]                                                  # (B, H)
    logits = h_last @ w_lin.T.astype(jnp.float32) + b_lin.astype(jnp.float32)
    return _sigmoid(logits)[:, 0]


if __name__ == "__main__":
    T, B, V, E, H = 8, 2, 16, 16, 32   # seq, batch, vocab, embed, hidden_dims

    key = jax.random.PRNGKey(0)
    ks = jax.random.split(key, 16)

    # token ids (T, B) -- seq-first, matching batch_first=False nn.LSTM.
    tokens = jax.random.randint(ks[0], (T, B), 0, V, dtype=jnp.int32)

    # deterministic synthetic parameters (torch layouts).
    emb_table = (jax.random.normal(ks[1], (V, E)) * 0.1).astype(jnp.float32)

    lstm_raw = []
    d_in = E
    for layer in range(3):
        w_ih = (jax.random.normal(ks[2 + 4 * layer], (4 * H, d_in)) * 0.1).astype(jnp.float32)
        w_hh = (jax.random.normal(ks[3 + 4 * layer], (4 * H, H)) * 0.1).astype(jnp.float32)
        b_ih = (jax.random.normal(ks[4 + 4 * layer], (4 * H,)) * 0.1).astype(jnp.float32)
        b_hh = (jax.random.normal(ks[5 + 4 * layer], (4 * H,)) * 0.1).astype(jnp.float32)
        lstm_raw.append((w_ih, w_hh, b_ih, b_hh))
        d_in = H

    w_lin = (jax.random.normal(ks[14], (1, H)) * 0.1).astype(jnp.float32)  # nn.Linear(H,1)
    b_lin = jnp.zeros((1,), jnp.float32)

    params = prepare_params(emb_table, lstm_raw, w_lin, b_lin)

    out = classifier_forward(tokens, params)
    out = jax.block_until_ready(out)
    assert out.shape == (B,)

    ref = jax.block_until_ready(reference_forward(tokens, emb_table, lstm_raw, w_lin, b_lin))
    err = float(jnp.max(jnp.abs(out - ref)))
    assert err < 1e-2, f"kernel/reference mismatch: max|diff|={err}"

    print("KERNEL_OK")
</pallas_src>

<mosaic_0001>
module attributes {stable_mosaic.version = 11 : i64} {
  func.func @_classifier_kernel(%arg0: memref<64x1xi32, #tpu.memory_space<vmem>>, %arg1: memref<16x512xbf16, #tpu.memory_space<vmem>>, %arg2: memref<128x512xbf16, #tpu.memory_space<vmem>>, %arg3: memref<256x512xbf16, #tpu.memory_space<vmem>>, %arg4: memref<256x512xbf16, #tpu.memory_space<vmem>>, %arg5: memref<1x512xf32, #tpu.memory_space<vmem>>, %arg6: memref<1x512xf32, #tpu.memory_space<vmem>>, %arg7: memref<1x512xf32, #tpu.memory_space<vmem>>, %arg8: memref<1x128xf32, #tpu.memory_space<vmem>>, %arg9: memref<1x1xf32, #tpu.memory_space<vmem>>, %arg10: memref<8x1xf32, #tpu.memory_space<vmem>>, %arg11: memref<64x512xf32, #tpu.memory_space<vmem>>) attributes {dimension_semantics = [], scalar_prefetch = 0 : i64, scratch_operands = 1 : i64, tpu.core_type = #tpu.core_type<tc>} {
    %c0 = arith.constant 0 : index
    %c0_0 = arith.constant 0 : index
    %0 = vector.load %arg0[%c0, %c0_0] : memref<64x1xi32, #tpu.memory_space<vmem>>, vector<64x1xi32>
    %1 = tpu.iota {dimensions = array<i32: 1>} : vector<64x16xi32>
    %2 = vector.broadcast %0 : vector<64x1xi32> to vector<64x16xi32>
    %3 = arith.cmpi eq, %2, %1 : vector<64x16xi32>
    %cst = arith.constant 1.000000e+00 : f32
    %cst_1 = arith.constant 0.000000e+00 : f32
    %4 = vector.broadcast %cst : f32 to vector<64x16xf32>
    %5 = vector.broadcast %cst_1 : f32 to vector<64x16xf32>
    %6 = arith.select %3, %4, %5 : vector<64x16xi1>, vector<64x16xf32>
    %7 = arith.truncf %6 : vector<64x16xf32> to vector<64x16xbf16>
    %c0_2 = arith.constant 0 : index
    %c0_3 = arith.constant 0 : index
    %8 = vector.load %arg1[%c0_2, %c0_3] : memref<16x512xbf16, #tpu.memory_space<vmem>>, vector<16x512xbf16>
    %cst_4 = arith.constant dense<0.000000e+00> : vector<64x512xf32>
    %9 = tpu.matmul %7, %8, %cst_4 {dimension_numbers = #tpu.dot_dimension_numbers<[1], [0], [0], [1], [0, 0, 1, 1], [], []>} : vector<64x16xbf16>, vector<16x512xbf16>, vector<64x512xf32> -> vector<64x512xf32>
    %c0_5 = arith.constant 0 : index
    %c0_6 = arith.constant 0 : index
    %10 = vector.load %arg5[%c0_5, %c0_6] : memref<1x512xf32, #tpu.memory_space<vmem>>, vector<1x512xf32>
    %11 = vector.broadcast %10 : vector<1x512xf32> to vector<64x512xf32>
    %12 = arith.addf %9, %11 : vector<64x512xf32>
    %c0_7 = arith.constant 0 : index
    %c0_8 = arith.constant 0 : index
    %13 = vector.load %arg11[%c0_7, %c0_8] : memref<64x512xf32, #tpu.memory_space<vmem>>, vector<64x512xf32>
    tpu.vector_store %arg11[%c0_7, %c0_8], %12 {strides = array<i32>} : memref<64x512xf32, #tpu.memory_space<vmem>>, vector<64x512xf32>,
    %c0_9 = arith.constant 0 : index
    %c0_10 = arith.constant 0 : index
    %14 = vector.load %arg6[%c0_9, %c0_10] : memref<1x512xf32, #tpu.memory_space<vmem>>, vector<1x512xf32>
    %15 = vector.shape_cast %14 : vector<1x512xf32> to vector<1x512xf32>
    %16 = vector.broadcast %15 : vector<1x512xf32> to vector<8x512xf32>
    %c0_11 = arith.constant 0 : index
    %c0_12 = arith.constant 0 : index
    %17 = vector.load %arg7[%c0_11, %c0_12] : memref<1x512xf32, #tpu.memory_space<vmem>>, vector<1x512xf32>
    %18 = vector.shape_cast %17 : vector<1x512xf32> to vector<1x512xf32>
    %19 = vector.broadcast %18 : vector<1x512xf32> to vector<8x512xf32>
    %cst_13 = arith.constant 0.000000e+00 : f32
    %20 = vector.broadcast %cst_13 : f32 to vector<8x128xf32>
    %c0_14 = arith.constant 0 : index
    %c0_15 = arith.constant 0 : index
    %21 = vector.load %arg11[%c0_14, %c0_15] : memref<64x512xf32, #tpu.memory_space<vmem>>, vector<8x512xf32>
    %22 = arith.truncf %20 : vector<8x128xf32> to vector<8x128xbf16>
    %c0_16 = arith.constant 0 : index
    %c0_17 = arith.constant 0 : index
    %23 = vector.load %arg2[%c0_16, %c0_17] : memref<128x512xbf16, #tpu.memory_space<vmem>>, vector<128x512xbf16>
    %cst_18 = arith.constant dense<0.000000e+00> : vector<8x512xf32>
    %24 = tpu.matmul %22, %23, %cst_18 {dimension_numbers = #tpu.dot_dimension_numbers<[1], [0], [0], [1], [0, 0, 1, 1], [], []>} : vector<8x128xbf16>, vector<128x512xbf16>, vector<8x512xf32> -> vector<8x512xf32>
    %25 = arith.addf %21, %24 : vector<8x512xf32>
    %26 = vector.extract_strided_slice %25 {offsets = [0, 0], sizes = [8, 384], strides = [1, 1]} : vector<8x512xf32> to vector<8x384xf32>
    %27 = math.tanh %26 : vector<8x384xf32>
    %cst_19 = arith.constant 5.000000e-01 : f32
    %28 = vector.broadcast %cst_19 : f32 to vector<8x384xf32>
    %29 = arith.mulf %28, %27 : vector<8x384xf32>
    %cst_20 = arith.constant 5.000000e-01 : f32
    %30 = vector.broadcast %cst_20 : f32 to vector<8x384xf32>
    %31 = arith.addf %29, %30 : vector<8x384xf32>
    %32 = vector.extract_strided_slice %25 {offsets = [0, 384], sizes = [8, 128], strides = [1, 1]} : vector<8x512xf32> to vector<8x128xf32>
    %33 = math.tanh %32 : vector<8x128xf32>
    %34 = vector.extract_strided_slice %31 {offsets = [0, 0], sizes = [8, 128], strides = [1, 1]} : vector<8x384xf32> to vector<8x128xf32>
    %35 = vector.extract_strided_slice %31 {offsets = [0, 128], sizes = [8, 128], strides = [1, 1]} : vector<8x384xf32> to vector<8x128xf32>
    %36 = vector.extract_strided_slice %31 {offsets = [0, 256], sizes = [8, 128], strides = [1, 1]} : vector<8x384xf32> to vector<8x128xf32>
    %37 = arith.mulf %35, %20 : vector<8x128xf32>
    %38 = arith.mulf %34, %33 : vector<8x128xf32>
    %39 = arith.addf %37, %38 : vector<8x128xf32>
    %40 = math.tanh %39 : vector<8x128xf32>
    %41 = arith.mulf %36, %40 : vector<8x128xf32>
    %c8 = arith.constant 8 : index
    %c0_21 = arith.constant 0 : index
    %42 = vector.load %arg11[%c8, %c0_21] : memref<64x512xf32, #tpu.memory_space<vmem>>, vector<8x512xf32>
    %43 = arith.truncf %41 : vector<8x128xf32> to vector<8x128xbf16>
    %c0_22 = arith.constant 0 : index
    %c0_23 = arith.constant 0 : index
    %44 = vector.load %arg2[%c0_22, %c0_23] : memref<128x512xbf16, #tpu.memory_space<vmem>>, vector<128x512xbf16>
    %cst_24 = arith.constant dense<0.000000e+00> : vector<8x512xf32>
    %45 = tpu.matmul %43, %44, %cst_24 {dimension_numbers = #tpu.dot_dimension_numbers<[1], [0], [0], [1], [0, 0, 1, 1], [], []>} : vector<8x128xbf16>, vector<128x512xbf16>, vector<8x512xf32> -> vector<8x512xf32>
    %46 = arith.addf %42, %45 : vector<8x512xf32>
    %47 = vector.extract_strided_slice %46 {offsets = [0, 0], sizes = [8, 384], strides = [1, 1]} : vector<8x512xf32> to vector<8x384xf32>
    %48 = math.tanh %47 : vector<8x384xf32>
    %cst_25 = arith.constant 5.000000e-01 : f32
    %49 = vector.broadcast %cst_25 : f32 to vector<8x384xf32>
    %50 = arith.mulf %49, %48 : vector<8x384xf32>
    %cst_26 = arith.constant 5.000000e-01 : f32
    %51 = vector.broadcast %cst_26 : f32 to vector<8x384xf32>
    %52 = arith.addf %50, %51 : vector<8x384xf32>
    %53 = vector.extract_strided_slice %46 {offsets = [0, 384], sizes = [8, 128], strides = [1, 1]} : vector<8x512xf32> to vector<8x128xf32>
    %54 = math.tanh %53 : vector<8x128xf32>
    %55 = vector.extract_strided_slice %52 {offsets = [0, 0], sizes = [8, 128], strides = [1, 1]} : vector<8x384xf32> to vector<8x128xf32>
    %56 = vector.extract_strided_slice %52 {offsets = [0, 128], sizes = [8, 128], strides = [1, 1]} : vector<8x384xf32> to vector<8x128xf32>
    %57 = vector.extract_strided_slice %52 {offsets = [0, 256], sizes = [8, 128], strides = [1, 1]} : vector<8x384xf32> to vector<8x128xf32>
    %58 = arith.mulf %56, %39 : vector<8x128xf32>
    %59 = arith.mulf %55, %54 : vector<8x128xf32>
    %60 = arith.addf %58, %59 : vector<8x128xf32>
    %61 = math.tanh %60 : vector<8x128xf32>
    %62 = arith.mulf %57, %61 : vector<8x128xf32>
    %63 = tpu.concatenate %41, %20 in 1 : vector<8x128xf32>, vector<8x128xf32> -> vector<8x256xf32>
    %64 = arith.truncf %63 : vector<8x256xf32> to vector<8x256xbf16>
    %c0_27 = arith.constant 0 : index
    %c0_28 = arith.constant 0 : index
    %65 = vector.load %arg3[%c0_27, %c0_28] : memref<256x512xbf16, #tpu.memory_space<vmem>>, vector<256x512xbf16>
    %cst_29 = arith.constant dense<0.000000e+00> : vector<8x512xf32>
    %66 = tpu.matmul %64, %65, %cst_29 {dimension_numbers = #tpu.dot_dimension_numbers<[1], [0], [0], [1], [0, 0, 1, 1], [], []>} : vector<8x256xbf16>, vector<256x512xbf16>, vector<8x512xf32> -> vector<8x512xf32>
    %67 = arith.addf %66, %16 : vector<8x512xf32>
    %68 = vector.extract_strided_slice %67 {offsets = [0, 0], sizes = [8, 384], strides = [1, 1]} : vector<8x512xf32> to vector<8x384xf32>
    %69 = math.tanh %68 : vector<8x384xf32>
    %cst_30 = arith.constant 5.000000e-01 : f32
    %70 = vector.broadcast %cst_30 : f32 to vector<8x384xf32>
    %71 = arith.mulf %70, %69 : vector<8x384xf32>
    %cst_31 = arith.constant 5.000000e-01 : f32
    %72 = vector.broadcast %cst_31 : f32 to vector<8x384xf32>
    %73 = arith.addf %71, %72 : vector<8x384xf32>
    %74 = vector.extract_strided_slice %67 {offsets = [0, 384], sizes = [8, 128], strides = [1, 1]} : vector<8x512xf32> to vector<8x128xf32>
    %75 = math.tanh %74 : vector<8x128xf32>
    %76 = vector.extract_strided_slice %73 {offsets = [0, 0], sizes = [8, 128], strides = [1, 1]} : vector<8x384xf32> to vector<8x128xf32>
    %77 = vector.extract_strided_slice %73 {offsets = [0, 128], sizes = [8, 128], strides = [1, 1]} : vector<8x384xf32> to vector<8x128xf32>
    %78 = vector.extract_strided_slice %73 {offsets = [0, 256], sizes = [8, 128], strides = [1, 1]} : vector<8x384xf32> to vector<8x128xf32>
    %79 = arith.mulf %77, %20 : vector<8x128xf32>
    %80 = arith.mulf %76, %75 : vector<8x128xf32>
    %81 = arith.addf %79, %80 : vector<8x128xf32>
    %82 = math.tanh %81 : vector<8x128xf32>
    %83 = arith.mulf %78, %82 : vector<8x128xf32>
    %c16 = arith.constant 16 : index
    %c0_32 = arith.constant 0 : index
    %84 = vector.load %arg11[%c16, %c0_32] : memref<64x512xf32, #tpu.memory_space<vmem>>, vector<8x512xf32>
    %85 = arith.truncf %62 : vector<8x128xf32> to vector<8x128xbf16>
    %c0_33 = arith.constant 0 : index
    %c0_34 = arith.constant 0 : index
    %86 = vector.load %arg2[%c0_33, %c0_34] : memref<128x512xbf16, #tpu.memory_space<vmem>>, vector<128x512xbf16>
    %cst_35 = arith.constant dense<0.000000e+00> : vector<8x512xf32>
    %87 = tpu.matmul %85, %86, %cst_35 {dimension_numbers = #tpu.dot_dimension_numbers<[1], [0], [0], [1], [0, 0, 1, 1], [], []>} : vector<8x128xbf16>, vector<128x512xbf16>, vector<8x512xf32> -> vector<8x512xf32>
    %88 = arith.addf %84, %87 : vector<8x512xf32>
    %89 = vector.extract_strided_slice %88 {offsets = [0, 0], sizes = [8, 384], strides = [1, 1]} : vector<8x512xf32> to vector<8x384xf32>
    %90 = math.tanh %89 : vector<8x384xf32>
    %cst_36 = arith.constant 5.000000e-01 : f32
    %91 = vector.broadcast %cst_36 : f32 to vector<8x384xf32>
    %92 = arith.mulf %91, %90 : vector<8x384xf32>
    %cst_37 = arith.constant 5.000000e-01 : f32
    %93 = vector.broadcast %cst_37 : f32 to vector<8x384xf32>
    %94 = arith.addf %92, %93 : vector<8x384xf32>
    %95 = vector.extract_strided_slice %88 {offsets = [0, 384], sizes = [8, 128], strides = [1, 1]} : vector<8x512xf32> to vector<8x128xf32>
    %96 = math.tanh %95 : vector<8x128xf32>
    %97 = vector.extract_strided_slice %94 {offsets = [0, 0], sizes = [8, 128], strides = [1, 1]} : vector<8x384xf32> to vector<8x128xf32>
    %98 = vector.extract_strided_slice %94 {offsets = [0, 128], sizes = [8, 128], strides = [1, 1]} : vector<8x384xf32> to vector<8x128xf32>
    %99 = vector.extract_strided_slice %94 {offsets = [0, 256], sizes = [8, 128], strides = [1, 1]} : vector<8x384xf32> to vector<8x128xf32>
    %100 = arith.mulf %98, %60 : vector<8x128xf32>
    %101 = arith.mulf %97, %96 : vector<8x128xf32>
    %102 = arith.addf %100, %101 : vector<8x128xf32>
    %103 = math.tanh %102 : vector<8x128xf32>
    %104 = arith.mulf %99, %103 : vector<8x128xf32>
    %105 = tpu.concatenate %62, %83 in 1 : vector<8x128xf32>, vector<8x128xf32> -> vector<8x256xf32>
    %106 = arith.truncf %105 : vector<8x256xf32> to vector<8x256xbf16>
    %c0_38 = arith.constant 0 : index
    %c0_39 = arith.constant 0 : index
    %107 = vector.load %arg3[%c0_38, %c0_39] : memref<256x512xbf16, #tpu.memory_space<vmem>>, vector<256x512xbf16>
    %cst_40 = arith.constant dense<0.000000e+00> : vector<8x512xf32>
    %108 = tpu.matmul %106, %107, %cst_40 {dimension_numbers = #tpu.dot_dimension_numbers<[1], [0], [0], [1], [0, 0, 1, 1], [], []>} : vector<8x256xbf16>, vector<256x512xbf16>, vector<8x512xf32> -> vector<8x512xf32>
    %109 = arith.addf %108, %16 : vector<8x512xf32>
    %110 = vector.extract_strided_slice %109 {offsets = [0, 0], sizes = [8, 384], strides = [1, 1]} : vector<8x512xf32> to vector<8x384xf32>
    %111 = math.tanh %110 : vector<8x384xf32>
    %cst_41 = arith.constant 5.000000e-01 : f32
    %112 = vector.broadcast %cst_41 : f32 to vector<8x384xf32>
    %113 = arith.mulf %112, %111 : vector<8x384xf32>
    %cst_42 = arith.constant 5.000000e-01 : f32
    %114 = vector.broadcast %cst_42 : f32 to vector<8x384xf32>
    %115 = arith.addf %113, %114 : vector<8x384xf32>
    %116 = vector.extract_strided_slice %109 {offsets = [0, 384], sizes = [8, 128], strides = [1, 1]} : vector<8x512xf32> to vector<8x128xf32>
    %117 = math.tanh %116 : vector<8x128xf32>
    %118 = vector.extract_strided_slice %115 {offsets = [0, 0], sizes = [8, 128], strides = [1, 1]} : vector<8x384xf32> to vector<8x128xf32>
    %119 = vector.extract_strided_slice %115 {offsets = [0, 128], sizes = [8, 128], strides = [1, 1]} : vector<8x384xf32> to vector<8x128xf32>
    %120 = vector.extract_strided_slice %115 {offsets = [0, 256], sizes = [8, 128], strides = [1, 1]} : vector<8x384xf32> to vector<8x128xf32>
    %121 = arith.mulf %119, %81 : vector<8x128xf32>
    %122 = arith.mulf %118, %117 : vector<8x128xf32>
    %123 = arith.addf %121, %122 : vector<8x128xf32>
    %124 = math.tanh %123 : vector<8x128xf32>
    %125 = arith.mulf %120, %124 : vector<8x128xf32>
    %126 = tpu.concatenate %83, %20 in 1 : vector<8x128xf32>, vector<8x128xf32> -> vector<8x256xf32>
    %127 = arith.truncf %126 : vector<8x256xf32> to vector<8x256xbf16>
    %c0_43 = arith.constant 0 : index
    %c0_44 = arith.constant 0 : index
    %128 = vector.load %arg4[%c0_43, %c0_44] : memref<256x512xbf16, #tpu.memory_space<vmem>>, vector<256x512xbf16>
    %cst_45 = arith.constant dense<0.000000e+00> : vector<8x512xf32>
    %129 = tpu.matmul %127, %128, %cst_45 {dimension_numbers = #tpu.dot_dimension_numbers<[1], [0], [0], [1], [0, 0, 1, 1], [], []>} : vector<8x256xbf16>, vector<256x512xbf16>, vector<8x512xf32> -> vector<8x512xf32>
    %130 = arith.addf %129, %19 : vector<8x512xf32>
    %131 = vector.extract_strided_slice %130 {offsets = [0, 0], sizes = [8, 384], strides = [1, 1]} : vector<8x512xf32> to vector<8x384xf32>
    %132 = math.tanh %131 : vector<8x384xf32>
    %cst_46 = arith.constant 5.000000e-01 : f32
    %133 = vector.broadcast %cst_46 : f32 to vector<8x384xf32>
    %134 = arith.mulf %133, %132 : vector<8x384xf32>
    %cst_47 = arith.constant 5.000000e-01 : f32
    %135 = vector.broadcast %cst_47 : f32 to vector<8x384xf32>
    %136 = arith.addf %134, %135 : vector<8x384xf32>
    %137 = vector.extract_strided_slice %130 {offsets = [0, 384], sizes = [8, 128], strides = [1, 1]} : vector<8x512xf32> to vector<8x128xf32>
    %138 = math.tanh %137 : vector<8x128xf32>
    %139 = vector.extract_strided_slice %136 {offsets = [0, 0], sizes = [8, 128], strides = [1, 1]} : vector<8x384xf32> to vector<8x128xf32>
    %140 = vector.extract_strided_slice %136 {offsets = [0, 128], sizes = [8, 128], strides = [1, 1]} : vector<8x384xf32> to vector<8x128xf32>
    %141 = vector.extract_strided_slice %136 {offsets = [0, 256], sizes = [8, 128], strides = [1, 1]} : vector<8x384xf32> to vector<8x128xf32>
    %142 = arith.mulf %140, %20 : vector<8x128xf32>
    %143 = arith.mulf %139, %138 : vector<8x128xf32>
    %144 = arith.addf %142, %143 : vector<8x128xf32>
    %145 = math.tanh %144 : vector<8x128xf32>
    %146 = arith.mulf %141, %145 : vector<8x128xf32>
    %c24 = arith.constant 24 : index
    %c0_48 = arith.constant 0 : index
    %147 = vector.load %arg11[%c24, %c0_48] : memref<64x512xf32, #tpu.memory_space<vmem>>, vector<8x512xf32>
    %148 = arith.truncf %104 : vector<8x128xf32> to vector<8x128xbf16>
    %c0_49 = arith.constant 0 : index
    %c0_50 = arith.constant 0 : index
    %149 = vector.load %arg2[%c0_49, %c0_50] : memref<128x512xbf16, #tpu.memory_space<vmem>>, vector<128x512xbf16>
    %cst_51 = arith.constant dense<0.000000e+00> : vector<8x512xf32>
    %150 = tpu.matmul %148, %149, %cst_51 {dimension_numbers = #tpu.dot_dimension_numbers<[1], [0], [0], [1], [0, 0, 1, 1], [], []>} : vector<8x128xbf16>, vector<128x512xbf16>, vector<8x512xf32> -> vector<8x512xf32>
    %151 = arith.addf %147, %150 : vector<8x512xf32>
    %152 = vector.extract_strided_slice %151 {offsets = [0, 0], sizes = [8, 384], strides = [1, 1]} : vector<8x512xf32> to vector<8x384xf32>
    %153 = math.tanh %152 : vector<8x384xf32>
    %cst_52 = arith.constant 5.000000e-01 : f32
    %154 = vector.broadcast %cst_52 : f32 to vector<8x384xf32>
    %155 = arith.mulf %154, %153 : vector<8x384xf32>
    %cst_53 = arith.constant 5.000000e-01 : f32
    %156 = vector.broadcast %cst_53 : f32 to vector<8x384xf32>
    %157 = arith.addf %155, %156 : vector<8x384xf32>
    %158 = vector.extract_strided_slice %151 {offsets = [0, 384], sizes = [8, 128], strides = [1, 1]} : vector<8x512xf32> to vector<8x128xf32>
    %159 = math.tanh %158 : vector<8x128xf32>
    %160 = vector.extract_strided_slice %157 {offsets = [0, 0], sizes = [8, 128], strides = [1, 1]} : vector<8x384xf32> to vector<8x128xf32>
    %161 = vector.extract_strided_slice %157 {offsets = [0, 128], sizes = [8, 128], strides = [1, 1]} : vector<8x384xf32> to vector<8x128xf32>
    %162 = vector.extract_strided_slice %157 {offsets = [0, 256], sizes = [8, 128], strides = [1, 1]} : vector<8x384xf32> to vector<8x128xf32>
    %163 = arith.mulf %161, %102 : vector<8x128xf32>
    %164 = arith.mulf %160, %159 : vector<8x128xf32>
    %165 = arith.addf %163, %164 : vector<8x128xf32>
    %166 = math.tanh %165 : vector<8x128xf32>
    %167 = arith.mulf %162, %166 : vector<8x128xf32>
    %168 = tpu.concatenate %104, %125 in 1 : vector<8x128xf32>, vector<8x128xf32> -> vector<8x256xf32>
    %169 = arith.truncf %168 : vector<8x256xf32> to vector<8x256xbf16>
    %c0_54 = arith.constant 0 : index
    %c0_55 = arith.constant 0 : index
    %170 = vector.load %arg3[%c0_54, %c0_55] : memref<256x512xbf16, #tpu.memory_space<vmem>>, vector<256x512xbf16>
    %cst_56 = arith.constant dense<0.000000e+00> : vector<8x512xf32>
    %171 = tpu.matmul %169, %170, %cst_56 {dimension_numbers = #tpu.dot_dimension_numbers<[1], [0], [0], [1], [0, 0, 1, 1], [], []>} : vector<8x256xbf16>, vector<256x512xbf16>, vector<8x512xf32> -> vector<8x512xf32>
    %172 = arith.addf %171, %16 : vector<8x512xf32>
    %173 = vector.extract_strided_slice %172 {offsets = [0, 0], sizes = [8, 384], strides = [1, 1]} : vector<8x512xf32> to vector<8x384xf32>
    %174 = math.tanh %173 : vector<8x384xf32>
    %cst_57 = arith.constant 5.000000e-01 : f32
    %175 = vector.broadcast %cst_57 : f32 to vector<8x384xf32>
    %176 = arith.mulf %175, %174 : vector<8x384xf32>
    %cst_58 = arith.constant 5.000000e-01 : f32
    %177 = vector.broadcast %cst_58 : f32 to vector<8x384xf32>
    %178 = arith.addf %176, %177 : vector<8x384xf32>
    %179 = vector.extract_strided_slice %172 {offsets = [0, 384], sizes = [8, 128], strides = [1, 1]} : vector<8x512xf32> to vector<8x128xf32>
    %180 = math.tanh %179 : vector<8x128xf32>
    %181 = vector.extract_strided_slice %178 {offsets = [0, 0], sizes = [8, 128], strides = [1, 1]} : vector<8x384xf32> to vector<8x128xf32>
    %182 = vector.extract_strided_slice %178 {offsets = [0, 128], sizes = [8, 128], strides = [1, 1]} : vector<8x384xf32> to vector<8x128xf32>
    %183 = vector.extract_strided_slice %178 {offsets = [0, 256], sizes = [8, 128], strides = [1, 1]} : vector<8x384xf32> to vector<8x128xf32>
    %184 = arith.mulf %182, %123 : vector<8x128xf32>
    %185 = arith.mulf %181, %180 : vector<8x128xf32>
    %186 = arith.addf %184, %185 : vector<8x128xf32>
    %187 = math.tanh %186 : vector<8x128xf32>
    %188 = arith.mulf %183, %187 : vector<8x128xf32>
    %189 = tpu.concatenate %125, %146 in 1 : vector<8x128xf32>, vector<8x128xf32> -> vector<8x256xf32>
    %190 = arith.truncf %189 : vector<8x256xf32> to vector<8x256xbf16>
    %c0_59 = arith.constant 0 : index
    %c0_60 = arith.constant 0 : index
    %191 = vector.load %arg4[%c0_59, %c0_60] : memref<256x512xbf16, #tpu.memory_space<vmem>>, vector<256x512xbf16>
    %cst_61 = arith.constant dense<0.000000e+00> : vector<8x512xf32>
    %192 = tpu.matmul %190, %191, %cst_61 {dimension_numbers = #tpu.dot_dimension_numbers<[1], [0], [0], [1], [0, 0, 1, 1], [], []>} : vector<8x256xbf16>, vector<256x512xbf16>, vector<8x512xf32> -> vector<8x512xf32>
    %193 = arith.addf %192, %19 : vector<8x512xf32>
    %194 = vector.extract_strided_slice %193 {offsets = [0, 0], sizes = [8, 384], strides = [1, 1]} : vector<8x512xf32> to vector<8x384xf32>
    %195 = math.tanh %194 : vector<8x384xf32>
    %cst_62 = arith.constant 5.000000e-01 : f32
    %196 = vector.broadcast %cst_62 : f32 to vector<8x384xf32>
    %197 = arith.mulf %196, %195 : vector<8x384xf32>
    %cst_63 = arith.constant 5.000000e-01 : f32
    %198 = vector.broadcast %cst_63 : f32 to vector<8x384xf32>
    %199 = arith.addf %197, %198 : vector<8x384xf32>
    %200 = vector.extract_strided_slice %193 {offsets = [0, 384], sizes = [8, 128], strides = [1, 1]} : vector<8x512xf32> to vector<8x128xf32>
    %201 = math.tanh %200 : vector<8x128xf32>
    %202 = vector.extract_strided_slice %199 {offsets = [0, 0], sizes = [8, 128], strides = [1, 1]} : vector<8x384xf32> to vector<8x128xf32>
    %203 = vector.extract_strided_slice %199 {offsets = [0, 128], sizes = [8, 128], strides = [1, 1]} : vector<8x384xf32> to vector<8x128xf32>
    %204 = vector.extract_strided_slice %199 {offsets = [0, 256], sizes = [8, 128], strides = [1, 1]} : vector<8x384xf32> to vector<8x128xf32>
    %205 = arith.mulf %203, %144 : vector<8x128xf32>
    %206 = arith.mulf %202, %201 : vector<8x128xf32>
    %207 = arith.addf %205, %206 : vector<8x128xf32>
    %208 = math.tanh %207 : vector<8x128xf32>
    %209 = arith.mulf %204, %208 : vector<8x128xf32>
    %c32 = arith.constant 32 : index
    %c0_64 = arith.constant 0 : index
    %210 = vector.load %arg11[%c32, %c0_64] : memref<64x512xf32, #tpu.memory_space<vmem>>, vector<8x512xf32>
    %211 = arith.truncf %167 : vector<8x128xf32> to vector<8x128xbf16>
    %c0_65 = arith.constant 0 : index
    %c0_66 = arith.constant 0 : index
    %212 = vector.load %arg2[%c0_65, %c0_66] : memref<128x512xbf16, #tpu.memory_space<vmem>>, vector<128x512xbf16>
    %cst_67 = arith.constant dense<0.000000e+00> : vector<8x512xf32>
    %213 = tpu.matmul %211, %212, %cst_67 {dimension_numbers = #tpu.dot_dimension_numbers<[1], [0], [0], [1], [0, 0, 1, 1], [], []>} : vector<8x128xbf16>, vector<128x512xbf16>, vector<8x512xf32> -> vector<8x512xf32>
    %214 = arith.addf %210, %213 : vector<8x512xf32>
    %215 = vector.extract_strided_slice %214 {offsets = [0, 0], sizes = [8, 384], strides = [1, 1]} : vector<8x512xf32> to vector<8x384xf32>
    %216 = math.tanh %215 : vector<8x384xf32>
    %cst_68 = arith.constant 5.000000e-01 : f32
    %217 = vector.broadcast %cst_68 : f32 to vector<8x384xf32>
    %218 = arith.mulf %217, %216 : vector<8x384xf32>
    %cst_69 = arith.constant 5.000000e-01 : f32
    %219 = vector.broadcast %cst_69 : f32 to vector<8x384xf32>
    %220 = arith.addf %218, %219 : vector<8x384xf32>
    %221 = vector.extract_strided_slice %214 {offsets = [0, 384], sizes = [8, 128], strides = [1, 1]} : vector<8x512xf32> to vector<8x128xf32>
    %222 = math.tanh %221 : vector<8x128xf32>
    %223 = vector.extract_strided_slice %220 {offsets = [0, 0], sizes = [8, 128], strides = [1, 1]} : vector<8x384xf32> to vector<8x128xf32>
    %224 = vector.extract_strided_slice %220 {offsets = [0, 128], sizes = [8, 128], strides = [1, 1]} : vector<8x384xf32> to vector<8x128xf32>
    %225 = vector.extract_strided_slice %220 {offsets = [0, 256], sizes = [8, 128], strides = [1, 1]} : vector<8x384xf32> to vector<8x128xf32>
    %226 = arith.mulf %224, %165 : vector<8x128xf32>
    %227 = arith.mulf %223, %222 : vector<8x128xf32>
    %228 = arith.addf %226, %227 : vector<8x128xf32>
    %229 = math.tanh %228 : vector<8x128xf32>
    %230 = arith.mulf %225, %229 : vector<8x128xf32>
    %231 = tpu.concatenate %167, %188 in 1 : vector<8x128xf32>, vector<8x128xf32> -> vector<8x256xf32>
    %232 = arith.truncf %231 : vector<8x256xf32> to vector<8x256xbf16>
    %c0_70 = arith.constant 0 : index
    %c0_71 = arith.constant 0 : index
    %233 = vector.load %arg3[%c0_70, %c0_71] : memref<256x512xbf16, #tpu.memory_space<vmem>>, vector<256x512xbf16>
    %cst_72 = arith.constant dense<0.000000e+00> : vector<8x512xf32>
    %234 = tpu.matmul %232, %233, %cst_72 {dimension_numbers = #tpu.dot_dimension_numbers<[1], [0], [0], [1], [0, 0, 1, 1], [], []>} : vector<8x256xbf16>, vector<256x512xbf16>, vector<8x512xf32> -> vector<8x512xf32>
    %235 = arith.addf %234, %16 : vector<8x512xf32>
    %236 = vector.extract_strided_slice %235 {offsets = [0, 0], sizes = [8, 384], strides = [1, 1]} : vector<8x512xf32> to vector<8x384xf32>
    %237 = math.tanh %236 : vector<8x384xf32>
    %cst_73 = arith.constant 5.000000e-01 : f32
    %238 = vector.broadcast %cst_73 : f32 to vector<8x384xf32>
    %239 = arith.mulf %238, %237 : vector<8x384xf32>
    %cst_74 = arith.constant 5.000000e-01 : f32
    %240 = vector.broadcast %cst_74 : f32 to vector<8x384xf32>
    %241 = arith.addf %239, %240 : vector<8x384xf32>
    %242 = vector.extract_strided_slice %235 {offsets = [0, 384], sizes = [8, 128], strides = [1, 1]} : vector<8x512xf32> to vector<8x128xf32>
    %243 = math.tanh %242 : vector<8x128xf32>
    %244 = vector.extract_strided_slice %241 {offsets = [0, 0], sizes = [8, 128], strides = [1, 1]} : vector<8x384xf32> to vector<8x128xf32>
    %245 = vector.extract_strided_slice %241 {offsets = [0, 128], sizes = [8, 128], strides = [1, 1]} : vector<8x384xf32> to vector<8x128xf32>
    %246 = vector.extract_strided_slice %241 {offsets = [0, 256], sizes = [8, 128], strides = [1, 1]} : vector<8x384xf32> to vector<8x128xf32>
    %247 = arith.mulf %245, %186 : vector<8x128xf32>
    %248 = arith.mulf %244, %243 : vector<8x128xf32>
    %249 = arith.addf %247, %248 : vector<8x128xf32>
    %250 = math.tanh %249 : vector<8x128xf32>
    %251 = arith.mulf %246, %250 : vector<8x128xf32>
    %252 = tpu.concatenate %188, %209 in 1 : vector<8x128xf32>, vector<8x128xf32> -> vector<8x256xf32>
    %253 = arith.truncf %252 : vector<8x256xf32> to vector<8x256xbf16>
    %c0_75 = arith.constant 0 : index
    %c0_76 = arith.constant 0 : index
    %254 = vector.load %arg4[%c0_75, %c0_76] : memref<256x512xbf16, #tpu.memory_space<vmem>>, vector<256x512xbf16>
    %cst_77 = arith.constant dense<0.000000e+00> : vector<8x512xf32>
    %255 = tpu.matmul %253, %254, %cst_77 {dimension_numbers = #tpu.dot_dimension_numbers<[1], [0], [0], [1], [0, 0, 1, 1], [], []>} : vector<8x256xbf16>, vector<256x512xbf16>, vector<8x512xf32> -> vector<8x512xf32>
    %256 = arith.addf %255, %19 : vector<8x512xf32>
    %257 = vector.extract_strided_slice %256 {offsets = [0, 0], sizes = [8, 384], strides = [1, 1]} : vector<8x512xf32> to vector<8x384xf32>
    %258 = math.tanh %257 : vector<8x384xf32>
    %cst_78 = arith.constant 5.000000e-01 : f32
    %259 = vector.broadcast %cst_78 : f32 to vector<8x384xf32>
    %260 = arith.mulf %259, %258 : vector<8x384xf32>
    %cst_79 = arith.constant 5.000000e-01 : f32
    %261 = vector.broadcast %cst_79 : f32 to vector<8x384xf32>
    %262 = arith.addf %260, %261 : vector<8x384xf32>
    %263 = vector.extract_strided_slice %256 {offsets = [0, 384], sizes = [8, 128], strides = [1, 1]} : vector<8x512xf32> to vector<8x128xf32>
    %264 = math.tanh %263 : vector<8x128xf32>
    %265 = vector.extract_strided_slice %262 {offsets = [0, 0], sizes = [8, 128], strides = [1, 1]} : vector<8x384xf32> to vector<8x128xf32>
    %266 = vector.extract_strided_slice %262 {offsets = [0, 128], sizes = [8, 128], strides = [1, 1]} : vector<8x384xf32> to vector<8x128xf32>
    %267 = vector.extract_strided_slice %262 {offsets = [0, 256], sizes = [8, 128], strides = [1, 1]} : vector<8x384xf32> to vector<8x128xf32>
    %268 = arith.mulf %266, %207 : vector<8x128xf32>
    %269 = arith.mulf %265, %264 : vector<8x128xf32>
    %270 = arith.addf %268, %269 : vector<8x128xf32>
    %271 = math.tanh %270 : vector<8x128xf32>
    %272 = arith.mulf %267, %271 : vector<8x128xf32>
    %c40 = arith.constant 40 : index
    %c0_80 = arith.constant 0 : index
    %273 = vector.load %arg11[%c40, %c0_80] : memref<64x512xf32, #tpu.memory_space<vmem>>, vector<8x512xf32>
    %274 = arith.truncf %230 : vector<8x128xf32> to vector<8x128xbf16>
    %c0_81 = arith.constant 0 : index
    %c0_82 = arith.constant 0 : index
    %275 = vector.load %arg2[%c0_81, %c0_82] : memref<128x512xbf16, #tpu.memory_space<vmem>>, vector<128x512xbf16>
    %cst_83 = arith.constant dense<0.000000e+00> : vector<8x512xf32>
    %276 = tpu.matmul %274, %275, %cst_83 {dimension_numbers = #tpu.dot_dimension_numbers<[1], [0], [0], [1], [0, 0, 1, 1], [], []>} : vector<8x128xbf16>, vector<128x512xbf16>, vector<8x512xf32> -> vector<8x512xf32>
    %277 = arith.addf %273, %276 : vector<8x512xf32>
    %278 = vector.extract_strided_slice %277 {offsets = [0, 0], sizes = [8, 384], strides = [1, 1]} : vector<8x512xf32> to vector<8x384xf32>
    %279 = math.tanh %278 : vector<8x384xf32>
    %cst_84 = arith.constant 5.000000e-01 : f32
    %280 = vector.broadcast %cst_84 : f32 to vector<8x384xf32>
    %281 = arith.mulf %280, %279 : vector<8x384xf32>
    %cst_85 = arith.constant 5.000000e-01 : f32
    %282 = vector.broadcast %cst_85 : f32 to vector<8x384xf32>
    %283 = arith.addf %281, %282 : vector<8x384xf32>
    %284 = vector.extract_strided_slice %277 {offsets = [0, 384], sizes = [8, 128], strides = [1, 1]} : vector<8x512xf32> to vector<8x128xf32>
    %285 = math.tanh %284 : vector<8x128xf32>
    %286 = vector.extract_strided_slice %283 {offsets = [0, 0], sizes = [8, 128], strides = [1, 1]} : vector<8x384xf32> to vector<8x128xf32>
    %287 = vector.extract_strided_slice %283 {offsets = [0, 128], sizes = [8, 128], strides = [1, 1]} : vector<8x384xf32> to vector<8x128xf32>
    %288 = vector.extract_strided_slice %283 {offsets = [0, 256], sizes = [8, 128], strides = [1, 1]} : vector<8x384xf32> to vector<8x128xf32>
    %289 = arith.mulf %287, %228 : vector<8x128xf32>
    %290 = arith.mulf %286, %285 : vector<8x128xf32>
    %291 = arith.addf %289, %290 : vector<8x128xf32>
    %292 = math.tanh %291 : vector<8x128xf32>
    %293 = arith.mulf %288, %292 : vector<8x128xf32>
    %294 = tpu.concatenate %230, %251 in 1 : vector<8x128xf32>, vector<8x128xf32> -> vector<8x256xf32>
    %295 = arith.truncf %294 : vector<8x256xf32> to vector<8x256xbf16>
    %c0_86 = arith.constant 0 : index
    %c0_87 = arith.constant 0 : index
    %296 = vector.load %arg3[%c0_86, %c0_87] : memref<256x512xbf16, #tpu.memory_space<vmem>>, vector<256x512xbf16>
    %cst_88 = arith.constant dense<0.000000e+00> : vector<8x512xf32>
    %297 = tpu.matmul %295, %296, %cst_88 {dimension_numbers = #tpu.dot_dimension_numbers<[1], [0], [0], [1], [0, 0, 1, 1], [], []>} : vector<8x256xbf16>, vector<256x512xbf16>, vector<8x512xf32> -> vector<8x512xf32>
    %298 = arith.addf %297, %16 : vector<8x512xf32>
    %299 = vector.extract_strided_slice %298 {offsets = [0, 0], sizes = [8, 384], strides = [1, 1]} : vector<8x512xf32> to vector<8x384xf32>
    %300 = math.tanh %299 : vector<8x384xf32>
    %cst_89 = arith.constant 5.000000e-01 : f32
    %301 = vector.broadcast %cst_89 : f32 to vector<8x384xf32>
    %302 = arith.mulf %301, %300 : vector<8x384xf32>
    %cst_90 = arith.constant 5.000000e-01 : f32
    %303 = vector.broadcast %cst_90 : f32 to vector<8x384xf32>
    %304 = arith.addf %302, %303 : vector<8x384xf32>
    %305 = vector.extract_strided_slice %298 {offsets = [0, 384], sizes = [8, 128], strides = [1, 1]} : vector<8x512xf32> to vector<8x128xf32>
    %306 = math.tanh %305 : vector<8x128xf32>
    %307 = vector.extract_strided_slice %304 {offsets = [0, 0], sizes = [8, 128], strides = [1, 1]} : vector<8x384xf32> to vector<8x128xf32>
    %308 = vector.extract_strided_slice %304 {offsets = [0, 128], sizes = [8, 128], strides = [1, 1]} : vector<8x384xf32> to vector<8x128xf32>
    %309 = vector.extract_strided_slice %304 {offsets = [0, 256], sizes = [8, 128], strides = [1, 1]} : vector<8x384xf32> to vector<8x128xf32>
    %310 = arith.mulf %308, %249 : vector<8x128xf32>
    %311 = arith.mulf %307, %306 : vector<8x128xf32>
    %312 = arith.addf %310, %311 : vector<8x128xf32>
    %313 = math.tanh %312 : vector<8x128xf32>
    %314 = arith.mulf %309, %313 : vector<8x128xf32>
    %315 = tpu.concatenate %251, %272 in 1 : vector<8x128xf32>, vector<8x128xf32> -> vector<8x256xf32>
    %316 = arith.truncf %315 : vector<8x256xf32> to vector<8x256xbf16>
    %c0_91 = arith.constant 0 : index
    %c0_92 = arith.constant 0 : index
    %317 = vector.load %arg4[%c0_91, %c0_92] : memref<256x512xbf16, #tpu.memory_space<vmem>>, vector<256x512xbf16>
    %cst_93 = arith.constant dense<0.000000e+00> : vector<8x512xf32>
    %318 = tpu.matmul %316, %317, %cst_93 {dimension_numbers = #tpu.dot_dimension_numbers<[1], [0], [0], [1], [0, 0, 1, 1], [], []>} : vector<8x256xbf16>, vector<256x512xbf16>, vector<8x512xf32> -> vector<8x512xf32>
    %319 = arith.addf %318, %19 : vector<8x512xf32>
    %320 = vector.extract_strided_slice %319 {offsets = [0, 0], sizes = [8, 384], strides = [1, 1]} : vector<8x512xf32> to vector<8x384xf32>
    %321 = math.tanh %320 : vector<8x384xf32>
    %cst_94 = arith.constant 5.000000e-01 : f32
    %322 = vector.broadcast %cst_94 : f32 to vector<8x384xf32>
    %323 = arith.mulf %322, %321 : vector<8x384xf32>
    %cst_95 = arith.constant 5.000000e-01 : f32
    %324 = vector.broadcast %cst_95 : f32 to vector<8x384xf32>
    %325 = arith.addf %323, %324 : vector<8x384xf32>
    %326 = vector.extract_strided_slice %319 {offsets = [0, 384], sizes = [8, 128], strides = [1, 1]} : vector<8x512xf32> to vector<8x128xf32>
    %327 = math.tanh %326 : vector<8x128xf32>
    %328 = vector.extract_strided_slice %325 {offsets = [0, 0], sizes = [8, 128], strides = [1, 1]} : vector<8x384xf32> to vector<8x128xf32>
    %329 = vector.extract_strided_slice %325 {offsets = [0, 128], sizes = [8, 128], strides = [1, 1]} : vector<8x384xf32> to vector<8x128xf32>
    %330 = vector.extract_strided_slice %325 {offsets = [0, 256], sizes = [8, 128], strides = [1, 1]} : vector<8x384xf32> to vector<8x128xf32>
    %331 = arith.mulf %329, %270 : vector<8x128xf32>
    %332 = arith.mulf %328, %327 : vector<8x128xf32>
    %333 = arith.addf %331, %332 : vector<8x128xf32>
    %334 = math.tanh %333 : vector<8x128xf32>
    %335 = arith.mulf %330, %334 : vector<8x128xf32>
    %c48 = arith.constant 48 : index
    %c0_96 = arith.constant 0 : index
    %336 = vector.load %arg11[%c48, %c0_96] : memref<64x512xf32, #tpu.memory_space<vmem>>, vector<8x512xf32>
    %337 = arith.truncf %293 : vector<8x128xf32> to vector<8x128xbf16>
    %c0_97 = arith.constant 0 : index
    %c0_98 = arith.constant 0 : index
    %338 = vector.load %arg2[%c0_97, %c0_98] : memref<128x512xbf16, #tpu.memory_space<vmem>>, vector<128x512xbf16>
    %cst_99 = arith.constant dense<0.000000e+00> : vector<8x512xf32>
    %339 = tpu.matmul %337, %338, %cst_99 {dimension_numbers = #tpu.dot_dimension_numbers<[1], [0], [0], [1], [0, 0, 1, 1], [], []>} : vector<8x128xbf16>, vector<128x512xbf16>, vector<8x512xf32> -> vector<8x512xf32>
    %340 = arith.addf %336, %339 : vector<8x512xf32>
    %341 = vector.extract_strided_slice %340 {offsets = [0, 0], sizes = [8, 384], strides = [1, 1]} : vector<8x512xf32> to vector<8x384xf32>
    %342 = math.tanh %341 : vector<8x384xf32>
    %cst_100 = arith.constant 5.000000e-01 : f32
    %343 = vector.broadcast %cst_100 : f32 to vector<8x384xf32>
    %344 = arith.mulf %343, %342 : vector<8x384xf32>
    %cst_101 = arith.constant 5.000000e-01 : f32
    %345 = vector.broadcast %cst_101 : f32 to vector<8x384xf32>
    %346 = arith.addf %344, %345 : vector<8x384xf32>
    %347 = vector.extract_strided_slice %340 {offsets = [0, 384], sizes = [8, 128], strides = [1, 1]} : vector<8x512xf32> to vector<8x128xf32>
    %348 = math.tanh %347 : vector<8x128xf32>
    %349 = vector.extract_strided_slice %346 {offsets = [0, 0], sizes = [8, 128], strides = [1, 1]} : vector<8x384xf32> to vector<8x128xf32>
    %350 = vector.extract_strided_slice %346 {offsets = [0, 128], sizes = [8, 128], strides = [1, 1]} : vector<8x384xf32> to vector<8x128xf32>
    %351 = vector.extract_strided_slice %346 {offsets = [0, 256], sizes = [8, 128], strides = [1, 1]} : vector<8x384xf32> to vector<8x128xf32>
    %352 = arith.mulf %350, %291 : vector<8x128xf32>
    %353 = arith.mulf %349, %348 : vector<8x128xf32>
    %354 = arith.addf %352, %353 : vector<8x128xf32>
    %355 = math.tanh %354 : vector<8x128xf32>
    %356 = arith.mulf %351, %355 : vector<8x128xf32>
    %357 = tpu.concatenate %293, %314 in 1 : vector<8x128xf32>, vector<8x128xf32> -> vector<8x256xf32>
    %358 = arith.truncf %357 : vector<8x256xf32> to vector<8x256xbf16>
    %c0_102 = arith.constant 0 : index
    %c0_103 = arith.constant 0 : index
    %359 = vector.load %arg3[%c0_102, %c0_103] : memref<256x512xbf16, #tpu.memory_space<vmem>>, vector<256x512xbf16>
    %cst_104 = arith.constant dense<0.000000e+00> : vector<8x512xf32>
    %360 = tpu.matmul %358, %359, %cst_104 {dimension_numbers = #tpu.dot_dimension_numbers<[1], [0], [0], [1], [0, 0, 1, 1], [], []>} : vector<8x256xbf16>, vector<256x512xbf16>, vector<8x512xf32> -> vector<8x512xf32>
    %361 = arith.addf %360, %16 : vector<8x512xf32>
    %362 = vector.extract_strided_slice %361 {offsets = [0, 0], sizes = [8, 384], strides = [1, 1]} : vector<8x512xf32> to vector<8x384xf32>
    %363 = math.tanh %362 : vector<8x384xf32>
    %cst_105 = arith.constant 5.000000e-01 : f32
    %364 = vector.broadcast %cst_105 : f32 to vector<8x384xf32>
    %365 = arith.mulf %364, %363 : vector<8x384xf32>
    %cst_106 = arith.constant 5.000000e-01 : f32
    %366 = vector.broadcast %cst_106 : f32 to vector<8x384xf32>
    %367 = arith.addf %365, %366 : vector<8x384xf32>
    %368 = vector.extract_strided_slice %361 {offsets = [0, 384], sizes = [8, 128], strides = [1, 1]} : vector<8x512xf32> to vector<8x128xf32>
    %369 = math.tanh %368 : vector<8x128xf32>
    %370 = vector.extract_strided_slice %367 {offsets = [0, 0], sizes = [8, 128], strides = [1, 1]} : vector<8x384xf32> to vector<8x128xf32>
    %371 = vector.extract_strided_slice %367 {offsets = [0, 128], sizes = [8, 128], strides = [1, 1]} : vector<8x384xf32> to vector<8x128xf32>
    %372 = vector.extract_strided_slice %367 {offsets = [0, 256], sizes = [8, 128], strides = [1, 1]} : vector<8x384xf32> to vector<8x128xf32>
    %373 = arith.mulf %371, %312 : vector<8x128xf32>
    %374 = arith.mulf %370, %369 : vector<8x128xf32>
    %375 = arith.addf %373, %374 : vector<8x128xf32>
    %376 = math.tanh %375 : vector<8x128xf32>
    %377 = arith.mulf %372, %376 : vector<8x128xf32>
    %378 = tpu.concatenate %314, %335 in 1 : vector<8x128xf32>, vector<8x128xf32> -> vector<8x256xf32>
    %379 = arith.truncf %378 : vector<8x256xf32> to vector<8x256xbf16>
    %c0_107 = arith.constant 0 : index
    %c0_108 = arith.constant 0 : index
    %380 = vector.load %arg4[%c0_107, %c0_108] : memref<256x512xbf16, #tpu.memory_space<vmem>>, vector<256x512xbf16>
    %cst_109 = arith.constant dense<0.000000e+00> : vector<8x512xf32>
    %381 = tpu.matmul %379, %380, %cst_109 {dimension_numbers = #tpu.dot_dimension_numbers<[1], [0], [0], [1], [0, 0, 1, 1], [], []>} : vector<8x256xbf16>, vector<256x512xbf16>, vector<8x512xf32> -> vector<8x512xf32>
    %382 = arith.addf %381, %19 : vector<8x512xf32>
    %383 = vector.extract_strided_slice %382 {offsets = [0, 0], sizes = [8, 384], strides = [1, 1]} : vector<8x512xf32> to vector<8x384xf32>
    %384 = math.tanh %383 : vector<8x384xf32>
    %cst_110 = arith.constant 5.000000e-01 : f32
    %385 = vector.broadcast %cst_110 : f32 to vector<8x384xf32>
    %386 = arith.mulf %385, %384 : vector<8x384xf32>
    %cst_111 = arith.constant 5.000000e-01 : f32
    %387 = vector.broadcast %cst_111 : f32 to vector<8x384xf32>
    %388 = arith.addf %386, %387 : vector<8x384xf32>
    %389 = vector.extract_strided_slice %382 {offsets = [0, 384], sizes = [8, 128], strides = [1, 1]} : vector<8x512xf32> to vector<8x128xf32>
    %390 = math.tanh %389 : vector<8x128xf32>
    %391 = vector.extract_strided_slice %388 {offsets = [0, 0], sizes = [8, 128], strides = [1, 1]} : vector<8x384xf32> to vector<8x128xf32>
    %392 = vector.extract_strided_slice %388 {offsets = [0, 128], sizes = [8, 128], strides = [1, 1]} : vector<8x384xf32> to vector<8x128xf32>
    %393 = vector.extract_strided_slice %388 {offsets = [0, 256], sizes = [8, 128], strides = [1, 1]} : vector<8x384xf32> to vector<8x128xf32>
    %394 = arith.mulf %392, %333 : vector<8x128xf32>
    %395 = arith.mulf %391, %390 : vector<8x128xf32>
    %396 = arith.addf %394, %395 : vector<8x128xf32>
    %397 = math.tanh %396 : vector<8x128xf32>
    %398 = arith.mulf %393, %397 : vector<8x128xf32>
    %c56 = arith.constant 56 : index
    %c0_112 = arith.constant 0 : index
    %399 = vector.load %arg11[%c56, %c0_112] : memref<64x512xf32, #tpu.memory_space<vmem>>, vector<8x512xf32>
    %400 = arith.truncf %356 : vector<8x128xf32> to vector<8x128xbf16>
    %c0_113 = arith.constant 0 : index
    %c0_114 = arith.constant 0 : index
    %401 = vector.load %arg2[%c0_113, %c0_114] : memref<128x512xbf16, #tpu.memory_space<vmem>>, vector<128x512xbf16>
    %cst_115 = arith.constant dense<0.000000e+00> : vector<8x512xf32>
    %402 = tpu.matmul %400, %401, %cst_115 {dimension_numbers = #tpu.dot_dimension_numbers<[1], [0], [0], [1], [0, 0, 1, 1], [], []>} : vector<8x128xbf16>, vector<128x512xbf16>, vector<8x512xf32> -> vector<8x512xf32>
    %403 = arith.addf %399, %402 : vector<8x512xf32>
    %404 = vector.extract_strided_slice %403 {offsets = [0, 0], sizes = [8, 384], strides = [1, 1]} : vector<8x512xf32> to vector<8x384xf32>
    %405 = math.tanh %404 : vector<8x384xf32>
    %cst_116 = arith.constant 5.000000e-01 : f32
    %406 = vector.broadcast %cst_116 : f32 to vector<8x384xf32>
    %407 = arith.mulf %406, %405 : vector<8x384xf32>
    %cst_117 = arith.constant 5.000000e-01 : f32
    %408 = vector.broadcast %cst_117 : f32 to vector<8x384xf32>
    %409 = arith.addf %407, %408 : vector<8x384xf32>
    %410 = vector.extract_strided_slice %403 {offsets = [0, 384], sizes = [8, 128], strides = [1, 1]} : vector<8x512xf32> to vector<8x128xf32>
    %411 = math.tanh %410 : vector<8x128xf32>
    %412 = vector.extract_strided_slice %409 {offsets = [0, 0], sizes = [8, 128], strides = [1, 1]} : vector<8x384xf32> to vector<8x128xf32>
    %413 = vector.extract_strided_slice %409 {offsets = [0, 128], sizes = [8, 128], strides = [1, 1]} : vector<8x384xf32> to vector<8x128xf32>
    %414 = vector.extract_strided_slice %409 {offsets = [0, 256], sizes = [8, 128], strides = [1, 1]} : vector<8x384xf32> to vector<8x128xf32>
    %415 = arith.mulf %413, %354 : vector<8x128xf32>
    %416 = arith.mulf %412, %411 : vector<8x128xf32>
    %417 = arith.addf %415, %416 : vector<8x128xf32>
    %418 = math.tanh %417 : vector<8x128xf32>
    %419 = arith.mulf %414, %418 : vector<8x128xf32>
    %420 = tpu.concatenate %356, %377 in 1 : vector<8x128xf32>, vector<8x128xf32> -> vector<8x256xf32>
    %421 = arith.truncf %420 : vector<8x256xf32> to vector<8x256xbf16>
    %c0_118 = arith.constant 0 : index
    %c0_119 = arith.constant 0 : index
    %422 = vector.load %arg3[%c0_118, %c0_119] : memref<256x512xbf16, #tpu.memory_space<vmem>>, vector<256x512xbf16>
    %cst_120 = arith.constant dense<0.000000e+00> : vector<8x512xf32>
    %423 = tpu.matmul %421, %422, %cst_120 {dimension_numbers = #tpu.dot_dimension_numbers<[1], [0], [0], [1], [0, 0, 1, 1], [], []>} : vector<8x256xbf16>, vector<256x512xbf16>, vector<8x512xf32> -> vector<8x512xf32>
    %424 = arith.addf %423, %16 : vector<8x512xf32>
    %425 = vector.extract_strided_slice %424 {offsets = [0, 0], sizes = [8, 384], strides = [1, 1]} : vector<8x512xf32> to vector<8x384xf32>
    %426 = math.tanh %425 : vector<8x384xf32>
    %cst_121 = arith.constant 5.000000e-01 : f32
    %427 = vector.broadcast %cst_121 : f32 to vector<8x384xf32>
    %428 = arith.mulf %427, %426 : vector<8x384xf32>
    %cst_122 = arith.constant 5.000000e-01 : f32
    %429 = vector.broadcast %cst_122 : f32 to vector<8x384xf32>
    %430 = arith.addf %428, %429 : vector<8x384xf32>
    %431 = vector.extract_strided_slice %424 {offsets = [0, 384], sizes = [8, 128], strides = [1, 1]} : vector<8x512xf32> to vector<8x128xf32>
    %432 = math.tanh %431 : vector<8x128xf32>
    %433 = vector.extract_strided_slice %430 {offsets = [0, 0], sizes = [8, 128], strides = [1, 1]} : vector<8x384xf32> to vector<8x128xf32>
    %434 = vector.extract_strided_slice %430 {offsets = [0, 128], sizes = [8, 128], strides = [1, 1]} : vector<8x384xf32> to vector<8x128xf32>
    %435 = vector.extract_strided_slice %430 {offsets = [0, 256], sizes = [8, 128], strides = [1, 1]} : vector<8x384xf32> to vector<8x128xf32>
    %436 = arith.mulf %434, %375 : vector<8x128xf32>
    %437 = arith.mulf %433, %432 : vector<8x128xf32>
    %438 = arith.addf %436, %437 : vector<8x128xf32>
    %439 = math.tanh %438 : vector<8x128xf32>
    %440 = arith.mulf %435, %439 : vector<8x128xf32>
    %441 = tpu.concatenate %377, %398 in 1 : vector<8x128xf32>, vector<8x128xf32> -> vector<8x256xf32>
    %442 = arith.truncf %441 : vector<8x256xf32> to vector<8x256xbf16>
    %c0_123 = arith.constant 0 : index
    %c0_124 = arith.constant 0 : index
    %443 = vector.load %arg4[%c0_123, %c0_124] : memref<256x512xbf16, #tpu.memory_space<vmem>>, vector<256x512xbf16>
    %cst_125 = arith.constant dense<0.000000e+00> : vector<8x512xf32>
    %444 = tpu.matmul %442, %443, %cst_125 {dimension_numbers = #tpu.dot_dimension_numbers<[1], [0], [0], [1], [0, 0, 1, 1], [], []>} : vector<8x256xbf16>, vector<256x512xbf16>, vector<8x512xf32> -> vector<8x512xf32>
    %445 = arith.addf %444, %19 : vector<8x512xf32>
    %446 = vector.extract_strided_slice %445 {offsets = [0, 0], sizes = [8, 384], strides = [1, 1]} : vector<8x512xf32> to vector<8x384xf32>
    %447 = math.tanh %446 : vector<8x384xf32>
    %cst_126 = arith.constant 5.000000e-01 : f32
    %448 = vector.broadcast %cst_126 : f32 to vector<8x384xf32>
    %449 = arith.mulf %448, %447 : vector<8x384xf32>
    %cst_127 = arith.constant 5.000000e-01 : f32
    %450 = vector.broadcast %cst_127 : f32 to vector<8x384xf32>
    %451 = arith.addf %449, %450 : vector<8x384xf32>
    %452 = vector.extract_strided_slice %445 {offsets = [0, 384], sizes = [8, 128], strides = [1, 1]} : vector<8x512xf32> to vector<8x128xf32>
    %453 = math.tanh %452 : vector<8x128xf32>
    %454 = vector.extract_strided_slice %451 {offsets = [0, 0], sizes = [8, 128], strides = [1, 1]} : vector<8x384xf32> to vector<8x128xf32>
    %455 = vector.extract_strided_slice %451 {offsets = [0, 128], sizes = [8, 128], strides = [1, 1]} : vector<8x384xf32> to vector<8x128xf32>
    %456 = vector.extract_strided_slice %451 {offsets = [0, 256], sizes = [8, 128], strides = [1, 1]} : vector<8x384xf32> to vector<8x128xf32>
    %457 = arith.mulf %455, %396 : vector<8x128xf32>
    %458 = arith.mulf %454, %453 : vector<8x128xf32>
    %459 = arith.addf %457, %458 : vector<8x128xf32>
    %460 = math.tanh %459 : vector<8x128xf32>
    %461 = arith.mulf %456, %460 : vector<8x128xf32>
    %462 = tpu.concatenate %419, %440 in 1 : vector<8x128xf32>, vector<8x128xf32> -> vector<8x256xf32>
    %463 = arith.truncf %462 : vector<8x256xf32> to vector<8x256xbf16>
    %c0_128 = arith.constant 0 : index
    %c0_129 = arith.constant 0 : index
    %464 = vector.load %arg3[%c0_128, %c0_129] : memref<256x512xbf16, #tpu.memory_space<vmem>>, vector<256x512xbf16>
    %cst_130 = arith.constant dense<0.000000e+00> : vector<8x512xf32>
    %465 = tpu.matmul %463, %464, %cst_130 {dimension_numbers = #tpu.dot_dimension_numbers<[1], [0], [0], [1], [0, 0, 1, 1], [], []>} : vector<8x256xbf16>, vector<256x512xbf16>, vector<8x512xf32> -> vector<8x512xf32>
    %466 = arith.addf %465, %16 : vector<8x512xf32>
    %467 = vector.extract_strided_slice %466 {offsets = [0, 0], sizes = [8, 384], strides = [1, 1]} : vector<8x512xf32> to vector<8x384xf32>
    %468 = math.tanh %467 : vector<8x384xf32>
    %cst_131 = arith.constant 5.000000e-01 : f32
    %469 = vector.broadcast %cst_131 : f32 to vector<8x384xf32>
    %470 = arith.mulf %469, %468 : vector<8x384xf32>
    %cst_132 = arith.constant 5.000000e-01 : f32
    %471 = vector.broadcast %cst_132 : f32 to vector<8x384xf32>
    %472 = arith.addf %470, %471 : vector<8x384xf32>
    %473 = vector.extract_strided_slice %466 {offsets = [0, 384], sizes = [8, 128], strides = [1, 1]} : vector<8x512xf32> to vector<8x128xf32>
    %474 = math.tanh %473 : vector<8x128xf32>
    %475 = vector.extract_strided_slice %472 {offsets = [0, 0], sizes = [8, 128], strides = [1, 1]} : vector<8x384xf32> to vector<8x128xf32>
    %476 = vector.extract_strided_slice %472 {offsets = [0, 128], sizes = [8, 128], strides = [1, 1]} : vector<8x384xf32> to vector<8x128xf32>
    %477 = vector.extract_strided_slice %472 {offsets = [0, 256], sizes = [8, 128], strides = [1, 1]} : vector<8x384xf32> to vector<8x128xf32>
    %478 = arith.mulf %476, %438 : vector<8x128xf32>
    %479 = arith.mulf %475, %474 : vector<8x128xf32>
    %480 = arith.addf %478, %479 : vector<8x128xf32>
    %481 = math.tanh %480 : vector<8x128xf32>
    %482 = arith.mulf %477, %481 : vector<8x128xf32>
    %483 = tpu.concatenate %440, %461 in 1 : vector<8x128xf32>, vector<8x128xf32> -> vector<8x256xf32>
    %484 = arith.truncf %483 : vector<8x256xf32> to vector<8x256xbf16>
    %c0_133 = arith.constant 0 : index
    %c0_134 = arith.constant 0 : index
    %485 = vector.load %arg4[%c0_133, %c0_134] : memref<256x512xbf16, #tpu.memory_space<vmem>>, vector<256x512xbf16>
    %cst_135 = arith.constant dense<0.000000e+00> : vector<8x512xf32>
    %486 = tpu.matmul %484, %485, %cst_135 {dimension_numbers = #tpu.dot_dimension_numbers<[1], [0], [0], [1], [0, 0, 1, 1], [], []>} : vector<8x256xbf16>, vector<256x512xbf16>, vector<8x512xf32> -> vector<8x512xf32>
    %487 = arith.addf %486, %19 : vector<8x512xf32>
    %488 = vector.extract_strided_slice %487 {offsets = [0, 0], sizes = [8, 384], strides = [1, 1]} : vector<8x512xf32> to vector<8x384xf32>
    %489 = math.tanh %488 : vector<8x384xf32>
    %cst_136 = arith.constant 5.000000e-01 : f32
    %490 = vector.broadcast %cst_136 : f32 to vector<8x384xf32>
    %491 = arith.mulf %490, %489 : vector<8x384xf32>
    %cst_137 = arith.constant 5.000000e-01 : f32
    %492 = vector.broadcast %cst_137 : f32 to vector<8x384xf32>
    %493 = arith.addf %491, %492 : vector<8x384xf32>
    %494 = vector.extract_strided_slice %487 {offsets = [0, 384], sizes = [8, 128], strides = [1, 1]} : vector<8x512xf32> to vector<8x128xf32>
    %495 = math.tanh %494 : vector<8x128xf32>
    %496 = vector.extract_strided_slice %493 {offsets = [0, 0], sizes = [8, 128], strides = [1, 1]} : vector<8x384xf32> to vector<8x128xf32>
    %497 = vector.extract_strided_slice %493 {offsets = [0, 128], sizes = [8, 128], strides = [1, 1]} : vector<8x384xf32> to vector<8x128xf32>
    %498 = vector.extract_strided_slice %493 {offsets = [0, 256], sizes = [8, 128], strides = [1, 1]} : vector<8x384xf32> to vector<8x128xf32>
    %499 = arith.mulf %497, %459 : vector<8x128xf32>
    %500 = arith.mulf %496, %495 : vector<8x128xf32>
    %501 = arith.addf %499, %500 : vector<8x128xf32>
    %502 = math.tanh %501 : vector<8x128xf32>
    %503 = arith.mulf %498, %502 : vector<8x128xf32>
    %504 = tpu.concatenate %482, %503 in 1 : vector<8x128xf32>, vector<8x128xf32> -> vector<8x256xf32>
    %505 = arith.truncf %504 : vector<8x256xf32> to vector<8x256xbf16>
    %c0_138 = arith.constant 0 : index
    %c0_139 = arith.constant 0 : index
    %506 = vector.load %arg4[%c0_138, %c0_139] : memref<256x512xbf16, #tpu.memory_space<vmem>>, vector<256x512xbf16>
    %cst_140 = arith.constant dense<0.000000e+00> : vector<8x512xf32>
    %507 = tpu.matmul %505, %506, %cst_140 {dimension_numbers = #tpu.dot_dimension_numbers<[1], [0], [0], [1], [0, 0, 1, 1], [], []>} : vector<8x256xbf16>, vector<256x512xbf16>, vector<8x512xf32> -> vector<8x512xf32>
    %508 = arith.addf %507, %19 : vector<8x512xf32>
    %509 = vector.extract_strided_slice %508 {offsets = [0, 0], sizes = [8, 384], strides = [1, 1]} : vector<8x512xf32> to vector<8x384xf32>
    %510 = math.tanh %509 : vector<8x384xf32>
    %cst_141 = arith.constant 5.000000e-01 : f32
    %511 = vector.broadcast %cst_141 : f32 to vector<8x384xf32>
    %512 = arith.mulf %511, %510 : vector<8x384xf32>
    %cst_142 = arith.constant 5.000000e-01 : f32
    %513 = vector.broadcast %cst_142 : f32 to vector<8x384xf32>
    %514 = arith.addf %512, %513 : vector<8x384xf32>
    %515 = vector.extract_strided_slice %508 {offsets = [0, 384], sizes = [8, 128], strides = [1, 1]} : vector<8x512xf32> to vector<8x128xf32>
    %516 = math.tanh %515 : vector<8x128xf32>
    %517 = vector.extract_strided_slice %514 {offsets = [0, 0], sizes = [8, 128], strides = [1, 1]} : vector<8x384xf32> to vector<8x128xf32>
    %518 = vector.extract_strided_slice %514 {offsets = [0, 128], sizes = [8, 128], strides = [1, 1]} : vector<8x384xf32> to vector<8x128xf32>
    %519 = vector.extract_strided_slice %514 {offsets = [0, 256], sizes = [8, 128], strides = [1, 1]} : vector<8x384xf32> to vector<8x128xf32>
    %520 = arith.mulf %518, %501 : vector<8x128xf32>
    %521 = arith.mulf %517, %516 : vector<8x128xf32>
    %522 = arith.addf %520, %521 : vector<8x128xf32>
    %523 = math.tanh %522 : vector<8x128xf32>
    %524 = arith.mulf %519, %523 : vector<8x128xf32>
    %c0_143 = arith.constant 0 : index
    %c0_144 = arith.constant 0 : index
    %525 = vector.load %arg8[%c0_143, %c0_144] : memref<1x128xf32, #tpu.memory_space<vmem>>, vector<1x128xf32>
    %526 = vector.broadcast %525 : vector<1x128xf32> to vector<8x128xf32>
    %527 = arith.mulf %524, %526 : vector<8x128xf32>
    %cst_145 = arith.constant dense<0.000000e+00> : vector<8xf32>
    %528 = vector.multi_reduction <add>, %527, %cst_145 [1] : vector<8x128xf32> to vector<8xf32>
    %529 = vector.shape_cast %528 : vector<8xf32> to vector<8x1xf32>
    %c0_146 = arith.constant 0 : index
    %c0_147 = arith.constant 0 : index
    %530 = vector.load %arg9[%c0_146, %c0_147] : memref<1x1xf32, #tpu.memory_space<vmem>>, vector<1x1xf32>
    %531 = vector.broadcast %530 : vector<1x1xf32> to vector<8x1xf32>
    %532 = arith.addf %529, %531 : vector<8x1xf32>
    %cst_148 = arith.constant 5.000000e-01 : f32
    %533 = vector.broadcast %cst_148 : f32 to vector<8x1xf32>
    %534 = arith.mulf %533, %532 : vector<8x1xf32>
    %535 = math.tanh %534 : vector<8x1xf32>
    %cst_149 = arith.constant 5.000000e-01 : f32
    %536 = vector.broadcast %cst_149 : f32 to vector<8x1xf32>
    %537 = arith.mulf %536, %535 : vector<8x1xf32>
    %cst_150 = arith.constant 5.000000e-01 : f32
    %538 = vector.broadcast %cst_150 : f32 to vector<8x1xf32>
    %539 = arith.addf %537, %538 : vector<8x1xf32>
    %c0_151 = arith.constant 0 : index
    %c0_152 = arith.constant 0 : index
    %540 = vector.load %arg10[%c0_151, %c0_152] : memref<8x1xf32, #tpu.memory_space<vmem>>, vector<8x1xf32>
    tpu.vector_store %arg10[%c0_151, %c0_152], %539 {strides = array<i32>} : memref<8x1xf32, #tpu.memory_space<vmem>>, vector<8x1xf32>,
    return
  }
}

</mosaic_0001>

<llo_original>
// kernel: classifier_forward.1
$region0: #{classifier_forward.1}
  #allocation0 [shape = 'u32[]', space=smem, size = 0x4, offset = 0x4, fixed_abs, tag = 'smem constant byte address 0x4 - core index']
  #allocation1 [shape = 'u32[144,128]{1,0:T(1,128)}', space=vmem, size = 0x12000, scoped, tag = 'internal scratch']
  #allocation2 [shape = 'f32[64,512]{1,0:T(8,128)}', space=vmem, size = 0x20000, scoped, tag = 'scratch operand']
  #allocation3 [shape = 'f32[1,1]{1,0:T(1,128)S(1)}', space=vmem, size = 0x200, scoped, tag = 'scoped memory for classifier_forward.1']
  %s0 = inlined_call_operand.vmem [shape: s32[64,1], index: 0, kind: input, shape index: {}]
  %s1 = inlined_call_operand.vmem [shape: bf16[16,512], index: 1, kind: input, shape index: {}]
  %s2 = inlined_call_operand.hbm [shape: bf16[128,512], index: 2, kind: input, shape index: {}]
  %s3 = inlined_call_operand.hbm [shape: bf16[256,512], index: 3, kind: input, shape index: {}]
  %s4 = inlined_call_operand.hbm [shape: bf16[256,512], index: 4, kind: input, shape index: {}]
  %s5 = inlined_call_operand.vmem [shape: f32[1,512], index: 5, kind: input, shape index: {}]
  %s6 = inlined_call_operand.vmem [shape: f32[1,512], index: 6, kind: input, shape index: {}]
  %s7 = inlined_call_operand.vmem [shape: f32[1,512], index: 7, kind: input, shape index: {}]
  %s8 = inlined_call_operand.vmem [shape: f32[1,128], index: 8, kind: input, shape index: {}]
  %s9 = inlined_call_operand.<no memory space> [shape: f32[1,1], index: 9, kind: input, shape index: {}]
  %s10 = inlined_call_operand.vmem [shape: f32[8,1], index: 10, kind: output, shape index: {}]
  %s11 = sld [smem:[#allocation0]]
  $region62: #{classifier_forward.1} parent=0
    _
  %s13 = ssub.s32 1, %s11
  %s14 = scalar_select 0, %s13, %s11
  %v15 = vstv %s9
  %16 = vst [vmem:[#allocation3] sm:$0x1] %v15
  $region1: #{classifier_forward.1} parent=0
    #allocation4 [shape = 'u8[131072]{0}', space=vmem, size = 0x20000, scoped, tag = 'input window, operand 2, single buffered']
    #allocation5 [shape = 's32[1]{0}', space=sflag, size = 0x4, scoped, tag = 'scoped memory for classifier_forward.1']
    #allocation6 [shape = 'u8[262144]{0}', space=vmem, size = 0x40000, scoped, tag = 'input window, operand 3, single buffered']
    #allocation7 [shape = 's32[1]{0}', space=sflag, size = 0x4, scoped, tag = 'scoped memory for classifier_forward.1']
    #allocation8 [shape = 'u8[262144]{0}', space=vmem, size = 0x40000, scoped, tag = 'input window, operand 4, single buffered']
    %17 = vsyncpa [#allocation5], 0
    %18 = vsyncpa [#allocation7], 0
    // Predicated region
    $region2: #{classifier_forward.1} parent=1 // pred_check
      _
    $region3: #{classifier_forward.1} parent=1 // pred_check_branch
      %20 = sbr.rel (0) target = $region5
    $region4: #{classifier_forward.1} parent=1 // pred_region
      _
    $region5: #{classifier_forward.1} parent=1 // pred_fallthru
      _
    // Predicated region
    $region6: #{classifier_forward.1} parent=1 // pred_check
      _
    $region7: #{classifier_forward.1} parent=1 // pred_check_branch
      %22 = sbr.rel (0) target = $region9
    $region8: #{classifier_forward.1} parent=1 // pred_region
      _
    $region9: #{classifier_forward.1} parent=1 // pred_fallthru
      _
    // Predicated region
    $region10: #{classifier_forward.1} parent=1 // pred_check
      _
    $region11: #{classifier_forward.1} parent=1 // pred_check_branch
      %24 = sbr.rel (0) target = $region13
    $region12: #{classifier_forward.1} parent=1 // pred_region
      %s26 = ssub.s32 4096, 4096
      %27 = vsyncadd [#allocation5], %s26
      %s28 = sshll.u32 [#allocation4], 4
      %s29 = int_to_ptr.vmem [resolvable:$true] %s28
      %34 = dma.hbm_to_vmem [thread:$0]  %s2, 4096, %s29, [#allocation5], 256, 256, 16
    $region13: #{classifier_forward.1} parent=1 // pred_fallthru
      _
    // Predicated region
    $region14: #{classifier_forward.1} parent=1 // pred_check
      _
    $region15: #{classifier_forward.1} parent=1 // pred_check_branch
      %36 = sbr.rel (0) target = $region17
    $region16: #{classifier_forward.1} parent=1 // pred_region
      %s38 = ssub.s32 8192, 8192
      %39 = vsyncadd [#allocation7], %s38
      %s40 = sshll.u32 [#allocation6], 4
      %s41 = int_to_ptr.vmem [resolvable:$true] %s40
      %46 = dma.hbm_to_vmem [thread:$0]  %s3, 8192, %s41, [#allocation7], 256, 256, 16
    $region17: #{classifier_forward.1} parent=1 // pred_fallthru
      _
    // Predicated region
    $region18: #{classifier_forward.1} parent=1 // pred_check
      _
    $region19: #{classifier_forward.1} parent=1 // pred_check_branch
      %48 = sbr.rel (0) target = $region21
    $region20: #{classifier_forward.1} parent=1 // pred_region
      %s50 = ssub.s32 8192, 8192
      %51 = vsyncadd [#allocation7], %s50
      %s52 = sshll.u32 [#allocation8], 4
      %s53 = int_to_ptr.vmem [resolvable:$true] %s52
      %58 = dma.hbm_to_vmem [thread:$0]  %s4, 8192, %s53, [#allocation7], 256, 256, 16
    $region21: #{classifier_forward.1} parent=1 // pred_fallthru
      _
    // Predicated region
    $region22: #{classifier_forward.1} parent=1 // pred_check
      _
    $region23: #{classifier_forward.1} parent=1 // pred_check_branch
      %60 = sbr.rel (0) target = $region25
    $region24: #{classifier_forward.1} parent=1 // pred_region
      _
    $region25: #{classifier_forward.1} parent=1 // pred_fallthru
      _
    // Predicated region
    $region26: #{classifier_forward.1} parent=1 // pred_check
      _
    $region27: #{classifier_forward.1} parent=1 // pred_check_branch
      %62 = sbr.rel (0) target = $region29
    $region28: #{classifier_forward.1} parent=1 // pred_region
      _
    $region29: #{classifier_forward.1} parent=1 // pred_fallthru
      _
    // Predicated region
    $region30: #{classifier_forward.1} parent=1 // pred_check
      _
    $region31: #{classifier_forward.1} parent=1 // pred_check_branch
      %64 = sbr.rel (0) target = $region33
    $region32: #{classifier_forward.1} parent=1 // pred_region
      _
    $region33: #{classifier_forward.1} parent=1 // pred_fallthru
      _
    // Predicated region
    $region34: #{classifier_forward.1} parent=1 // pred_check
      _
    $region35: #{classifier_forward.1} parent=1 // pred_check_branch
      %66 = sbr.rel (0) target = $region37
    $region36: #{classifier_forward.1} parent=1 // pred_region
      _
    $region37: #{classifier_forward.1} parent=1 // pred_fallthru
      _
    // Predicated region
    $region38: #{classifier_forward.1} parent=1 // pred_check
      _
    $region39: #{classifier_forward.1} parent=1 // pred_check_branch
      %68 = sbr.rel (0) target = $region41
    $region40: #{classifier_forward.1} parent=1 // pred_region
      _
    $region41: #{classifier_forward.1} parent=1 // pred_fallthru
      _
    // Predicated region
    $region42: #{classifier_forward.1} parent=1 // pred_check
      _
    $region43: #{classifier_forward.1} parent=1 // pred_check_branch
      %70 = sbr.rel (0) target = $region45
    $region44: #{classifier_forward.1} parent=1 // pred_region
      %71 = dma.done [#allocation5], 4096
    $region45: #{classifier_forward.1} parent=1 // pred_fallthru
      _
    // Predicated region
    $region46: #{classifier_forward.1} parent=1 // pred_check
      _
    $region47: #{classifier_forward.1} parent=1 // pred_check_branch
      %73 = sbr.rel (0) target = $region49
    $region48: #{classifier_forward.1} parent=1 // pred_region
      %74 = dma.done [#allocation7], 8192
    $region49: #{classifier_forward.1} parent=1 // pred_fallthru
      _
    // Predicated region
    $region50: #{classifier_forward.1} parent=1 // pred_check
      _
    $region51: #{classifier_forward.1} parent=1 // pred_check_branch
      %76 = sbr.rel (0) target = $region53
    $region52: #{classifier_forward.1} parent=1 // pred_region
      %77 = dma.done [#allocation7], 8192
    $region53: #{classifier_forward.1} parent=1 // pred_fallthru
      _
    %v79 = vld [vmem:[%s0] sm:$0xff]
    %v80 = vld [vmem:[%s0 + $0x8] sm:$0xff]
    %v81 = vld [vmem:[%s0 + $0x10] sm:$0xff]
    %v82 = vld [vmem:[%s0 + $0x18] sm:$0xff]
    %v83 = vld [vmem:[%s0 + $0x20] sm:$0xff]
    %v84 = vld [vmem:[%s0 + $0x28] sm:$0xff]
    %v85 = vld [vmem:[%s0 + $0x30] sm:$0xff]
    %v86 = vld [vmem:[%s0 + $0x38] sm:$0xff]
    %v87 = vlaneseq
    %v88 = vand.u32 %v87, 127
    %89 = vset.pattern.permute.xlu0 0
    %90 = vperm.xlu0 %89, %v79
    %v91 = vpop.permute.xlu0 %90
    %92 = vset.pattern.permute.xlu0 0
    %93 = vperm.xlu0 %92, %v80
    %v94 = vpop.permute.xlu0 %93
    %95 = vset.pattern.permute.xlu0 0
    %96 = vperm.xlu0 %95, %v81
    %v97 = vpop.permute.xlu0 %96
    %98 = vset.pattern.permute.xlu0 0
    %99 = vperm.xlu0 %98, %v82
    %v100 = vpop.permute.xlu0 %99
    %101 = vset.pattern.permute.xlu0 0
    %102 = vperm.xlu0 %101, %v83
    %v103 = vpop.permute.xlu0 %102
    %104 = vset.pattern.permute.xlu0 0
    %105 = vperm.xlu0 %104, %v84
    %v106 = vpop.permute.xlu0 %105
    %107 = vset.pattern.permute.xlu0 0
    %108 = vperm.xlu0 %107, %v85
    %v109 = vpop.permute.xlu0 %108
    %110 = vset.pattern.permute.xlu0 0
    %111 = vperm.xlu0 %110, %v86
    %v112 = vpop.permute.xlu0 %111
    %vm113 = vcmp.eq.s32.totalorder %v91, %v88
    %vm114 = vcmp.eq.s32.totalorder %v94, %v88
    %vm115 = vcmp.eq.s32.totalorder %v97, %v88
    %vm116 = vcmp.eq.s32.totalorder %v100, %v88
    %vm117 = vcmp.eq.s32.totalorder %v103, %v88
    %vm118 = vcmp.eq.s32.totalorder %v106, %v88
    %vm119 = vcmp.eq.s32.totalorder %v109, %v88
    %vm120 = vcmp.eq.s32.totalorder %v112, %v88
    %v121 = vsel %vm113, 1.0, 0.0
    %v122 = vsel %vm114, 1.0, 0.0
    %v123 = vsel %vm115, 1.0, 0.0
    %v124 = vsel %vm116, 1.0, 0.0
    %v125 = vsel %vm117, 1.0, 0.0
    %v126 = vsel %vm118, 1.0, 0.0
    %v127 = vsel %vm119, 1.0, 0.0
    %v128 = vsel %vm120, 1.0, 0.0
    %v129 = vpack.c.bf16 %v122, %v121
    %v130 = vpack.c.bf16 %v124, %v123
    %v131 = vpack.c.bf16 %v126, %v125
    %v132 = vpack.c.bf16 %v128, %v127
    %v133 = vld [vmem:[%s1] sm:$0xff]
    %v134 = vld [vmem:[%s1 + $0x8] sm:$0xff]
    %v135 = vld [vmem:[%s1 + $0x10] sm:$0xff]
    %v136 = vld [vmem:[%s1 + $0x18] sm:$0xff]
    %v137 = vld [vmem:[%s5] sm:$0xf]
    %v139 = vlaneseq
    %v140 = vshrl.u32 %v139, 7
    %v141 = vsub.s32 0, %v140
    %v142 = vrot.slane %v137, %v141
    %v143 = vlaneseq
    %v144 = vshrl.u32 %v143, 7
    %v145 = vsub.s32 1, %v144
    %v146 = vrot.slane %v137, %v145
    %v147 = vlaneseq
    %v148 = vshrl.u32 %v147, 7
    %v149 = vsub.s32 2, %v148
    %v150 = vrot.slane %v137, %v149
    %v151 = vlaneseq
    %v152 = vshrl.u32 %v151, 7
    %v153 = vsub.s32 3, %v152
    %v154 = vrot.slane %v137, %v153
    %v163 = vunpack.c.l.b16 %v133
    %v164 = vunpack.c.h.b16 %v133
    %v165 = vunpack.c.l.b16 %v134
    %v166 = vunpack.c.h.b16 %v134
    %v167 = vunpack.c.l.b16 %v135
    %v168 = vunpack.c.h.b16 %v135
    %v169 = vunpack.c.l.b16 %v136
    %v170 = vunpack.c.h.b16 %v136
    %v171 = vpack.c.b16 %v167, %v163
    %v172 = vpack.c.b16 %v168, %v164
    %v173 = vpack.c.b16 %v169, %v165
    %v174 = vpack.c.b16 %v170, %v166
    %vm179 = vcmask 130048
    %v181 = vsel %vm179, %v129, 0
    %v184 = vsel %vm179, %v130, 0
    %v187 = vsel %vm179, %v131, 0
    %v190 = vsel %vm179, %v132, 0
    %192 = vmatprep.subr.bf16.mxu0 0
    %193 = vmatpush1.bf16.msra.mxu0 0
    %194 = vmatprep.subr.bf16.mxu0 0
    %195 = vmatpush1.bf16.msra.mxu0 0
    %196 = vmatprep.subr.bf16.mxu0 0
    %197 = vmatpush1.bf16.msra.mxu0 0
    %198 = vmatprep.subr.bf16.mxu0 0
    %199 = vmatpush1.bf16.msra.mxu0 0
    %200 = vmatprep.subr.bf16.mxu0 0
    %201 = vmatpush1.bf16.msra.mxu0 0
    %202 = vmatprep.subr.bf16.mxu0 0
    %203 = vmatpush1.bf16.msra.mxu0 0
    %204 = vmatprep.subr.bf16.mxu0 0
    %205 = vmatpush1.bf16.msra.mxu0 0
    %206 = vmatprep.subr.bf16.mxu0 %v172
    %207 = vmatpush1.bf16.msra.mxu0 %v171
    %208 = vmatprep.subr.bf16.mxu0 0
    %209 = vmatpush2.bf16.msra.mxu0 0
    %210 = vmatprep.subr.bf16.mxu0 0
    %211 = vmatpush2.bf16.msra.mxu0 0
    %212 = vmatprep.subr.bf16.mxu0 0
    %213 = vmatpush2.bf16.msra.mxu0 0
    %214 = vmatprep.subr.bf16.mxu0 0
    %215 = vmatpush2.bf16.msra.mxu0 0
    %216 = vmatprep.subr.bf16.mxu0 0
    %217 = vmatpush2.bf16.msra.mxu0 0
    %218 = vmatprep.subr.bf16.mxu0 0
    %219 = vmatpush2.bf16.msra.mxu0 0
    %220 = vmatprep.subr.bf16.mxu0 0
    %221 = vmatpush2.bf16.msra.mxu0 0
    %222 = vmatprep.subr.bf16.mxu0 0
    %223 = vmatpush2.bf16.msra.mxu0 0
    %224 = vmatprep.mubr.bf16.mxu0 0
    %225 = vmatmul.mubr.bf16.gmra.mxu0 %v181
    %v226 = vpop.f32.mrf.mxu0
    %v227 = vadd.f32 %v142, %v226
    %v228 = vpop.f32.mrf.mxu0
    %v229 = vadd.f32 %v146, %v228
    %v230 = vpop.f32.mrf.mxu0
    %v231 = vadd.f32 %v142, %v230
    %v232 = vpop.f32.mrf.mxu0
    %v233 = vadd.f32 %v146, %v232
    %234 = vmatprep.mubr.bf16.mxu0 0
    %235 = vmatmul.mubr.bf16.gmra.mxu0 %v184
    %v236 = vpop.f32.mrf.mxu0
    %v237 = vadd.f32 %v142, %v236
    %v238 = vpop.f32.mrf.mxu0
    %v239 = vadd.f32 %v146, %v238
    %v240 = vpop.f32.mrf.mxu0
    %v241 = vadd.f32 %v142, %v240
    %v242 = vpop.f32.mrf.mxu0
    %v243 = vadd.f32 %v146, %v242
    %244 = vmatprep.mubr.bf16.mxu0 0
    %245 = vmatmul.mubr.bf16.gmra.mxu0 %v187
    %v246 = vpop.f32.mrf.mxu0
    %v247 = vadd.f32 %v142, %v246
    %v248 = vpop.f32.mrf.mxu0
    %v249 = vadd.f32 %v146, %v248
    %v250 = vpop.f32.mrf.mxu0
    %v251 = vadd.f32 %v142, %v250
    %v252 = vpop.f32.mrf.mxu0
    %v253 = vadd.f32 %v146, %v252
    %254 = vmatprep.mubr.bf16.mxu0 0
    %255 = vmatmul.mubr.bf16.gmra.mxu0 %v190
    %v256 = vpop.f32.mrf.mxu0
    %v257 = vadd.f32 %v142, %v256
    %v258 = vpop.f32.mrf.mxu0
    %v259 = vadd.f32 %v146, %v258
    %v260 = vpop.f32.mrf.mxu0
    %v261 = vadd.f32 %v142, %v260
    %v262 = vpop.f32.mrf.mxu0
    %v263 = vadd.f32 %v146, %v262
    %264 = vdwg.mxu0
    %265 = vmatprep.subr.bf16.mxu0 0
    %266 = vmatpush1.bf16.msra.mxu0 0
    %267 = vmatprep.subr.bf16.mxu0 0
    %268 = vmatpush1.bf16.msra.mxu0 0
    %269 = vmatprep.subr.bf16.mxu0 0
    %270 = vmatpush1.bf16.msra.mxu0 0
    %271 = vmatprep.subr.bf16.mxu0 0
    %272 = vmatpush1.bf16.msra.mxu0 0
    %273 = vmatprep.subr.bf16.mxu0 0
    %274 = vmatpush1.bf16.msra.mxu0 0
    %275 = vmatprep.subr.bf16.mxu0 0
    %276 = vmatpush1.bf16.msra.mxu0 0
    %277 = vmatprep.subr.bf16.mxu0 0
    %278 = vmatpush1.bf16.msra.mxu0 0
    %279 = vmatprep.subr.bf16.mxu0 %v174
    %280 = vmatpush1.bf16.msra.mxu0 %v173
    %281 = vmatprep.subr.bf16.mxu0 0
    %282 = vmatpush2.bf16.msra.mxu0 0
    %283 = vmatprep.subr.bf16.mxu0 0
    %284 = vmatpush2.bf16.msra.mxu0 0
    %285 = vmatprep.subr.bf16.mxu0 0
    %286 = vmatpush2.bf16.msra.mxu0 0
    %287 = vmatprep.subr.bf16.mxu0 0
    %288 = vmatpush2.bf16.msra.mxu0 0
    %289 = vmatprep.subr.bf16.mxu0 0
    %290 = vmatpush2.bf16.msra.mxu0 0
    %291 = vmatprep.subr.bf16.mxu0 0
    %292 = vmatpush2.bf16.msra.mxu0 0
    %293 = vmatprep.subr.bf16.mxu0 0
    %294 = vmatpush2.bf16.msra.mxu0 0
    %295 = vmatprep.subr.bf16.mxu0 0
    %296 = vmatpush2.bf16.msra.mxu0 0
    %297 = vmatprep.mubr.bf16.mxu0 0
    %298 = vmatmul.mubr.bf16.gmra.mxu0 %v181
    %v299 = vpop.f32.mrf.mxu0
    %v300 = vadd.f32 %v150, %v299
    %v301 = vpop.f32.mrf.mxu0
    %v302 = vadd.f32 %v154, %v301
    %v303 = vpop.f32.mrf.mxu0
    %v304 = vadd.f32 %v150, %v303
    %v305 = vpop.f32.mrf.mxu0
    %v306 = vadd.f32 %v154, %v305
    %307 = vmatprep.mubr.bf16.mxu0 0
    %308 = vmatmul.mubr.bf16.gmra.mxu0 %v184
    %v309 = vpop.f32.mrf.mxu0
    %v310 = vadd.f32 %v150, %v309
    %v311 = vpop.f32.mrf.mxu0
    %v312 = vadd.f32 %v154, %v311
    %v313 = vpop.f32.mrf.mxu0
    %v314 = vadd.f32 %v150, %v313
    %v315 = vpop.f32.mrf.mxu0
    %v316 = vadd.f32 %v154, %v315
    %317 = vmatprep.mubr.bf16.mxu0 0
    %318 = vmatmul.mubr.bf16.gmra.mxu0 %v187
    %v319 = vpop.f32.mrf.mxu0
    %v320 = vadd.f32 %v150, %v319
    %v321 = vpop.f32.mrf.mxu0
    %v322 = vadd.f32 %v154, %v321
    %v323 = vpop.f32.mrf.mxu0
    %v324 = vadd.f32 %v150, %v323
    %v325 = vpop.f32.mrf.mxu0
    %v326 = vadd.f32 %v154, %v325
    %327 = vmatprep.mubr.bf16.mxu0 0
    %328 = vmatmul.mubr.bf16.gmra.mxu0 %v190
    %v329 = vpop.f32.mrf.mxu0
    %v330 = vadd.f32 %v150, %v329
    %v331 = vpop.f32.mrf.mxu0
    %v332 = vadd.f32 %v154, %v331
    %v333 = vpop.f32.mrf.mxu0
    %v334 = vadd.f32 %v150, %v333
    %v335 = vpop.f32.mrf.mxu0
    %v336 = vadd.f32 %v154, %v335
    %337 = vdwg.mxu0
    %338 = vst [vmem:[#allocation2] sm:$0xff] %v227
    %339 = vst [vmem:[#allocation2 + $0x8] sm:$0xff] %v229
    %340 = vst [vmem:[#allocation2 + $0x10] sm:$0xff] %v300
    %341 = vst [vmem:[#allocation2 + $0x18] sm:$0xff] %v302
    %342 = vst [vmem:[#allocation2 + $0x20] sm:$0xff] %v231
    %343 = vst [vmem:[#allocation2 + $0x28] sm:$0xff] %v233
    %344 = vst [vmem:[#allocation2 + $0x30] sm:$0xff] %v304
    %345 = vst [vmem:[#allocation2 + $0x38] sm:$0xff] %v306
    %346 = vst [vmem:[#allocation2 + $0x40] sm:$0xff] %v237
    %347 = vst [vmem:[#allocation2 + $0x48] sm:$0xff] %v239
    %348 = vst [vmem:[#allocation2 + $0x50] sm:$0xff] %v310
    %349 = vst [vmem:[#allocation2 + $0x58] sm:$0xff] %v312
    %350 = vst [vmem:[#allocation2 + $0x60] sm:$0xff] %v241
    %351 = vst [vmem:[#allocation2 + $0x68] sm:$0xff] %v243
    %352 = vst [vmem:[#allocation2 + $0x70] sm:$0xff] %v314
    %353 = vst [vmem:[#allocation2 + $0x78] sm:$0xff] %v316
    %354 = vst [vmem:[#allocation2 + $0x80] sm:$0xff] %v247
    %355 = vst [vmem:[#allocation2 + $0x88] sm:$0xff] %v249
    %356 = vst [vmem:[#allocation2 + $0x90] sm:$0xff] %v320
    %357 = vst [vmem:[#allocation2 + $0x98] sm:$0xff] %v322
    %358 = vst [vmem:[#allocation2 + $0xa0] sm:$0xff] %v251
    %359 = vst [vmem:[#allocation2 + $0xa8] sm:$0xff] %v253
    %360 = vst [vmem:[#allocation2 + $0xb0] sm:$0xff] %v324
    %361 = vst [vmem:[#allocation2 + $0xb8] sm:$0xff] %v326
    %362 = vst [vmem:[#allocation2 + $0xc0] sm:$0xff] %v257
    %363 = vst [vmem:[#allocation2 + $0xc8] sm:$0xff] %v259
    %364 = vst [vmem:[#allocation2 + $0xd0] sm:$0xff] %v330
    %365 = vst [vmem:[#allocation2 + $0xd8] sm:$0xff] %v332
    %366 = vst [vmem:[#allocation2 + $0xe0] sm:$0xff] %v261
    %367 = vst [vmem:[#allocation2 + $0xe8] sm:$0xff] %v263
    %368 = vst [vmem:[#allocation2 + $0xf0] sm:$0xff] %v334
    %369 = vst [vmem:[#allocation2 + $0xf8] sm:$0xff] %v336
    %v370 = vld [vmem:[%s6] sm:$0xf]
    %v372 = vlaneseq
    %v373 = vshrl.u32 %v372, 7
    %v374 = vsub.s32 0, %v373
    %v375 = vrot.slane %v370, %v374
    %v376 = vlaneseq
    %v377 = vshrl.u32 %v376, 7
    %v378 = vsub.s32 1, %v377
    %v379 = vrot.slane %v370, %v378
    %v380 = vlaneseq
    %v381 = vshrl.u32 %v380, 7
    %v382 = vsub.s32 2, %v381
    %v383 = vrot.slane %v370, %v382
    %v384 = vlaneseq
    %v385 = vshrl.u32 %v384, 7
    %v386 = vsub.s32 3, %v385
    %v387 = vrot.slane %v370, %v386
    %v392 = vld [vmem:[%s7] sm:$0xf]
    %v394 = vlaneseq
    %v395 = vshrl.u32 %v394, 7
    %v396 = vsub.s32 0, %v395
    %v397 = vrot.slane %v392, %v396
    %v398 = vlaneseq
    %v399 = vshrl.u32 %v398, 7
    %v400 = vsub.s32 1, %v399
    %v401 = vrot.slane %v392, %v400
    %v402 = vlaneseq
    %v403 = vshrl.u32 %v402, 7
    %v404 = vsub.s32 2, %v403
    %v405 = vrot.slane %v392, %v404
    %v406 = vlaneseq
    %v407 = vshrl.u32 %v406, 7
    %v408 = vsub.s32 3, %v407
    %v409 = vrot.slane %v392, %v408
    %v414 = vld [vmem:[#allocation2] sm:$0xff]
    %v415 = vld [vmem:[#allocation2 + $0x8] sm:$0xff]
    %v416 = vld [vmem:[#allocation2 + $0x10] sm:$0xff]
    %v417 = vld [vmem:[#allocation2 + $0x18] sm:$0xff]
    %v418 = vld [vmem:[#allocation4] sm:$0xff]
    %v419 = vld [vmem:[#allocation4 + $0x8] sm:$0xff]
    %v420 = vld [vmem:[#allocation4 + $0x10] sm:$0xff]
    %v421 = vld [vmem:[#allocation4 + $0x18] sm:$0xff]
    %v422 = vld [vmem:[#allocation4 + $0x20] sm:$0xff]
    %v423 = vld [vmem:[#allocation4 + $0x28] sm:$0xff]
    %v424 = vld [vmem:[#allocation4 + $0x30] sm:$0xff]
    %v425 = vld [vmem:[#allocation4 + $0x38] sm:$0xff]
    %v426 = vld [vmem:[#allocation4 + $0x40] sm:$0xff]
    %v427 = vld [vmem:[#allocation4 + $0x48] sm:$0xff]
    %v428 = vld [vmem:[#allocation4 + $0x50] sm:$0xff]
    %v429 = vld [vmem:[#allocation4 + $0x58] sm:$0xff]
    %v430 = vld [vmem:[#allocation4 + $0x60] sm:$0xff]
    %v431 = vld [vmem:[#allocation4 + $0x68] sm:$0xff]
    %v432 = vld [vmem:[#allocation4 + $0x70] sm:$0xff]
    %v433 = vld [vmem:[#allocation4 + $0x78] sm:$0xff]
    %v434 = vld [vmem:[#allocation4 + $0x80] sm:$0xff]
    %v435 = vld [vmem:[#allocation4 + $0x88] sm:$0xff]
    %v436 = vld [vmem:[#allocation4 + $0x90] sm:$0xff]
    %v437 = vld [vmem:[#allocation4 + $0x98] sm:$0xff]
    %v438 = vld [vmem:[#allocation4 + $0xa0] sm:$0xff]
    %v439 = vld [vmem:[#allocation4 + $0xa8] sm:$0xff]
    %v440 = vld [vmem:[#allocation4 + $0xb0] sm:$0xff]
    %v441 = vld [vmem:[#allocation4 + $0xb8] sm:$0xff]
    %v442 = vld [vmem:[#allocation4 + $0xc0] sm:$0xff]
    %v443 = vld [vmem:[#allocation4 + $0xc8] sm:$0xff]
    %v444 = vld [vmem:[#allocation4 + $0xd0] sm:$0xff]
    %v445 = vld [vmem:[#allocation4 + $0xd8] sm:$0xff]
    %v446 = vld [vmem:[#allocation4 + $0xe0] sm:$0xff]
    %v447 = vld [vmem:[#allocation4 + $0xe8] sm:$0xff]
    %v448 = vld [vmem:[#allocation4 + $0xf0] sm:$0xff]
    %v449 = vld [vmem:[#allocation4 + $0xf8] sm:$0xff]
    %v482 = vunpack.c.l.b16 %v418
    %v483 = vunpack.c.h.b16 %v418
    %v484 = vunpack.c.l.b16 %v419
    %v485 = vunpack.c.h.b16 %v419
    %v486 = vunpack.c.l.b16 %v420
    %v487 = vunpack.c.h.b16 %v420
    %v488 = vunpack.c.l.b16 %v421
    %v489 = vunpack.c.h.b16 %v421
    %v490 = vunpack.c.l.b16 %v422
    %v491 = vunpack.c.h.b16 %v422
    %v492 = vunpack.c.l.b16 %v423
    %v493 = vunpack.c.h.b16 %v423
    %v494 = vunpack.c.l.b16 %v424
    %v495 = vunpack.c.h.b16 %v424
    %v496 = vunpack.c.l.b16 %v425
    %v497 = vunpack.c.h.b16 %v425
    %v498 = vunpack.c.l.b16 %v426
    %v499 = vunpack.c.h.b16 %v426
    %v500 = vunpack.c.l.b16 %v427
    %v501 = vunpack.c.h.b16 %v427
    %v502 = vunpack.c.l.b16 %v428
    %v503 = vunpack.c.h.b16 %v428
    %v504 = vunpack.c.l.b16 %v429
    %v505 = vunpack.c.h.b16 %v429
    %v506 = vunpack.c.l.b16 %v430
    %v507 = vunpack.c.h.b16 %v430
    %v508 = vunpack.c.l.b16 %v431
    %v509 = vunpack.c.h.b16 %v431
    %v510 = vunpack.c.l.b16 %v432
    %v511 = vunpack.c.h.b16 %v432
    %v512 = vunpack.c.l.b16 %v433
    %v513 = vunpack.c.h.b16 %v433
    %v514 = vunpack.c.l.b16 %v434
    %v515 = vunpack.c.h.b16 %v434
    %v516 = vunpack.c.l.b16 %v435
    %v517 = vunpack.c.h.b16 %v435
    %v518 = vunpack.c.l.b16 %v436
    %v519 = vunpack.c.h.b16 %v436
    %v520 = vunpack.c.l.b16 %v437
    %v521 = vunpack.c.h.b16 %v437
    %v522 = vunpack.c.l.b16 %v438
    %v523 = vunpack.c.h.b16 %v438
    %v524 = vunpack.c.l.b16 %v439
    %v525 = vunpack.c.h.b16 %v439
    %v526 = vunpack.c.l.b16 %v440
    %v527 = vunpack.c.h.b16 %v440
    %v528 = vunpack.c.l.b16 %v441
    %v529 = vunpack.c.h.b16 %v441
    %v530 = vunpack.c.l.b16 %v442
    %v531 = vunpack.c.h.b16 %v442
    %v532 = vunpack.c.l.b16 %v443
    %v533 = vunpack.c.h.b16 %v443
    %v534 = vunpack.c.l.b16 %v444
    %v535 = vunpack.c.h.b16 %v444
    %v536 = vunpack.c.l.b16 %v445
    %v537 = vunpack.c.h.b16 %v445
    %v538 = vunpack.c.l.b16 %v446
    %v539 = vunpack.c.h.b16 %v446
    %v540 = vunpack.c.l.b16 %v447
    %v541 = vunpack.c.h.b16 %v447
    %v542 = vunpack.c.l.b16 %v448
    %v543 = vunpack.c.h.b16 %v448
    %v544 = vunpack.c.l.b16 %v449
    %v545 = vunpack.c.h.b16 %v449
    %v546 = vpack.c.b16 %v486, %v482
    %v547 = vpack.c.b16 %v487, %v483
    %v548 = vpack.c.b16 %v488, %v484
    %v549 = vpack.c.b16 %v489, %v485
    %v550 = vpack.c.b16 %v494, %v490
    %v551 = vpack.c.b16 %v495, %v491
    %v552 = vpack.c.b16 %v496, %v492
    %v553 = vpack.c.b16 %v497, %v493
    %v554 = vpack.c.b16 %v502, %v498
    %v555 = vpack.c.b16 %v503, %v499
    %v556 = vpack.c.b16 %v504, %v500
    %v557 = vpack.c.b16 %v505, %v501
    %v558 = vpack.c.b16 %v510, %v506
    %v559 = vpack.c.b16 %v511, %v507
    %v560 = vpack.c.b16 %v512, %v508
    %v561 = vpack.c.b16 %v513, %v509
    %v562 = vpack.c.b16 %v518, %v514
    %v563 = vpack.c.b16 %v519, %v515
    %v564 = vpack.c.b16 %v520, %v516
    %v565 = vpack.c.b16 %v521, %v517
    %v566 = vpack.c.b16 %v526, %v522
    %v567 = vpack.c.b16 %v527, %v523
    %v568 = vpack.c.b16 %v528, %v524
    %v569 = vpack.c.b16 %v529, %v525
    %v570 = vpack.c.b16 %v534, %v530
    %v571 = vpack.c.b16 %v535, %v531
    %v572 = vpack.c.b16 %v536, %v532
    %v573 = vpack.c.b16 %v537, %v533
    %v574 = vpack.c.b16 %v542, %v538
    %v575 = vpack.c.b16 %v543, %v539
    %v576 = vpack.c.b16 %v544, %v540
    %v577 = vpack.c.b16 %v545, %v541
    %610 = vmatprep.subr.bf16.mxu0 %v575
    %611 = vmatpush1.bf16.msra.mxu0 %v574
    %612 = vmatprep.subr.bf16.mxu0 %v571
    %613 = vmatpush1.bf16.msra.mxu0 %v570
    %614 = vmatprep.subr.bf16.mxu0 %v567
    %615 = vmatpush1.bf16.msra.mxu0 %v566
    %616 = vmatprep.subr.bf16.mxu0 %v563
    %617 = vmatpush1.bf16.msra.mxu0 %v562
    %618 = vmatprep.subr.bf16.mxu0 %v559
    %619 = vmatpush1.bf16.msra.mxu0 %v558
    %620 = vmatprep.subr.bf16.mxu0 %v555
    %621 = vmatpush1.bf16.msra.mxu0 %v554
    %622 = vmatprep.subr.bf16.mxu0 %v551
    %623 = vmatpush1.bf16.msra.mxu0 %v550
    %624 = vmatprep.subr.bf16.mxu0 %v547
    %625 = vmatpush1.bf16.msra.mxu0 %v546
    %626 = vmatprep.subr.bf16.mxu0 0
    %627 = vmatpush2.bf16.msra.mxu0 0
    %628 = vmatprep.subr.bf16.mxu0 0
    %629 = vmatpush2.bf16.msra.mxu0 0
    %630 = vmatprep.subr.bf16.mxu0 0
    %631 = vmatpush2.bf16.msra.mxu0 0
    %632 = vmatprep.subr.bf16.mxu0 0
    %633 = vmatpush2.bf16.msra.mxu0 0
    %634 = vmatprep.subr.bf16.mxu0 0
    %635 = vmatpush2.bf16.msra.mxu0 0
    %636 = vmatprep.subr.bf16.mxu0 0
    %637 = vmatpush2.bf16.msra.mxu0 0
    %638 = vmatprep.subr.bf16.mxu0 0
    %639 = vmatpush2.bf16.msra.mxu0 0
    %640 = vmatprep.subr.bf16.mxu0 0
    %641 = vmatpush2.bf16.msra.mxu0 0
    %642 = vmatprep.mubr.bf16.mxu0 0
    %643 = vmatmul.mubr.bf16.gmra.mxu0 0
    %v644 = vpop.f32.mrf.mxu0
    %v645 = vadd.f32 0.0, %v644
    %v646 = vpop.f32.mrf.mxu0
    %v647 = vadd.f32 0.0, %v646
    %v648 = vpop.f32.mrf.mxu0
    %v649 = vpop.f32.mrf.mxu0
    %650 = vdwg.mxu0
    %651 = vmatprep.subr.bf16.mxu0 %v577
    %652 = vmatpush1.bf16.msra.mxu0 %v576
    %653 = vmatprep.subr.bf16.mxu0 %v573
    %654 = vmatpush1.bf16.msra.mxu0 %v572
    %655 = vmatprep.subr.bf16.mxu0 %v569
    %656 = vmatpush1.bf16.msra.mxu0 %v568
    %657 = vmatprep.subr.bf16.mxu0 %v565
    %658 = vmatpush1.bf16.msra.mxu0 %v564
    %659 = vmatprep.subr.bf16.mxu0 %v561
    %660 = vmatpush1.bf16.msra.mxu0 %v560
    %661 = vmatprep.subr.bf16.mxu0 %v557
    %662 = vmatpush1.bf16.msra.mxu0 %v556
    %663 = vmatprep.subr.bf16.mxu0 %v553
    %664 = vmatpush1.bf16.msra.mxu0 %v552
    %665 = vmatprep.subr.bf16.mxu0 %v549
    %666 = vmatpush1.bf16.msra.mxu0 %v548
    %667 = vmatprep.subr.bf16.mxu0 0
    %668 = vmatpush2.bf16.msra.mxu0 0
    %669 = vmatprep.subr.bf16.mxu0 0
    %670 = vmatpush2.bf16.msra.mxu0 0
    %671 = vmatprep.subr.bf16.mxu0 0
    %672 = vmatpush2.bf16.msra.mxu0 0
    %673 = vmatprep.subr.bf16.mxu0 0
    %674 = vmatpush2.bf16.msra.mxu0 0
    %675 = vmatprep.subr.bf16.mxu0 0
    %676 = vmatpush2.bf16.msra.mxu0 0
    %677 = vmatprep.subr.bf16.mxu0 0
    %678 = vmatpush2.bf16.msra.mxu0 0
    %679 = vmatprep.subr.bf16.mxu0 0
    %680 = vmatpush2.bf16.msra.mxu0 0
    %681 = vmatprep.subr.bf16.mxu0 0
    %682 = vmatpush2.bf16.msra.mxu0 0
    %683 = vmatprep.mubr.bf16.mxu0 0
    %684 = vmatmul.mubr.bf16.gmra.mxu0 0
    %v685 = vpop.f32.mrf.mxu0
    %v686 = vadd.f32 0.0, %v685
    %v687 = vpop.f32.mrf.mxu0
    %v688 = vadd.f32 0.0, %v687
    %v689 = vpop.f32.mrf.mxu0
    %v690 = vpop.f32.mrf.mxu0
    %691 = vdwg.mxu0
    %v692 = vadd.f32 %v414, %v645
    %v693 = vadd.f32 %v415, %v647
    %v694 = vadd.f32 %v416, %v686
    %v695 = vadd.f32 %v417, %v688
    %v696 = vtanh.pop %v692
    %v697 = vtanh.pop %v693
    %v698 = vtanh.pop %v694
    %v699 = vmul.f32 %v696, 0.5
    %v700 = vmul.f32 %v697, 0.5
    %v701 = vmul.f32 %v698, 0.5
    %v702 = vadd.f32 %v699, 0.5
    %v703 = vadd.f32 %v700, 0.5
    %v704 = vadd.f32 %v701, 0.5
    %v705 = vtanh.pop %v695
    %v706 = vmul.f32 %v703, 0.0
    %v707 = vmul.f32 %v702, %v705
    %v708 = vadd.f32 %v706, %v707
    %v709 = vtanh.pop %v708
    %v710 = vmul.f32 %v704, %v709
    %v711 = vld [vmem:[#allocation2 + $0x20] sm:$0xff]
    %v712 = vld [vmem:[#allocation2 + $0x28] sm:$0xff]
    %v713 = vld [vmem:[#allocation2 + $0x30] sm:$0xff]
    %v714 = vld [vmem:[#allocation2 + $0x38] sm:$0xff]
    %v715 = vpack.c.bf16 %v710, %v710
    %716 = vmatprep.subr.bf16.mxu0 %v575
    %717 = vmatpush1.bf16.msra.mxu0 %v574
    %718 = vmatprep.subr.bf16.mxu0 %v571
    %719 = vmatpush1.bf16.msra.mxu0 %v570
    %720 = vmatprep.subr.bf16.mxu0 %v567
    %721 = vmatpush1.bf16.msra.mxu0 %v566
    %722 = vmatprep.subr.bf16.mxu0 %v563
    %723 = vmatpush1.bf16.msra.mxu0 %v562
    %724 = vmatprep.subr.bf16.mxu0 %v559
    %725 = vmatpush1.bf16.msra.mxu0 %v558
    %726 = vmatprep.subr.bf16.mxu0 %v555
    %727 = vmatpush1.bf16.msra.mxu0 %v554
    %728 = vmatprep.subr.bf16.mxu0 %v551
    %729 = vmatpush1.bf16.msra.mxu0 %v550
    %730 = vmatprep.subr.bf16.mxu0 %v547
    %731 = vmatpush1.bf16.msra.mxu0 %v546
    %732 = vmatprep.subr.bf16.mxu0 0
    %733 = vmatpush2.bf16.msra.mxu0 0
    %734 = vmatprep.subr.bf16.mxu0 0
    %735 = vmatpush2.bf16.msra.mxu0 0
    %736 = vmatprep.subr.bf16.mxu0 0
    %737 = vmatpush2.bf16.msra.mxu0 0
    %738 = vmatprep.subr.bf16.mxu0 0
    %739 = vmatpush2.bf16.msra.mxu0 0
    %740 = vmatprep.subr.bf16.mxu0 0
    %741 = vmatpush2.bf16.msra.mxu0 0
    %742 = vmatprep.subr.bf16.mxu0 0
    %743 = vmatpush2.bf16.msra.mxu0 0
    %744 = vmatprep.subr.bf16.mxu0 0
    %745 = vmatpush2.bf16.msra.mxu0 0
    %746 = vmatprep.subr.bf16.mxu0 0
    %747 = vmatpush2.bf16.msra.mxu0 0
    %748 = vmatprep.mubr.bf16.mxu0 0
    %749 = vmatmul.mubr.bf16.gmra.mxu0 %v715
    %v750 = vpop.f32.mrf.mxu0
    %v751 = vadd.f32 0.0, %v750
    %v752 = vpop.f32.mrf.mxu0
    %v753 = vadd.f32 0.0, %v752
    %v754 = vpop.f32.mrf.mxu0
    %v755 = vpop.f32.mrf.mxu0
    %756 = vdwg.mxu0
    %757 = vmatprep.subr.bf16.mxu0 %v577
    %758 = vmatpush1.bf16.msra.mxu0 %v576
    %759 = vmatprep.subr.bf16.mxu0 %v573
    %760 = vmatpush1.bf16.msra.mxu0 %v572
    %761 = vmatprep.subr.bf16.mxu0 %v569
    %762 = vmatpush1.bf16.msra.mxu0 %v568
    %763 = vmatprep.subr.bf16.mxu0 %v565
    %764 = vmatpush1.bf16.msra.mxu0 %v564
    %765 = vmatprep.subr.bf16.mxu0 %v561
    %766 = vmatpush1.bf16.msra.mxu0 %v560
    %767 = vmatprep.subr.bf16.mxu0 %v557
    %768 = vmatpush1.bf16.msra.mxu0 %v556
    %769 = vmatprep.subr.bf16.mxu0 %v553
    %770 = vmatpush1.bf16.msra.mxu0 %v552
    %771 = vmatprep.subr.bf16.mxu0 %v549
    %772 = vmatpush1.bf16.msra.mxu0 %v548
    %773 = vmatprep.subr.bf16.mxu0 0
    %774 = vmatpush2.bf16.msra.mxu0 0
    %775 = vmatprep.subr.bf16.mxu0 0
    %776 = vmatpush2.bf16.msra.mxu0 0
    %777 = vmatprep.subr.bf16.mxu0 0
    %778 = vmatpush2.bf16.msra.mxu0 0
    %779 = vmatprep.subr.bf16.mxu0 0
    %780 = vmatpush2.bf16.msra.mxu0 0
    %781 = vmatprep.subr.bf16.mxu0 0
    %782 = vmatpush2.bf16.msra.mxu0 0
    %783 = vmatprep.subr.bf16.mxu0 0
    %784 = vmatpush2.bf16.msra.mxu0 0
    %785 = vmatprep.subr.bf16.mxu0 0
    %786 = vmatpush2.bf16.msra.mxu0 0
    %787 = vmatprep.subr.bf16.mxu0 0
    %788 = vmatpush2.bf16.msra.mxu0 0
    %789 = vmatprep.mubr.bf16.mxu0 0
    %790 = vmatmul.mubr.bf16.gmra.mxu0 %v715
    %v791 = vpop.f32.mrf.mxu0
    %v792 = vadd.f32 0.0, %v791
    %v793 = vpop.f32.mrf.mxu0
    %v794 = vadd.f32 0.0, %v793
    %v795 = vpop.f32.mrf.mxu0
    %v796 = vpop.f32.mrf.mxu0
    %797 = vdwg.mxu0
    %v798 = vadd.f32 %v711, %v751
    %v799 = vadd.f32 %v712, %v753
    %v800 = vadd.f32 %v713, %v792
    %v801 = vadd.f32 %v714, %v794
    %v802 = vtanh.pop %v798
    %v803 = vtanh.pop %v799
    %v804 = vtanh.pop %v800
    %v805 = vmul.f32 %v802, 0.5
    %v806 = vmul.f32 %v803, 0.5
    %v807 = vmul.f32 %v804, 0.5
    %v808 = vadd.f32 %v805, 0.5
    %v809 = vadd.f32 %v806, 0.5
    %v810 = vadd.f32 %v807, 0.5
    %v811 = vtanh.pop %v801
    %v812 = vmul.f32 %v809, %v708
    %v813 = vmul.f32 %v808, %v811
    %v814 = vadd.f32 %v812, %v813
    %v815 = vtanh.pop %v814
    %v816 = vmul.f32 %v810, %v815
    %v817 = vpack.c.bf16 0.0, 0.0
    %v818 = vld [vmem:[#allocation6] sm:$0xff]
    %v819 = vld [vmem:[#allocation6 + $0x8] sm:$0xff]
    %v820 = vld [vmem:[#allocation6 + $0x10] sm:$0xff]
    %v821 = vld [vmem:[#allocation6 + $0x18] sm:$0xff]
    %v822 = vld [vmem:[#allocation6 + $0x20] sm:$0xff]
    %v823 = vld [vmem:[#allocation6 + $0x28] sm:$0xff]
    %v824 = vld [vmem:[#allocation6 + $0x30] sm:$0xff]
    %v825 = vld [vmem:[#allocation6 + $0x38] sm:$0xff]
    %v826 = vld [vmem:[#allocation6 + $0x40] sm:$0xff]
    %v827 = vld [vmem:[#allocation6 + $0x48] sm:$0xff]
    %v828 = vld [vmem:[#allocation6 + $0x50] sm:$0xff]
    %v829 = vld [vmem:[#allocation6 + $0x58] sm:$0xff]
    %v830 = vld [vmem:[#allocation6 + $0x60] sm:$0xff]
    %v831 = vld [vmem:[#allocation6 + $0x68] sm:$0xff]
    %v832 = vld [vmem:[#allocation6 + $0x70] sm:$0xff]
    %v833 = vld [vmem:[#allocation6 + $0x78] sm:$0xff]
    %v834 = vld [vmem:[#allocation6 + $0x80] sm:$0xff]
    %v835 = vld [vmem:[#allocation6 + $0x88] sm:$0xff]
    %v836 = vld [vmem:[#allocation6 + $0x90] sm:$0xff]
    %v837 = vld [vmem:[#allocation6 + $0x98] sm:$0xff]
    %v838 = vld [vmem:[#allocation6 + $0xa0] sm:$0xff]
    %v839 = vld [vmem:[#allocation6 + $0xa8] sm:$0xff]
    %v840 = vld [vmem:[#allocation6 + $0xb0] sm:$0xff]
    %v841 = vld [vmem:[#allocation6 + $0xb8] sm:$0xff]
    %v842 = vld [vmem:[#allocation6 + $0xc0] sm:$0xff]
    %v843 = vld [vmem:[#allocation6 + $0xc8] sm:$0xff]
    %v844 = vld [vmem:[#allocation6 + $0xd0] sm:$0xff]
    %v845 = vld [vmem:[#allocation6 + $0xd8] sm:$0xff]
    %v846 = vld [vmem:[#allocation6 + $0xe0] sm:$0xff]
    %v847 = vld [vmem:[#allocation6 + $0xe8] sm:$0xff]
    %v848 = vld [vmem:[#allocation6 + $0xf0] sm:$0xff]
    %v849 = vld [vmem:[#allocation6 + $0xf8] sm:$0xff]
    %v850 = vld [vmem:[#allocation6 + $0x100] sm:$0xff]
    %v851 = vld [vmem:[#allocation6 + $0x108] sm:$0xff]
    %v852 = vld [vmem:[#allocation6 + $0x110] sm:$0xff]
    %v853 = vld [vmem:[#allocation6 + $0x118] sm:$0xff]
    %v854 = vld [vmem:[#allocation6 + $0x120] sm:$0xff]
    %v855 = vld [vmem:[#allocation6 + $0x128] sm:$0xff]
    %v856 = vld [vmem:[#allocation6 + $0x130] sm:$0xff]
    %v857 = vld [vmem:[#allocation6 + $0x138] sm:$0xff]
    %v858 = vld [vmem:[#allocation6 + $0x140] sm:$0xff]
    %v859 = vld [vmem:[#allocation6 + $0x148] sm:$0xff]
    %v860 = vld [vmem:[#allocation6 + $0x150] sm:$0xff]
    %v861 = vld [vmem:[#allocation6 + $0x158] sm:$0xff]
    %v862 = vld [vmem:[#allocation6 + $0x160] sm:$0xff]
    %v863 = vld [vmem:[#allocation6 + $0x168] sm:$0xff]
    %v864 = vld [vmem:[#allocation6 + $0x170] sm:$0xff]
    %v865 = vld [vmem:[#allocation6 + $0x178] sm:$0xff]
    %v866 = vld [vmem:[#allocation6 + $0x180] sm:$0xff]
    %v867 = vld [vmem:[#allocation6 + $0x188] sm:$0xff]
    %v868 = vld [vmem:[#allocation6 + $0x190] sm:$0xff]
    %v869 = vld [vmem:[#allocation6 + $0x198] sm:$0xff]
    %v870 = vld [vmem:[#allocation6 + $0x1a0] sm:$0xff]
    %v871 = vld [vmem:[#allocation6 + $0x1a8] sm:$0xff]
    %v872 = vld [vmem:[#allocation6 + $0x1b0] sm:$0xff]
    %v873 = vld [vmem:[#allocation6 + $0x1b8] sm:$0xff]
    %v874 = vld [vmem:[#allocation6 + $0x1c0] sm:$0xff]
    %v875 = vld [vmem:[#allocation6 + $0x1c8] sm:$0xff]
    %v876 = vld [vmem:[#allocation6 + $0x1d0] sm:$0xff]
    %v877 = vld [vmem:[#allocation6 + $0x1d8] sm:$0xff]
    %v878 = vld [vmem:[#allocation6 + $0x1e0] sm:$0xff]
    %v879 = vld [vmem:[#allocation6 + $0x1e8] sm:$0xff]
    %v880 = vld [vmem:[#allocation6 + $0x1f0] sm:$0xff]
    %v881 = vld [vmem:[#allocation6 + $0x1f8] sm:$0xff]
    %v946 = vunpack.c.l.b16 %v818
    %v947 = vunpack.c.h.b16 %v818
    %v948 = vunpack.c.l.b16 %v819
    %v949 = vunpack.c.h.b16 %v819
    %v950 = vunpack.c.l.b16 %v820
    %v951 = vunpack.c.h.b16 %v820
    %v952 = vunpack.c.l.b16 %v821
    %v953 = vunpack.c.h.b16 %v821
    %v954 = vunpack.c.l.b16 %v822
    %v955 = vunpack.c.h.b16 %v822
    %v956 = vunpack.c.l.b16 %v823
    %v957 = vunpack.c.h.b16 %v823
    %v958 = vunpack.c.l.b16 %v824
    %v959 = vunpack.c.h.b16 %v824
    %v960 = vunpack.c.l.b16 %v825
    %v961 = vunpack.c.h.b16 %v825
    %v962 = vunpack.c.l.b16 %v826
    %v963 = vunpack.c.h.b16 %v826
    %v964 = vunpack.c.l.b16 %v827
    %v965 = vunpack.c.h.b16 %v827
    %v966 = vunpack.c.l.b16 %v828
    %v967 = vunpack.c.h.b16 %v828
    %v968 = vunpack.c.l.b16 %v829
    %v969 = vunpack.c.h.b16 %v829
    %v970 = vunpack.c.l.b16 %v830
    %v971 = vunpack.c.h.b16 %v830
    %v972 = vunpack.c.l.b16 %v831
    %v973 = vunpack.c.h.b16 %v831
    %v974 = vunpack.c.l.b16 %v832
    %v975 = vunpack.c.h.b16 %v832
    %v976 = vunpack.c.l.b16 %v833
    %v977 = vunpack.c.h.b16 %v833
    %v978 = vunpack.c.l.b16 %v834
    %v979 = vunpack.c.h.b16 %v834
    %v980 = vunpack.c.l.b16 %v835
    %v981 = vunpack.c.h.b16 %v835
    %v982 = vunpack.c.l.b16 %v836
    %v983 = vunpack.c.h.b16 %v836
    %v984 = vunpack.c.l.b16 %v837
    %v985 = vunpack.c.h.b16 %v837
    %v986 = vunpack.c.l.b16 %v838
    %v987 = vunpack.c.h.b16 %v838
    %v988 = vunpack.c.l.b16 %v839
    %v989 = vunpack.c.h.b16 %v839
    %v990 = vunpack.c.l.b16 %v840
    %v991 = vunpack.c.h.b16 %v840
    %v992 = vunpack.c.l.b16 %v841
    %v993 = vunpack.c.h.b16 %v841
    %v994 = vunpack.c.l.b16 %v842
    %v995 = vunpack.c.h.b16 %v842
    %v996 = vunpack.c.l.b16 %v843
    %v997 = vunpack.c.h.b16 %v843
    %v998 = vunpack.c.l.b16 %v844
    %v999 = vunpack.c.h.b16 %v844
    %v1000 = vunpack.c.l.b16 %v845
    %v1001 = vunpack.c.h.b16 %v845
    %v1002 = vunpack.c.l.b16 %v846
    %v1003 = vunpack.c.h.b16 %v846
    %v1004 = vunpack.c.l.b16 %v847
    %v1005 = vunpack.c.h.b16 %v847
    %v1006 = vunpack.c.l.b16 %v848
    %v1007 = vunpack.c.h.b16 %v848
    %v1008 = vunpack.c.l.b16 %v849
    %v1009 = vunpack.c.h.b16 %v849
    %v1010 = vunpack.c.l.b16 %v850
    %v1011 = vunpack.c.h.b16 %v850
    %v1012 = vunpack.c.l.b16 %v851
    %v1013 = vunpack.c.h.b16 %v851
    %v1014 = vunpack.c.l.b16 %v852
    %v1015 = vunpack.c.h.b16 %v852
    %v1016 = vunpack.c.l.b16 %v853
    %v1017 = vunpack.c.h.b16 %v853
    %v1018 = vunpack.c.l.b16 %v854
    %v1019 = vunpack.c.h.b16 %v854
    %v1020 = vunpack.c.l.b16 %v855
    %v1021 = vunpack.c.h.b16 %v855
    %v1022 = vunpack.c.l.b16 %v856
    %v1023 = vunpack.c.h.b16 %v856
    %v1024 = vunpack.c.l.b16 %v857
    %v1025 = vunpack.c.h.b16 %v857
    %v1026 = vunpack.c.l.b16 %v858
    %v1027 = vunpack.c.h.b16 %v858
    %v1028 = vunpack.c.l.b16 %v859
    %v1029 = vunpack.c.h.b16 %v859
    %v1030 = vunpack.c.l.b16 %v860
    %v1031 = vunpack.c.h.b16 %v860
    %v1032 = vunpack.c.l.b16 %v861
    %v1033 = vunpack.c.h.b16 %v861
    %v1034 = vunpack.c.l.b16 %v862
    %v1035 = vunpack.c.h.b16 %v862
    %v1036 = vunpack.c.l.b16 %v863
    %v1037 = vunpack.c.h.b16 %v863
    %v1038 = vunpack.c.l.b16 %v864
    %v1039 = vunpack.c.h.b16 %v864
    %v1040 = vunpack.c.l.b16 %v865
    %v1041 = vunpack.c.h.b16 %v865
    %v1042 = vunpack.c.l.b16 %v866
    %v1043 = vunpack.c.h.b16 %v866
    %v1044 = vunpack.c.l.b16 %v867
    %v1045 = vunpack.c.h.b16 %v867
    %v1046 = vunpack.c.l.b16 %v868
    %v1047 = vunpack.c.h.b16 %v868
    %v1048 = vunpack.c.l.b16 %v869
    %v1049 = vunpack.c.h.b16 %v869
    %v1050 = vunpack.c.l.b16 %v870
    %v1051 = vunpack.c.h.b16 %v870
    %v1052 = vunpack.c.l.b16 %v871
    %v1053 = vunpack.c.h.b16 %v871
    %v1054 = vunpack.c.l.b16 %v872
    %v1055 = vunpack.c.h.b16 %v872
    %v1056 = vunpack.c.l.b16 %v873
    %v1057 = vunpack.c.h.b16 %v873
    %v1058 = vunpack.c.l.b16 %v874
    %v1059 = vunpack.c.h.b16 %v874
    %v1060 = vunpack.c.l.b16 %v875
    %v1061 = vunpack.c.h.b16 %v875
    %v1062 = vunpack.c.l.b16 %v876
    %v1063 = vunpack.c.h.b16 %v876
    %v1064 = vunpack.c.l.b16 %v877
    %v1065 = vunpack.c.h.b16 %v877
    %v1066 = vunpack.c.l.b16 %v878
    %v1067 = vunpack.c.h.b16 %v878
    %v1068 = vunpack.c.l.b16 %v879
    %v1069 = vunpack.c.h.b16 %v879
    %v1070 = vunpack.c.l.b16 %v880
    %v1071 = vunpack.c.h.b16 %v880
    %v1072 = vunpack.c.l.b16 %v881
    %v1073 = vunpack.c.h.b16 %v881
    %v1074 = vpack.c.b16 %v950, %v946
    %v1075 = vpack.c.b16 %v951, %v947
    %v1076 = vpack.c.b16 %v952, %v948
    %v1077 = vpack.c.b16 %v953, %v949
    %v1078 = vpack.c.b16 %v958, %v954
    %v1079 = vpack.c.b16 %v959, %v955
    %v1080 = vpack.c.b16 %v960, %v956
    %v1081 = vpack.c.b16 %v961, %v957
    %v1082 = vpack.c.b16 %v966, %v962
    %v1083 = vpack.c.b16 %v967, %v963
    %v1084 = vpack.c.b16 %v968, %v964
    %v1085 = vpack.c.b16 %v969, %v965
    %v1086 = vpack.c.b16 %v974, %v970
    %v1087 = vpack.c.b16 %v975, %v971
    %v1088 = vpack.c.b16 %v976, %v972
    %v1089 = vpack.c.b16 %v977, %v973
    %v1090 = vpack.c.b16 %v982, %v978
    %v1091 = vpack.c.b16 %v983, %v979
    %v1092 = vpack.c.b16 %v984, %v980
    %v1093 = vpack.c.b16 %v985, %v981
    %v1094 = vpack.c.b16 %v990, %v986
    %v1095 = vpack.c.b16 %v991, %v987
    %v1096 = vpack.c.b16 %v992, %v988
    %v1097 = vpack.c.b16 %v993, %v989
    %v1098 = vpack.c.b16 %v998, %v994
    %v1099 = vpack.c.b16 %v999, %v995
    %v1100 = vpack.c.b16 %v1000, %v996
    %v1101 = vpack.c.b16 %v1001, %v997
    %v1102 = vpack.c.b16 %v1006, %v1002
    %v1103 = vpack.c.b16 %v1007, %v1003
    %v1104 = vpack.c.b16 %v1008, %v1004
    %v1105 = vpack.c.b16 %v1009, %v1005
    %v1106 = vpack.c.b16 %v1014, %v1010
    %v1107 = vpack.c.b16 %v1015, %v1011
    %v1108 = vpack.c.b16 %v1016, %v1012
    %v1109 = vpack.c.b16 %v1017, %v1013
    %v1110 = vpack.c.b16 %v1022, %v1018
    %v1111 = vpack.c.b16 %v1023, %v1019
    %v1112 = vpack.c.b16 %v1024, %v1020
    %v1113 = vpack.c.b16 %v1025, %v1021
    %v1114 = vpack.c.b16 %v1030, %v1026
    %v1115 = vpack.c.b16 %v1031, %v1027
    %v1116 = vpack.c.b16 %v1032, %v1028
    %v1117 = vpack.c.b16 %v1033, %v1029
    %v1118 = vpack.c.b16 %v1038, %v1034
    %v1119 = vpack.c.b16 %v1039, %v1035
    %v1120 = vpack.c.b16 %v1040, %v1036
    %v1121 = vpack.c.b16 %v1041, %v1037
    %v1122 = vpack.c.b16 %v1046, %v1042
    %v1123 = vpack.c.b16 %v1047, %v1043
    %v1124 = vpack.c.b16 %v1048, %v1044
    %v1125 = vpack.c.b16 %v1049, %v1045
    %v1126 = vpack.c.b16 %v1054, %v1050
    %v1127 = vpack.c.b16 %v1055, %v1051
    %v1128 = vpack.c.b16 %v1056, %v1052
    %v1129 = vpack.c.b16 %v1057, %v1053
    %v1130 = vpack.c.b16 %v1062, %v1058
    %v1131 = vpack.c.b16 %v1063, %v1059
    %v1132 = vpack.c.b16 %v1064, %v1060
    %v1133 = vpack.c.b16 %v1065, %v1061
    %v1134 = vpack.c.b16 %v1070, %v1066
    %v1135 = vpack.c.b16 %v1071, %v1067
    %v1136 = vpack.c.b16 %v1072, %v1068
    %v1137 = vpack.c.b16 %v1073, %v1069
    %1202 = vmatprep.subr.bf16.mxu0 %v1103
    %1203 = vmatpush1.bf16.msra.mxu0 %v1102
    %1204 = vmatprep.subr.bf16.mxu0 %v1099
    %1205 = vmatpush1.bf16.msra.mxu0 %v1098
    %1206 = vmatprep.subr.bf16.mxu0 %v1095
    %1207 = vmatpush1.bf16.msra.mxu0 %v1094
    %1208 = vmatprep.subr.bf16.mxu0 %v1091
    %1209 = vmatpush1.bf16.msra.mxu0 %v1090
    %1210 = vmatprep.subr.bf16.mxu0 %v1087
    %1211 = vmatpush1.bf16.msra.mxu0 %v1086
    %1212 = vmatprep.subr.bf16.mxu0 %v1083
    %1213 = vmatpush1.bf16.msra.mxu0 %v1082
    %1214 = vmatprep.subr.bf16.mxu0 %v1079
    %1215 = vmatpush1.bf16.msra.mxu0 %v1078
    %1216 = vmatprep.subr.bf16.mxu0 %v1075
    %1217 = vmatpush1.bf16.msra.mxu0 %v1074
    %1218 = vmatprep.subr.bf16.mxu0 %v1135
    %1219 = vmatpush2.bf16.msra.mxu0 %v1134
    %1220 = vmatprep.subr.bf16.mxu0 %v1131
    %1221 = vmatpush2.bf16.msra.mxu0 %v1130
    %1222 = vmatprep.subr.bf16.mxu0 %v1127
    %1223 = vmatpush2.bf16.msra.mxu0 %v1126
    %1224 = vmatprep.subr.bf16.mxu0 %v1123
    %1225 = vmatpush2.bf16.msra.mxu0 %v1122
    %1226 = vmatprep.subr.bf16.mxu0 %v1119
    %1227 = vmatpush2.bf16.msra.mxu0 %v1118
    %1228 = vmatprep.subr.bf16.mxu0 %v1115
    %1229 = vmatpush2.bf16.msra.mxu0 %v1114
    %1230 = vmatprep.subr.bf16.mxu0 %v1111
    %1231 = vmatpush2.bf16.msra.mxu0 %v1110
    %1232 = vmatprep.subr.bf16.mxu0 %v1107
    %1233 = vmatpush2.bf16.msra.mxu0 %v1106
    %1234 = vmatprep.mubr.bf16.mxu0 %v817
    %1235 = vmatmul.mubr.bf16.gmra.mxu0 %v715
    %v1236 = vpop.f32.mrf.mxu0
    %v1237 = vadd.f32 %v375, %v1236
    %v1238 = vpop.f32.mrf.mxu0
    %v1239 = vadd.f32 %v379, %v1238
    %v1240 = vpop.f32.mrf.mxu0
    %v1241 = vpop.f32.mrf.mxu0
    %1242 = vdwg.mxu0
    %1243 = vmatprep.subr.bf16.mxu0 %v1105
    %1244 = vmatpush1.bf16.msra.mxu0 %v1104
    %1245 = vmatprep.subr.bf16.mxu0 %v1101
    %1246 = vmatpush1.bf16.msra.mxu0 %v1100
    %1247 = vmatprep.subr.bf16.mxu0 %v1097
    %1248 = vmatpush1.bf16.msra.mxu0 %v1096
    %1249 = vmatprep.subr.bf16.mxu0 %v1093
    %1250 = vmatpush1.bf16.msra.mxu0 %v1092
    %1251 = vmatprep.subr.bf16.mxu0 %v1089
    %1252 = vmatpush1.bf16.msra.mxu0 %v1088
    %1253 = vmatprep.subr.bf16.mxu0 %v1085
    %1254 = vmatpush1.bf16.msra.mxu0 %v1084
    %1255 = vmatprep.subr.bf16.mxu0 %v1081
    %1256 = vmatpush1.bf16.msra.mxu0 %v1080
    %1257 = vmatprep.subr.bf16.mxu0 %v1077
    %1258 = vmatpush1.bf16.msra.mxu0 %v1076
    %1259 = vmatprep.subr.bf16.mxu0 %v1137
    %1260 = vmatpush2.bf16.msra.mxu0 %v1136
    %1261 = vmatprep.subr.bf16.mxu0 %v1133
    %1262 = vmatpush2.bf16.msra.mxu0 %v1132
    %1263 = vmatprep.subr.bf16.mxu0 %v1129
    %1264 = vmatpush2.bf16.msra.mxu0 %v1128
    %1265 = vmatprep.subr.bf16.mxu0 %v1125
    %1266 = vmatpush2.bf16.msra.mxu0 %v1124
    %1267 = vmatprep.subr.bf16.mxu0 %v1121
    %1268 = vmatpush2.bf16.msra.mxu0 %v1120
    %1269 = vmatprep.subr.bf16.mxu0 %v1117
    %1270 = vmatpush2.bf16.msra.mxu0 %v1116
    %1271 = vmatprep.subr.bf16.mxu0 %v1113
    %1272 = vmatpush2.bf16.msra.mxu0 %v1112
    %1273 = vmatprep.subr.bf16.mxu0 %v1109
    %1274 = vmatpush2.bf16.msra.mxu0 %v1108
    %1275 = vmatprep.mubr.bf16.mxu0 %v817
    %1276 = vmatmul.mubr.bf16.gmra.mxu0 %v715
    %v1277 = vpop.f32.mrf.mxu0
    %v1278 = vadd.f32 %v383, %v1277
    %v1279 = vpop.f32.mrf.mxu0
    %v1280 = vadd.f32 %v387, %v1279
    %v1281 = vpop.f32.mrf.mxu0
    %v1282 = vpop.f32.mrf.mxu0
    %1283 = vdwg.mxu0
    %v1284 = vtanh.pop %v1237
    %v1285 = vtanh.pop %v1239
    %v1286 = vtanh.pop %v1278
    %v1287 = vmul.f32 %v1284, 0.5
    %v1288 = vmul.f32 %v1285, 0.5
    %v1289 = vmul.f32 %v1286, 0.5
    %v1290 = vadd.f32 %v1287, 0.5
    %v1291 = vadd.f32 %v1288, 0.5
    %v1292 = vadd.f32 %v1289, 0.5
    %v1293 = vtanh.pop %v1280
    %v1294 = vmul.f32 %v1291, 0.0
    %v1295 = vmul.f32 %v1290, %v1293
    %v1296 = vadd.f32 %v1294, %v1295
    %v1297 = vtanh.pop %v1296
    %v1298 = vmul.f32 %v1292, %v1297
    %v1299 = vld [vmem:[#allocation2 + $0x40] sm:$0xff]
    %v1300 = vld [vmem:[#allocation2 + $0x48] sm:$0xff]
    %v1301 = vld [vmem:[#allocation2 + $0x50] sm:$0xff]
    %v1302 = vld [vmem:[#allocation2 + $0x58] sm:$0xff]
    %v1303 = vpack.c.bf16 %v816, %v816
    %1304 = vmatprep.subr.bf16.mxu0 %v575
    %1305 = vmatpush1.bf16.msra.mxu0 %v574
    %1306 = vmatprep.subr.bf16.mxu0 %v571
    %1307 = vmatpush1.bf16.msra.mxu0 %v570
    %1308 = vmatprep.subr.bf16.mxu0 %v567
    %1309 = vmatpush1.bf16.msra.mxu0 %v566
    %1310 = vmatprep.subr.bf16.mxu0 %v563
    %1311 = vmatpush1.bf16.msra.mxu0 %v562
    %1312 = vmatprep.subr.bf16.mxu0 %v559
    %1313 = vmatpush1.bf16.msra.mxu0 %v558
    %1314 = vmatprep.subr.bf16.mxu0 %v555
    %1315 = vmatpush1.bf16.msra.mxu0 %v554
    %1316 = vmatprep.subr.bf16.mxu0 %v551
    %1317 = vmatpush1.bf16.msra.mxu0 %v550
    %1318 = vmatprep.subr.bf16.mxu0 %v547
    %1319 = vmatpush1.bf16.msra.mxu0 %v546
    %1320 = vmatprep.subr.bf16.mxu0 0
    %1321 = vmatpush2.bf16.msra.mxu0 0
    %1322 = vmatprep.subr.bf16.mxu0 0
    %1323 = vmatpush2.bf16.msra.mxu0 0
    %1324 = vmatprep.subr.bf16.mxu0 0
    %1325 = vmatpush2.bf16.msra.mxu0 0
    %1326 = vmatprep.subr.bf16.mxu0 0
    %1327 = vmatpush2.bf16.msra.mxu0 0
    %1328 = vmatprep.subr.bf16.mxu0 0
    %1329 = vmatpush2.bf16.msra.mxu0 0
    %1330 = vmatprep.subr.bf16.mxu0 0
    %1331 = vmatpush2.bf16.msra.mxu0 0
    %1332 = vmatprep.subr.bf16.mxu0 0
    %1333 = vmatpush2.bf16.msra.mxu0 0
    %1334 = vmatprep.subr.bf16.mxu0 0
    %1335 = vmatpush2.bf16.msra.mxu0 0
    %1336 = vmatprep.mubr.bf16.mxu0 0
    %1337 = vmatmul.mubr.bf16.gmra.mxu0 %v1303
    %v1338 = vpop.f32.mrf.mxu0
    %v1339 = vadd.f32 0.0, %v1338
    %v1340 = vpop.f32.mrf.mxu0
    %v1341 = vadd.f32 0.0, %v1340
    %v1342 = vpop.f32.mrf.mxu0
    %v1343 = vpop.f32.mrf.mxu0
    %1344 = vdwg.mxu0
    %1345 = vmatprep.subr.bf16.mxu0 %v577
    %1346 = vmatpush1.bf16.msra.mxu0 %v576
    %1347 = vmatprep.subr.bf16.mxu0 %v573
    %1348 = vmatpush1.bf16.msra.mxu0 %v572
    %1349 = vmatprep.subr.bf16.mxu0 %v569
    %1350 = vmatpush1.bf16.msra.mxu0 %v568
    %1351 = vmatprep.subr.bf16.mxu0 %v565
    %1352 = vmatpush1.bf16.msra.mxu0 %v564
    %1353 = vmatprep.subr.bf16.mxu0 %v561
    %1354 = vmatpush1.bf16.msra.mxu0 %v560
    %1355 = vmatprep.subr.bf16.mxu0 %v557
    %1356 = vmatpush1.bf16.msra.mxu0 %v556
    %1357 = vmatprep.subr.bf16.mxu0 %v553
    %1358 = vmatpush1.bf16.msra.mxu0 %v552
    %1359 = vmatprep.subr.bf16.mxu0 %v549
    %1360 = vmatpush1.bf16.msra.mxu0 %v548
    %1361 = vmatprep.subr.bf16.mxu0 0
    %1362 = vmatpush2.bf16.msra.mxu0 0
    %1363 = vmatprep.subr.bf16.mxu0 0
    %1364 = vmatpush2.bf16.msra.mxu0 0
    %1365 = vmatprep.subr.bf16.mxu0 0
    %1366 = vmatpush2.bf16.msra.mxu0 0
    %1367 = vmatprep.subr.bf16.mxu0 0
    %1368 = vmatpush2.bf16.msra.mxu0 0
    %1369 = vmatprep.subr.bf16.mxu0 0
    %1370 = vmatpush2.bf16.msra.mxu0 0
    %1371 = vmatprep.subr.bf16.mxu0 0
    %1372 = vmatpush2.bf16.msra.mxu0 0
    %1373 = vmatprep.subr.bf16.mxu0 0
    %1374 = vmatpush2.bf16.msra.mxu0 0
    %1375 = vmatprep.subr.bf16.mxu0 0
    %1376 = vmatpush2.bf16.msra.mxu0 0
    %1377 = vmatprep.mubr.bf16.mxu0 0
    %1378 = vmatmul.mubr.bf16.gmra.mxu0 %v1303
    %v1379 = vpop.f32.mrf.mxu0
    %v1380 = vadd.f32 0.0, %v1379
    %v1381 = vpop.f32.mrf.mxu0
    %v1382 = vadd.f32 0.0, %v1381
    %v1383 = vpop.f32.mrf.mxu0
    %v1384 = vpop.f32.mrf.mxu0
    %1385 = vdwg.mxu0
    %v1386 = vadd.f32 %v1299, %v1339
    %v1387 = vadd.f32 %v1300, %v1341
    %v1388 = vadd.f32 %v1301, %v1380
    %v1389 = vadd.f32 %v1302, %v1382
    %v1390 = vtanh.pop %v1386
    %v1391 = vtanh.pop %v1387
    %v1392 = vtanh.pop %v1388
    %v1393 = vmul.f32 %v1390, 0.5
    %v1394 = vmul.f32 %v1391, 0.5
    %v1395 = vmul.f32 %v1392, 0.5
    %v1396 = vadd.f32 %v1393, 0.5
    %v1397 = vadd.f32 %v1394, 0.5
    %v1398 = vadd.f32 %v1395, 0.5
    %v1399 = vtanh.pop %v1389
    %v1400 = vmul.f32 %v1397, %v814
    %v1401 = vmul.f32 %v1396, %v1399
    %v1402 = vadd.f32 %v1400, %v1401
    %v1403 = vtanh.pop %v1402
    %v1404 = vmul.f32 %v1398, %v1403
    %v1405 = vpack.c.bf16 %v1298, %v1298
    %1406 = vmatprep.subr.bf16.mxu0 %v1103
    %1407 = vmatpush1.bf16.msra.mxu0 %v1102
    %1408 = vmatprep.subr.bf16.mxu0 %v1099
    %1409 = vmatpush1.bf16.msra.mxu0 %v1098
    %1410 = vmatprep.subr.bf16.mxu0 %v1095
    %1411 = vmatpush1.bf16.msra.mxu0 %v1094
    %1412 = vmatprep.subr.bf16.mxu0 %v1091
    %1413 = vmatpush1.bf16.msra.mxu0 %v1090
    %1414 = vmatprep.subr.bf16.mxu0 %v1087
    %1415 = vmatpush1.bf16.msra.mxu0 %v1086
    %1416 = vmatprep.subr.bf16.mxu0 %v1083
    %1417 = vmatpush1.bf16.msra.mxu0 %v1082
    %1418 = vmatprep.subr.bf16.mxu0 %v1079
    %1419 = vmatpush1.bf16.msra.mxu0 %v1078
    %1420 = vmatprep.subr.bf16.mxu0 %v1075
    %1421 = vmatpush1.bf16.msra.mxu0 %v1074
    %1422 = vmatprep.subr.bf16.mxu0 %v1135
    %1423 = vmatpush2.bf16.msra.mxu0 %v1134
    %1424 = vmatprep.subr.bf16.mxu0 %v1131
    %1425 = vmatpush2.bf16.msra.mxu0 %v1130
    %1426 = vmatprep.subr.bf16.mxu0 %v1127
    %1427 = vmatpush2.bf16.msra.mxu0 %v1126
    %1428 = vmatprep.subr.bf16.mxu0 %v1123
    %1429 = vmatpush2.bf16.msra.mxu0 %v1122
    %1430 = vmatprep.subr.bf16.mxu0 %v1119
    %1431 = vmatpush2.bf16.msra.mxu0 %v1118
    %1432 = vmatprep.subr.bf16.mxu0 %v1115
    %1433 = vmatpush2.bf16.msra.mxu0 %v1114
    %1434 = vmatprep.subr.bf16.mxu0 %v1111
    %1435 = vmatpush2.bf16.msra.mxu0 %v1110
    %1436 = vmatprep.subr.bf16.mxu0 %v1107
    %1437 = vmatpush2.bf16.msra.mxu0 %v1106
    %1438 = vmatprep.mubr.bf16.mxu0 %v1405
    %1439 = vmatmul.mubr.bf16.gmra.mxu0 %v1303
    %v1440 = vpop.f32.mrf.mxu0
    %v1441 = vadd.f32 %v375, %v1440
    %v1442 = vpop.f32.mrf.mxu0
    %v1443 = vadd.f32 %v379, %v1442
    %v1444 = vpop.f32.mrf.mxu0
    %v1445 = vpop.f32.mrf.mxu0
    %1446 = vdwg.mxu0
    %1447 = vmatprep.subr.bf16.mxu0 %v1105
    %1448 = vmatpush1.bf16.msra.mxu0 %v1104
    %1449 = vmatprep.subr.bf16.mxu0 %v1101
    %1450 = vmatpush1.bf16.msra.mxu0 %v1100
    %1451 = vmatprep.subr.bf16.mxu0 %v1097
    %1452 = vmatpush1.bf16.msra.mxu0 %v1096
    %1453 = vmatprep.subr.bf16.mxu0 %v1093
    %1454 = vmatpush1.bf16.msra.mxu0 %v1092
    %1455 = vmatprep.subr.bf16.mxu0 %v1089
    %1456 = vmatpush1.bf16.msra.mxu0 %v1088
    %1457 = vmatprep.subr.bf16.mxu0 %v1085
    %1458 = vmatpush1.bf16.msra.mxu0 %v1084
    %1459 = vmatprep.subr.bf16.mxu0 %v1081
    %1460 = vmatpush1.bf16.msra.mxu0 %v1080
    %1461 = vmatprep.subr.bf16.mxu0 %v1077
    %1462 = vmatpush1.bf16.msra.mxu0 %v1076
    %1463 = vmatprep.subr.bf16.mxu0 %v1137
    %1464 = vmatpush2.bf16.msra.mxu0 %v1136
    %1465 = vmatprep.subr.bf16.mxu0 %v1133
    %1466 = vmatpush2.bf16.msra.mxu0 %v1132
    %1467 = vmatprep.subr.bf16.mxu0 %v1129
    %1468 = vmatpush2.bf16.msra.mxu0 %v1128
    %1469 = vmatprep.subr.bf16.mxu0 %v1125
    %1470 = vmatpush2.bf16.msra.mxu0 %v1124
    %1471 = vmatprep.subr.bf16.mxu0 %v1121
    %1472 = vmatpush2.bf16.msra.mxu0 %v1120
    %1473 = vmatprep.subr.bf16.mxu0 %v1117
    %1474 = vmatpush2.bf16.msra.mxu0 %v1116
    %1475 = vmatprep.subr.bf16.mxu0 %v1113
    %1476 = vmatpush2.bf16.msra.mxu0 %v1112
    %1477 = vmatprep.subr.bf16.mxu0 %v1109
    %1478 = vmatpush2.bf16.msra.mxu0 %v1108
    %1479 = vmatprep.mubr.bf16.mxu0 %v1405
    %1480 = vmatmul.mubr.bf16.gmra.mxu0 %v1303
    %v1481 = vpop.f32.mrf.mxu0
    %v1482 = vadd.f32 %v383, %v1481
    %v1483 = vpop.f32.mrf.mxu0
    %v1484 = vadd.f32 %v387, %v1483
    %v1485 = vpop.f32.mrf.mxu0
    %v1486 = vpop.f32.mrf.mxu0
    %1487 = vdwg.mxu0
    %v1488 = vtanh.pop %v1441
    %v1489 = vtanh.pop %v1443
    %v1490 = vtanh.pop %v1482
    %v1491 = vmul.f32 %v1488, 0.5
    %v1492 = vmul.f32 %v1489, 0.5
    %v1493 = vmul.f32 %v1490, 0.5
    %v1494 = vadd.f32 %v1491, 0.5
    %v1495 = vadd.f32 %v1492, 0.5
    %v1496 = vadd.f32 %v1493, 0.5
    %v1497 = vtanh.pop %v1484
    %v1498 = vmul.f32 %v1495, %v1296
    %v1499 = vmul.f32 %v1494, %v1497
    %v1500 = vadd.f32 %v1498, %v1499
    %v1501 = vtanh.pop %v1500
    %v1502 = vmul.f32 %v1496, %v1501
    %v1503 = vld [vmem:[#allocation8] sm:$0xff]
    %v1504 = vld [vmem:[#allocation8 + $0x8] sm:$0xff]
    %v1505 = vld [vmem:[#allocation8 + $0x10] sm:$0xff]
    %v1506 = vld [vmem:[#allocation8 + $0x18] sm:$0xff]
    %v1507 = vld [vmem:[#allocation8 + $0x20] sm:$0xff]
    %v1508 = vld [vmem:[#allocation8 + $0x28] sm:$0xff]
    %v1509 = vld [vmem:[#allocation8 + $0x30] sm:$0xff]
    %v1510 = vld [vmem:[#allocation8 + $0x38] sm:$0xff]
    %v1511 = vld [vmem:[#allocation8 + $0x40] sm:$0xff]
    %v1512 = vld [vmem:[#allocation8 + $0x48] sm:$0xff]
    %v1513 = vld [vmem:[#allocation8 + $0x50] sm:$0xff]
    %v1514 = vld [vmem:[#allocation8 + $0x58] sm:$0xff]
    %v1515 = vld [vmem:[#allocation8 + $0x60] sm:$0xff]
    %v1516 = vld [vmem:[#allocation8 + $0x68] sm:$0xff]
    %v1517 = vld [vmem:[#allocation8 + $0x70] sm:$0xff]
    %v1518 = vld [vmem:[#allocation8 + $0x78] sm:$0xff]
    %v1519 = vld [vmem:[#allocation8 + $0x80] sm:$0xff]
    %v1520 = vld [vmem:[#allocation8 + $0x88] sm:$0xff]
    %v1521 = vld [vmem:[#allocation8 + $0x90] sm:$0xff]
    %v1522 = vld [vmem:[#allocation8 + $0x98] sm:$0xff]
    %v1523 = vld [vmem:[#allocation8 + $0xa0] sm:$0xff]
    %v1524 = vld [vmem:[#allocation8 + $0xa8] sm:$0xff]
    %v1525 = vld [vmem:[#allocation8 + $0xb0] sm:$0xff]
    %v1526 = vld [vmem:[#allocation8 + $0xb8] sm:$0xff]
    %v1527 = vld [vmem:[#allocation8 + $0xc0] sm:$0xff]
    %v1528 = vld [vmem:[#allocation8 + $0xc8] sm:$0xff]
    %v1529 = vld [vmem:[#allocation8 + $0xd0] sm:$0xff]
    %v1530 = vld [vmem:[#allocation8 + $0xd8] sm:$0xff]
    %v1531 = vld [vmem:[#allocation8 + $0xe0] sm:$0xff]
    %v1532 = vld [vmem:[#allocation8 + $0xe8] sm:$0xff]
    %v1533 = vld [vmem:[#allocation8 + $0xf0] sm:$0xff]
    %v1534 = vld [vmem:[#allocation8 + $0xf8] sm:$0xff]
    %v1535 = vld [vmem:[#allocation8 + $0x100] sm:$0xff]
    %v1536 = vld [vmem:[#allocation8 + $0x108] sm:$0xff]
    %v1537 = vld [vmem:[#allocation8 + $0x110] sm:$0xff]
    %v1538 = vld [vmem:[#allocation8 + $0x118] sm:$0xff]
    %v1539 = vld [vmem:[#allocation8 + $0x120] sm:$0xff]
    %v1540 = vld [vmem:[#allocation8 + $0x128] sm:$0xff]
    %v1541 = vld [vmem:[#allocation8 + $0x130] sm:$0xff]
    %v1542 = vld [vmem:[#allocation8 + $0x138] sm:$0xff]
    %v1543 = vld [vmem:[#allocation8 + $0x140] sm:$0xff]
    %v1544 = vld [vmem:[#allocation8 + $0x148] sm:$0xff]
    %v1545 = vld [vmem:[#allocation8 + $0x150] sm:$0xff]
    %v1546 = vld [vmem:[#allocation8 + $0x158] sm:$0xff]
    %v1547 = vld [vmem:[#allocation8 + $0x160] sm:$0xff]
    %v1548 = vld [vmem:[#allocation8 + $0x168] sm:$0xff]
    %v1549 = vld [vmem:[#allocation8 + $0x170] sm:$0xff]
    %v1550 = vld [vmem:[#allocation8 + $0x178] sm:$0xff]
    %v1551 = vld [vmem:[#allocation8 + $0x180] sm:$0xff]
    %v1552 = vld [vmem:[#allocation8 + $0x188] sm:$0xff]
    %v1553 = vld [vmem:[#allocation8 + $0x190] sm:$0xff]
    %v1554 = vld [vmem:[#allocation8 + $0x198] sm:$0xff]
    %v1555 = vld [vmem:[#allocation8 + $0x1a0] sm:$0xff]
    %v1556 = vld [vmem:[#allocation8 + $0x1a8] sm:$0xff]
    %v1557 = vld [vmem:[#allocation8 + $0x1b0] sm:$0xff]
    %v1558 = vld [vmem:[#allocation8 + $0x1b8] sm:$0xff]
    %v1559 = vld [vmem:[#allocation8 + $0x1c0] sm:$0xff]
    %v1560 = vld [vmem:[#allocation8 + $0x1c8] sm:$0xff]
    %v1561 = vld [vmem:[#allocation8 + $0x1d0] sm:$0xff]
    %v1562 = vld [vmem:[#allocation8 + $0x1d8] sm:$0xff]
    %v1563 = vld [vmem:[#allocation8 + $0x1e0] sm:$0xff]
    %v1564 = vld [vmem:[#allocation8 + $0x1e8] sm:$0xff]
    %v1565 = vld [vmem:[#allocation8 + $0x1f0] sm:$0xff]
    %v1566 = vld [vmem:[#allocation8 + $0x1f8] sm:$0xff]
    %v1631 = vunpack.c.l.b16 %v1503
    %v1632 = vunpack.c.h.b16 %v1503
    %v1633 = vunpack.c.l.b16 %v1504
    %v1634 = vunpack.c.h.b16 %v1504
    %v1635 = vunpack.c.l.b16 %v1505
    %v1636 = vunpack.c.h.b16 %v1505
    %v1637 = vunpack.c.l.b16 %v1506
    %v1638 = vunpack.c.h.b16 %v1506
    %v1639 = vunpack.c.l.b16 %v1507
    %v1640 = vunpack.c.h.b16 %v1507
    %v1641 = vunpack.c.l.b16 %v1508
    %v1642 = vunpack.c.h.b16 %v1508
    %v1643 = vunpack.c.l.b16 %v1509
    %v1644 = vunpack.c.h.b16 %v1509
    %v1645 = vunpack.c.l.b16 %v1510
    %v1646 = vunpack.c.h.b16 %v1510
    %v1647 = vunpack.c.l.b16 %v1511
    %v1648 = vunpack.c.h.b16 %v1511
    %v1649 = vunpack.c.l.b16 %v1512
    %v1650 = vunpack.c.h.b16 %v1512
    %v1651 = vunpack.c.l.b16 %v1513
    %v1652 = vunpack.c.h.b16 %v1513
    %v1653 = vunpack.c.l.b16 %v1514
    %v1654 = vunpack.c.h.b16 %v1514
    %v1655 = vunpack.c.l.b16 %v1515
    %v1656 = vunpack.c.h.b16 %v1515
    %v1657 = vunpack.c.l.b16 %v1516
    %v1658 = vunpack.c.h.b16 %v1516
    %v1659 = vunpack.c.l.b16 %v1517
    %v1660 = vunpack.c.h.b16 %v1517
    %v1661 = vunpack.c.l.b16 %v1518
    %v1662 = vunpack.c.h.b16 %v1518
    %v1663 = vunpack.c.l.b16 %v1519
    %v1664 = vunpack.c.h.b16 %v1519
    %v1665 = vunpack.c.l.b16 %v1520
    %v1666 = vunpack.c.h.b16 %v1520
    %v1667 = vunpack.c.l.b16 %v1521
    %v1668 = vunpack.c.h.b16 %v1521
    %v1669 = vunpack.c.l.b16 %v1522
    %v1670 = vunpack.c.h.b16 %v1522
    %v1671 = vunpack.c.l.b16 %v1523
    %v1672 = vunpack.c.h.b16 %v1523
    %v1673 = vunpack.c.l.b16 %v1524
    %v1674 = vunpack.c.h.b16 %v1524
    %v1675 = vunpack.c.l.b16 %v1525
    %v1676 = vunpack.c.h.b16 %v1525
    %v1677 = vunpack.c.l.b16 %v1526
    %v1678 = vunpack.c.h.b16 %v1526
    %v1679 = vunpack.c.l.b16 %v1527
    %v1680 = vunpack.c.h.b16 %v1527
    %v1681 = vunpack.c.l.b16 %v1528
    %v1682 = vunpack.c.h.b16 %v1528
    %v1683 = vunpack.c.l.b16 %v1529
    %v1684 = vunpack.c.h.b16 %v1529
    %v1685 = vunpack.c.l.b16 %v1530
    %v1686 = vunpack.c.h.b16 %v1530
    %v1687 = vunpack.c.l.b16 %v1531
    %v1688 = vunpack.c.h.b16 %v1531
    %v1689 = vunpack.c.l.b16 %v1532
    %v1690 = vunpack.c.h.b16 %v1532
    %v1691 = vunpack.c.l.b16 %v1533
    %v1692 = vunpack.c.h.b16 %v1533
    %v1693 = vunpack.c.l.b16 %v1534
    %v1694 = vunpack.c.h.b16 %v1534
    %v1695 = vunpack.c.l.b16 %v1535
    %v1696 = vunpack.c.h.b16 %v1535
    %v1697 = vunpack.c.l.b16 %v1536
    %v1698 = vunpack.c.h.b16 %v1536
    %v1699 = vunpack.c.l.b16 %v1537
    %v1700 = vunpack.c.h.b16 %v1537
    %v1701 = vunpack.c.l.b16 %v1538
    %v1702 = vunpack.c.h.b16 %v1538
    %v1703 = vunpack.c.l.b16 %v1539
    %v1704 = vunpack.c.h.b16 %v1539
    %v1705 = vunpack.c.l.b16 %v1540
    %v1706 = vunpack.c.h.b16 %v1540
    %v1707 = vunpack.c.l.b16 %v1541
    %v1708 = vunpack.c.h.b16 %v1541
    %v1709 = vunpack.c.l.b16 %v1542
    %v1710 = vunpack.c.h.b16 %v1542
    %v1711 = vunpack.c.l.b16 %v1543
    %v1712 = vunpack.c.h.b16 %v1543
    %v1713 = vunpack.c.l.b16 %v1544
    %v1714 = vunpack.c.h.b16 %v1544
    %v1715 = vunpack.c.l.b16 %v1545
    %v1716 = vunpack.c.h.b16 %v1545
    %v1717 = vunpack.c.l.b16 %v1546
    %v1718 = vunpack.c.h.b16 %v1546
    %v1719 = vunpack.c.l.b16 %v1547
    %v1720 = vunpack.c.h.b16 %v1547
    %v1721 = vunpack.c.l.b16 %v1548
    %v1722 = vunpack.c.h.b16 %v1548
    %v1723 = vunpack.c.l.b16 %v1549
    %v1724 = vunpack.c.h.b16 %v1549
    %v1725 = vunpack.c.l.b16 %v1550
    %v1726 = vunpack.c.h.b16 %v1550
    %v1727 = vunpack.c.l.b16 %v1551
    %v1728 = vunpack.c.h.b16 %v1551
    %v1729 = vunpack.c.l.b16 %v1552
    %v1730 = vunpack.c.h.b16 %v1552
    %v1731 = vunpack.c.l.b16 %v1553
    %v1732 = vunpack.c.h.b16 %v1553
    %v1733 = vunpack.c.l.b16 %v1554
    %v1734 = vunpack.c.h.b16 %v1554
    %v1735 = vunpack.c.l.b16 %v1555
    %v1736 = vunpack.c.h.b16 %v1555
    %v1737 = vunpack.c.l.b16 %v1556
    %v1738 = vunpack.c.h.b16 %v1556
    %v1739 = vunpack.c.l.b16 %v1557
    %v1740 = vunpack.c.h.b16 %v1557
    %v1741 = vunpack.c.l.b16 %v1558
    %v1742 = vunpack.c.h.b16 %v1558
    %v1743 = vunpack.c.l.b16 %v1559
    %v1744 = vunpack.c.h.b16 %v1559
    %v1745 = vunpack.c.l.b16 %v1560
    %v1746 = vunpack.c.h.b16 %v1560
    %v1747 = vunpack.c.l.b16 %v1561
    %v1748 = vunpack.c.h.b16 %v1561
    %v1749 = vunpack.c.l.b16 %v1562
    %v1750 = vunpack.c.h.b16 %v1562
    %v1751 = vunpack.c.l.b16 %v1563
    %v1752 = vunpack.c.h.b16 %v1563
    %v1753 = vunpack.c.l.b16 %v1564
    %v1754 = vunpack.c.h.b16 %v1564
    %v1755 = vunpack.c.l.b16 %v1565
    %v1756 = vunpack.c.h.b16 %v1565
    %v1757 = vunpack.c.l.b16 %v1566
    %v1758 = vunpack.c.h.b16 %v1566
    %v1759 = vpack.c.b16 %v1635, %v1631
    %v1760 = vpack.c.b16 %v1636, %v1632
    %v1761 = vpack.c.b16 %v1637, %v1633
    %v1762 = vpack.c.b16 %v1638, %v1634
    %v1763 = vpack.c.b16 %v1643, %v1639
    %v1764 = vpack.c.b16 %v1644, %v1640
    %v1765 = vpack.c.b16 %v1645, %v1641
    %v1766 = vpack.c.b16 %v1646, %v1642
    %v1767 = vpack.c.b16 %v1651, %v1647
    %v1768 = vpack.c.b16 %v1652, %v1648
    %v1769 = vpack.c.b16 %v1653, %v1649
    %v1770 = vpack.c.b16 %v1654, %v1650
    %v1771 = vpack.c.b16 %v1659, %v1655
    %v1772 = vpack.c.b16 %v1660, %v1656
    %v1773 = vpack.c.b16 %v1661, %v1657
    %v1774 = vpack.c.b16 %v1662, %v1658
    %v1775 = vpack.c.b16 %v1667, %v1663
    %v1776 = vpack.c.b16 %v1668, %v1664
    %v1777 = vpack.c.b16 %v1669, %v1665
    %v1778 = vpack.c.b16 %v1670, %v1666
    %v1779 = vpack.c.b16 %v1675, %v1671
    %v1780 = vpack.c.b16 %v1676, %v1672
    %v1781 = vpack.c.b16 %v1677, %v1673
    %v1782 = vpack.c.b16 %v1678, %v1674
    %v1783 = vpack.c.b16 %v1683, %v1679
    %v1784 = vpack.c.b16 %v1684, %v1680
    %v1785 = vpack.c.b16 %v1685, %v1681
    %v1786 = vpack.c.b16 %v1686, %v1682
    %v1787 = vpack.c.b16 %v1691, %v1687
    %v1788 = vpack.c.b16 %v1692, %v1688
    %v1789 = vpack.c.b16 %v1693, %v1689
    %v1790 = vpack.c.b16 %v1694, %v1690
    %v1791 = vpack.c.b16 %v1699, %v1695
    %v1792 = vpack.c.b16 %v1700, %v1696
    %v1793 = vpack.c.b16 %v1701, %v1697
    %v1794 = vpack.c.b16 %v1702, %v1698
    %v1795 = vpack.c.b16 %v1707, %v1703
    %v1796 = vpack.c.b16 %v1708, %v1704
    %v1797 = vpack.c.b16 %v1709, %v1705
    %v1798 = vpack.c.b16 %v1710, %v1706
    %v1799 = vpack.c.b16 %v1715, %v1711
    %v1800 = vpack.c.b16 %v1716, %v1712
    %v1801 = vpack.c.b16 %v1717, %v1713
    %v1802 = vpack.c.b16 %v1718, %v1714
    %v1803 = vpack.c.b16 %v1723, %v1719
    %v1804 = vpack.c.b16 %v1724, %v1720
    %v1805 = vpack.c.b16 %v1725, %v1721
    %v1806 = vpack.c.b16 %v1726, %v1722
    %v1807 = vpack.c.b16 %v1731, %v1727
    %v1808 = vpack.c.b16 %v1732, %v1728
    %v1809 = vpack.c.b16 %v1733, %v1729
    %v1810 = vpack.c.b16 %v1734, %v1730
    %v1811 = vpack.c.b16 %v1739, %v1735
    %v1812 = vpack.c.b16 %v1740, %v1736
    %v1813 = vpack.c.b16 %v1741, %v1737
    %v1814 = vpack.c.b16 %v1742, %v1738
    %v1815 = vpack.c.b16 %v1747, %v1743
    %v1816 = vpack.c.b16 %v1748, %v1744
    %v1817 = vpack.c.b16 %v1749, %v1745
    %v1818 = vpack.c.b16 %v1750, %v1746
    %v1819 = vpack.c.b16 %v1755, %v1751
    %v1820 = vpack.c.b16 %v1756, %v1752
    %v1821 = vpack.c.b16 %v1757, %v1753
    %v1822 = vpack.c.b16 %v1758, %v1754
    %1887 = vmatprep.subr.bf16.mxu0 %v1788
    %1888 = vmatpush1.bf16.msra.mxu0 %v1787
    %1889 = vmatprep.subr.bf16.mxu0 %v1784
    %1890 = vmatpush1.bf16.msra.mxu0 %v1783
    %1891 = vmatprep.subr.bf16.mxu0 %v1780
    %1892 = vmatpush1.bf16.msra.mxu0 %v1779
    %1893 = vmatprep.subr.bf16.mxu0 %v1776
    %1894 = vmatpush1.bf16.msra.mxu0 %v1775
    %1895 = vmatprep.subr.bf16.mxu0 %v1772
    %1896 = vmatpush1.bf16.msra.mxu0 %v1771
    %1897 = vmatprep.subr.bf16.mxu0 %v1768
    %1898 = vmatpush1.bf16.msra.mxu0 %v1767
    %1899 = vmatprep.subr.bf16.mxu0 %v1764
    %1900 = vmatpush1.bf16.msra.mxu0 %v1763
    %1901 = vmatprep.subr.bf16.mxu0 %v1760
    %1902 = vmatpush1.bf16.msra.mxu0 %v1759
    %1903 = vmatprep.subr.bf16.mxu0 %v1820
    %1904 = vmatpush2.bf16.msra.mxu0 %v1819
    %1905 = vmatprep.subr.bf16.mxu0 %v1816
    %1906 = vmatpush2.bf16.msra.mxu0 %v1815
    %1907 = vmatprep.subr.bf16.mxu0 %v1812
    %1908 = vmatpush2.bf16.msra.mxu0 %v1811
    %1909 = vmatprep.subr.bf16.mxu0 %v1808
    %1910 = vmatpush2.bf16.msra.mxu0 %v1807
    %1911 = vmatprep.subr.bf16.mxu0 %v1804
    %1912 = vmatpush2.bf16.msra.mxu0 %v1803
    %1913 = vmatprep.subr.bf16.mxu0 %v1800
    %1914 = vmatpush2.bf16.msra.mxu0 %v1799
    %1915 = vmatprep.subr.bf16.mxu0 %v1796
    %1916 = vmatpush2.bf16.msra.mxu0 %v1795
    %1917 = vmatprep.subr.bf16.mxu0 %v1792
    %1918 = vmatpush2.bf16.msra.mxu0 %v1791
    %1919 = vmatprep.mubr.bf16.mxu0 %v817
    %1920 = vmatmul.mubr.bf16.gmra.mxu0 %v1405
    %v1921 = vpop.f32.mrf.mxu0
    %v1922 = vadd.f32 %v397, %v1921
    %v1923 = vpop.f32.mrf.mxu0
    %v1924 = vadd.f32 %v401, %v1923
    %v1925 = vpop.f32.mrf.mxu0
    %v1926 = vpop.f32.mrf.mxu0
    %1927 = vdwg.mxu0
    %1928 = vmatprep.subr.bf16.mxu0 %v1790
    %1929 = vmatpush1.bf16.msra.mxu0 %v1789
    %1930 = vmatprep.subr.bf16.mxu0 %v1786
    %1931 = vmatpush1.bf16.msra.mxu0 %v1785
    %1932 = vmatprep.subr.bf16.mxu0 %v1782
    %1933 = vmatpush1.bf16.msra.mxu0 %v1781
    %1934 = vmatprep.subr.bf16.mxu0 %v1778
    %1935 = vmatpush1.bf16.msra.mxu0 %v1777
    %1936 = vmatprep.subr.bf16.mxu0 %v1774
    %1937 = vmatpush1.bf16.msra.mxu0 %v1773
    %1938 = vmatprep.subr.bf16.mxu0 %v1770
    %1939 = vmatpush1.bf16.msra.mxu0 %v1769
    %1940 = vmatprep.subr.bf16.mxu0 %v1766
    %1941 = vmatpush1.bf16.msra.mxu0 %v1765
    %1942 = vmatprep.subr.bf16.mxu0 %v1762
    %1943 = vmatpush1.bf16.msra.mxu0 %v1761
    %1944 = vmatprep.subr.bf16.mxu0 %v1822
    %1945 = vmatpush2.bf16.msra.mxu0 %v1821
    %1946 = vmatprep.subr.bf16.mxu0 %v1818
    %1947 = vmatpush2.bf16.msra.mxu0 %v1817
    %1948 = vmatprep.subr.bf16.mxu0 %v1814
    %1949 = vmatpush2.bf16.msra.mxu0 %v1813
    %1950 = vmatprep.subr.bf16.mxu0 %v1810
    %1951 = vmatpush2.bf16.msra.mxu0 %v1809
    %1952 = vmatprep.subr.bf16.mxu0 %v1806
    %1953 = vmatpush2.bf16.msra.mxu0 %v1805
    %1954 = vmatprep.subr.bf16.mxu0 %v1802
    %1955 = vmatpush2.bf16.msra.mxu0 %v1801
    %1956 = vmatprep.subr.bf16.mxu0 %v1798
    %1957 = vmatpush2.bf16.msra.mxu0 %v1797
    %1958 = vmatprep.subr.bf16.mxu0 %v1794
    %1959 = vmatpush2.bf16.msra.mxu0 %v1793
    %1960 = vmatprep.mubr.bf16.mxu0 %v817
    %1961 = vmatmul.mubr.bf16.gmra.mxu0 %v1405
    %v1962 = vpop.f32.mrf.mxu0
    %v1963 = vadd.f32 %v405, %v1962
    %v1964 = vpop.f32.mrf.mxu0
    %v1965 = vadd.f32 %v409, %v1964
    %v1966 = vpop.f32.mrf.mxu0
    %v1967 = vpop.f32.mrf.mxu0
    %1968 = vdwg.mxu0
    %v1969 = vtanh.pop %v1922
    %v1970 = vtanh.pop %v1924
    %v1971 = vtanh.pop %v1963
    %v1972 = vmul.f32 %v1969, 0.5
    %v1973 = vmul.f32 %v1970, 0.5
    %v1974 = vmul.f32 %v1971, 0.5
    %v1975 = vadd.f32 %v1972, 0.5
    %v1976 = vadd.f32 %v1973, 0.5
    %v1977 = vadd.f32 %v1974, 0.5
    %v1978 = vtanh.pop %v1965
    %v1979 = vmul.f32 %v1976, 0.0
    %v1980 = vmul.f32 %v1975, %v1978
    %v1981 = vadd.f32 %v1979, %v1980
    %v1982 = vtanh.pop %v1981
    %v1983 = vmul.f32 %v1977, %v1982
    %v1984 = vld [vmem:[#allocation2 + $0x60] sm:$0xff]
    %v1985 = vld [vmem:[#allocation2 + $0x68] sm:$0xff]
    %v1986 = vld [vmem:[#allocation2 + $0x70] sm:$0xff]
    %v1987 = vld [vmem:[#allocation2 + $0x78] sm:$0xff]
    %v1988 = vpack.c.bf16 %v1404, %v1404
    %1989 = vmatprep.subr.bf16.mxu0 %v575
    %1990 = vmatpush1.bf16.msra.mxu0 %v574
    %1991 = vmatprep.subr.bf16.mxu0 %v571
    %1992 = vmatpush1.bf16.msra.mxu0 %v570
    %1993 = vmatprep.subr.bf16.mxu0 %v567
    %1994 = vmatpush1.bf16.msra.mxu0 %v566
    %1995 = vmatprep.subr.bf16.mxu0 %v563
    %1996 = vmatpush1.bf16.msra.mxu0 %v562
    %1997 = vmatprep.subr.bf16.mxu0 %v559
    %1998 = vmatpush1.bf16.msra.mxu0 %v558
    %1999 = vmatprep.subr.bf16.mxu0 %v555
    %2000 = vmatpush1.bf16.msra.mxu0 %v554
    %2001 = vmatprep.subr.bf16.mxu0 %v551
    %2002 = vmatpush1.bf16.msra.mxu0 %v550
    %2003 = vmatprep.subr.bf16.mxu0 %v547
    %2004 = vmatpush1.bf16.msra.mxu0 %v546
    %2005 = vmatprep.subr.bf16.mxu0 0
    %2006 = vmatpush2.bf16.msra.mxu0 0
    %2007 = vmatprep.subr.bf16.mxu0 0
    %2008 = vmatpush2.bf16.msra.mxu0 0
    %2009 = vmatprep.subr.bf16.mxu0 0
    %2010 = vmatpush2.bf16.msra.mxu0 0
    %2011 = vmatprep.subr.bf16.mxu0 0
    %2012 = vmatpush2.bf16.msra.mxu0 0
    %2013 = vmatprep.subr.bf16.mxu0 0
    %2014 = vmatpush2.bf16.msra.mxu0 0
    %2015 = vmatprep.subr.bf16.mxu0 0
    %2016 = vmatpush2.bf16.msra.mxu0 0
    %2017 = vmatprep.subr.bf16.mxu0 0
    %2018 = vmatpush2.bf16.msra.mxu0 0
    %2019 = vmatprep.subr.bf16.mxu0 0
    %2020 = vmatpush2.bf16.msra.mxu0 0
    %2021 = vmatprep.mubr.bf16.mxu0 0
    %2022 = vmatmul.mubr.bf16.gmra.mxu0 %v1988
    %v2023 = vpop.f32.mrf.mxu0
    %v2024 = vadd.f32 0.0, %v2023
    %v2025 = vpop.f32.mrf.mxu0
    %v2026 = vadd.f32 0.0, %v2025
    %v2027 = vpop.f32.mrf.mxu0
    %v2028 = vpop.f32.mrf.mxu0
    %2029 = vdwg.mxu0
    %2030 = vmatprep.subr.bf16.mxu0 %v577
    %2031 = vmatpush1.bf16.msra.mxu0 %v576
    %2032 = vmatprep.subr.bf16.mxu0 %v573
    %2033 = vmatpush1.bf16.msra.mxu0 %v572
    %2034 = vmatprep.subr.bf16.mxu0 %v569
    %2035 = vmatpush1.bf16.msra.mxu0 %v568
    %2036 = vmatprep.subr.bf16.mxu0 %v565
    %2037 = vmatpush1.bf16.msra.mxu0 %v564
    %2038 = vmatprep.subr.bf16.mxu0 %v561
    %2039 = vmatpush1.bf16.msra.mxu0 %v560
    %2040 = vmatprep.subr.bf16.mxu0 %v557
    %2041 = vmatpush1.bf16.msra.mxu0 %v556
    %2042 = vmatprep.subr.bf16.mxu0 %v553
    %2043 = vmatpush1.bf16.msra.mxu0 %v552
    %2044 = vmatprep.subr.bf16.mxu0 %v549
    %2045 = vmatpush1.bf16.msra.mxu0 %v548
    %2046 = vmatprep.subr.bf16.mxu0 0
    %2047 = vmatpush2.bf16.msra.mxu0 0
    %2048 = vmatprep.subr.bf16.mxu0 0
    %2049 = vmatpush2.bf16.msra.mxu0 0
    %2050 = vmatprep.subr.bf16.mxu0 0
    %2051 = vmatpush2.bf16.msra.mxu0 0
    %2052 = vmatprep.subr.bf16.mxu0 0
    %2053 = vmatpush2.bf16.msra.mxu0 0
    %2054 = vmatprep.subr.bf16.mxu0 0
    %2055 = vmatpush2.bf16.msra.mxu0 0
    %2056 = vmatprep.subr.bf16.mxu0 0
    %2057 = vmatpush2.bf16.msra.mxu0 0
    %2058 = vmatprep.subr.bf16.mxu0 0
    %2059 = vmatpush2.bf16.msra.mxu0 0
    %2060 = vmatprep.subr.bf16.mxu0 0
    %2061 = vmatpush2.bf16.msra.mxu0 0
    %2062 = vmatprep.mubr.bf16.mxu0 0
    %2063 = vmatmul.mubr.bf16.gmra.mxu0 %v1988
    %v2064 = vpop.f32.mrf.mxu0
    %v2065 = vadd.f32 0.0, %v2064
    %v2066 = vpop.f32.mrf.mxu0
    %v2067 = vadd.f32 0.0, %v2066
    %v2068 = vpop.f32.mrf.mxu0
    %v2069 = vpop.f32.mrf.mxu0
    %2070 = vdwg.mxu0
    %v2071 = vadd.f32 %v1984, %v2024
    %v2072 = vadd.f32 %v1985, %v2026
    %v2073 = vadd.f32 %v1986, %v2065
    %v2074 = vadd.f32 %v1987, %v2067
    %v2075 = vtanh.pop %v2071
    %v2076 = vtanh.pop %v2072
    %v2077 = vtanh.pop %v2073
    %v2078 = vmul.f32 %v2075, 0.5
    %v2079 = vmul.f32 %v2076, 0.5
    %v2080 = vmul.f32 %v2077, 0.5
    %v2081 = vadd.f32 %v2078, 0.5
    %v2082 = vadd.f32 %v2079, 0.5
    %v2083 = vadd.f32 %v2080, 0.5
    %v2084 = vtanh.pop %v2074
    %v2085 = vmul.f32 %v2082, %v1402
    %v2086 = vmul.f32 %v2081, %v2084
    %v2087 = vadd.f32 %v2085, %v2086
    %v2088 = vtanh.pop %v2087
    %v2089 = vmul.f32 %v2083, %v2088
    %v2090 = vpack.c.bf16 %v1502, %v1502
    %2091 = vmatprep.subr.bf16.mxu0 %v1103
    %2092 = vmatpush1.bf16.msra.mxu0 %v1102
    %2093 = vmatprep.subr.bf16.mxu0 %v1099
    %2094 = vmatpush1.bf16.msra.mxu0 %v1098
    %2095 = vmatprep.subr.bf16.mxu0 %v1095
    %2096 = vmatpush1.bf16.msra.mxu0 %v1094
    %2097 = vmatprep.subr.bf16.mxu0 %v1091
    %2098 = vmatpush1.bf16.msra.mxu0 %v1090
    %2099 = vmatprep.subr.bf16.mxu0 %v1087
    %2100 = vmatpush1.bf16.msra.mxu0 %v1086
    %2101 = vmatprep.subr.bf16.mxu0 %v1083
    %2102 = vmatpush1.bf16.msra.mxu0 %v1082
    %2103 = vmatprep.subr.bf16.mxu0 %v1079
    %2104 = vmatpush1.bf16.msra.mxu0 %v1078
    %2105 = vmatprep.subr.bf16.mxu0 %v1075
    %2106 = vmatpush1.bf16.msra.mxu0 %v1074
    %2107 = vmatprep.subr.bf16.mxu0 %v1135
    %2108 = vmatpush2.bf16.msra.mxu0 %v1134
    %2109 = vmatprep.subr.bf16.mxu0 %v1131
    %2110 = vmatpush2.bf16.msra.mxu0 %v1130
    %2111 = vmatprep.subr.bf16.mxu0 %v1127
    %2112 = vmatpush2.bf16.msra.mxu0 %v1126
    %2113 = vmatprep.subr.bf16.mxu0 %v1123
    %2114 = vmatpush2.bf16.msra.mxu0 %v1122
    %2115 = vmatprep.subr.bf16.mxu0 %v1119
    %2116 = vmatpush2.bf16.msra.mxu0 %v1118
    %2117 = vmatprep.subr.bf16.mxu0 %v1115
    %2118 = vmatpush2.bf16.msra.mxu0 %v1114
    %2119 = vmatprep.subr.bf16.mxu0 %v1111
    %2120 = vmatpush2.bf16.msra.mxu0 %v1110
    %2121 = vmatprep.subr.bf16.mxu0 %v1107
    %2122 = vmatpush2.bf16.msra.mxu0 %v1106
    %2123 = vmatprep.mubr.bf16.mxu0 %v2090
    %2124 = vmatmul.mubr.bf16.gmra.mxu0 %v1988
    %v2125 = vpop.f32.mrf.mxu0
    %v2126 = vadd.f32 %v375, %v2125
    %v2127 = vpop.f32.mrf.mxu0
    %v2128 = vadd.f32 %v379, %v2127
    %v2129 = vpop.f32.mrf.mxu0
    %v2130 = vpop.f32.mrf.mxu0
    %2131 = vdwg.mxu0
    %2132 = vmatprep.subr.bf16.mxu0 %v1105
    %2133 = vmatpush1.bf16.msra.mxu0 %v1104
    %2134 = vmatprep.subr.bf16.mxu0 %v1101
    %2135 = vmatpush1.bf16.msra.mxu0 %v1100
    %2136 = vmatprep.subr.bf16.mxu0 %v1097
    %2137 = vmatpush1.bf16.msra.mxu0 %v1096
    %2138 = vmatprep.subr.bf16.mxu0 %v1093
    %2139 = vmatpush1.bf16.msra.mxu0 %v1092
    %2140 = vmatprep.subr.bf16.mxu0 %v1089
    %2141 = vmatpush1.bf16.msra.mxu0 %v1088
    %2142 = vmatprep.subr.bf16.mxu0 %v1085
    %2143 = vmatpush1.bf16.msra.mxu0 %v1084
    %2144 = vmatprep.subr.bf16.mxu0 %v1081
    %2145 = vmatpush1.bf16.msra.mxu0 %v1080
    %2146 = vmatprep.subr.bf16.mxu0 %v1077
    %2147 = vmatpush1.bf16.msra.mxu0 %v1076
    %2148 = vmatprep.subr.bf16.mxu0 %v1137
    %2149 = vmatpush2.bf16.msra.mxu0 %v1136
    %2150 = vmatprep.subr.bf16.mxu0 %v1133
    %2151 = vmatpush2.bf16.msra.mxu0 %v1132
    %2152 = vmatprep.subr.bf16.mxu0 %v1129
    %2153 = vmatpush2.bf16.msra.mxu0 %v1128
    %2154 = vmatprep.subr.bf16.mxu0 %v1125
    %2155 = vmatpush2.bf16.msra.mxu0 %v1124
    %2156 = vmatprep.subr.bf16.mxu0 %v1121
    %2157 = vmatpush2.bf16.msra.mxu0 %v1120
    %2158 = vmatprep.subr.bf16.mxu0 %v1117
    %2159 = vmatpush2.bf16.msra.mxu0 %v1116
    %2160 = vmatprep.subr.bf16.mxu0 %v1113
    %2161 = vmatpush2.bf16.msra.mxu0 %v1112
    %2162 = vmatprep.subr.bf16.mxu0 %v1109
    %2163 = vmatpush2.bf16.msra.mxu0 %v1108
    %2164 = vmatprep.mubr.bf16.mxu0 %v2090
    %2165 = vmatmul.mubr.bf16.gmra.mxu0 %v1988
    %v2166 = vpop.f32.mrf.mxu0
    %v2167 = vadd.f32 %v383, %v2166
    %v2168 = vpop.f32.mrf.mxu0
    %v2169 = vadd.f32 %v387, %v2168
    %v2170 = vpop.f32.mrf.mxu0
    %v2171 = vpop.f32.mrf.mxu0
    %2172 = vdwg.mxu0
    %v2173 = vtanh.pop %v2126
    %v2174 = vtanh.pop %v2128
    %v2175 = vtanh.pop %v2167
    %v2176 = vmul.f32 %v2173, 0.5
    %v2177 = vmul.f32 %v2174, 0.5
    %v2178 = vmul.f32 %v2175, 0.5
    %v2179 = vadd.f32 %v2176, 0.5
    %v2180 = vadd.f32 %v2177, 0.5
    %v2181 = vadd.f32 %v2178, 0.5
    %v2182 = vtanh.pop %v2169
    %v2183 = vmul.f32 %v2180, %v1500
    %v2184 = vmul.f32 %v2179, %v2182
    %v2185 = vadd.f32 %v2183, %v2184
    %v2186 = vtanh.pop %v2185
    %v2187 = vmul.f32 %v2181, %v2186
    %v2188 = vpack.c.bf16 %v1983, %v1983
    %2189 = vmatprep.subr.bf16.mxu0 %v1788
    %2190 = vmatpush1.bf16.msra.mxu0 %v1787
    %2191 = vmatprep.subr.bf16.mxu0 %v1784
    %2192 = vmatpush1.bf16.msra.mxu0 %v1783
    %2193 = vmatprep.subr.bf16.mxu0 %v1780
    %2194 = vmatpush1.bf16.msra.mxu0 %v1779
    %2195 = vmatprep.subr.bf16.mxu0 %v1776
    %2196 = vmatpush1.bf16.msra.mxu0 %v1775
    %2197 = vmatprep.subr.bf16.mxu0 %v1772
    %2198 = vmatpush1.bf16.msra.mxu0 %v1771
    %2199 = vmatprep.subr.bf16.mxu0 %v1768
    %2200 = vmatpush1.bf16.msra.mxu0 %v1767
    %2201 = vmatprep.subr.bf16.mxu0 %v1764
    %2202 = vmatpush1.bf16.msra.mxu0 %v1763
    %2203 = vmatprep.subr.bf16.mxu0 %v1760
    %2204 = vmatpush1.bf16.msra.mxu0 %v1759
    %2205 = vmatprep.subr.bf16.mxu0 %v1820
    %2206 = vmatpush2.bf16.msra.mxu0 %v1819
    %2207 = vmatprep.subr.bf16.mxu0 %v1816
    %2208 = vmatpush2.bf16.msra.mxu0 %v1815
    %2209 = vmatprep.subr.bf16.mxu0 %v1812
    %2210 = vmatpush2.bf16.msra.mxu0 %v1811
    %2211 = vmatprep.subr.bf16.mxu0 %v1808
    %2212 = vmatpush2.bf16.msra.mxu0 %v1807
    %2213 = vmatprep.subr.bf16.mxu0 %v1804
    %2214 = vmatpush2.bf16.msra.mxu0 %v1803
    %2215 = vmatprep.subr.bf16.mxu0 %v1800
    %2216 = vmatpush2.bf16.msra.mxu0 %v1799
    %2217 = vmatprep.subr.bf16.mxu0 %v1796
    %2218 = vmatpush2.bf16.msra.mxu0 %v1795
    %2219 = vmatprep.subr.bf16.mxu0 %v1792
    %2220 = vmatpush2.bf16.msra.mxu0 %v1791
    %2221 = vmatprep.mubr.bf16.mxu0 %v2188
    %2222 = vmatmul.mubr.bf16.gmra.mxu0 %v2090
    %v2223 = vpop.f32.mrf.mxu0
    %v2224 = vadd.f32 %v397, %v2223
    %v2225 = vpop.f32.mrf.mxu0
    %v2226 = vadd.f32 %v401, %v2225
    %v2227 = vpop.f32.mrf.mxu0
    %v2228 = vpop.f32.mrf.mxu0
    %2229 = vdwg.mxu0
    %2230 = vmatprep.subr.bf16.mxu0 %v1790
    %2231 = vmatpush1.bf16.msra.mxu0 %v1789
    %2232 = vmatprep.subr.bf16.mxu0 %v1786
    %2233 = vmatpush1.bf16.msra.mxu0 %v1785
    %2234 = vmatprep.subr.bf16.mxu0 %v1782
    %2235 = vmatpush1.bf16.msra.mxu0 %v1781
    %2236 = vmatprep.subr.bf16.mxu0 %v1778
    %2237 = vmatpush1.bf16.msra.mxu0 %v1777
    %2238 = vmatprep.subr.bf16.mxu0 %v1774
    %2239 = vmatpush1.bf16.msra.mxu0 %v1773
    %2240 = vmatprep.subr.bf16.mxu0 %v1770
    %2241 = vmatpush1.bf16.msra.mxu0 %v1769
    %2242 = vmatprep.subr.bf16.mxu0 %v1766
    %2243 = vmatpush1.bf16.msra.mxu0 %v1765
    %2244 = vmatprep.subr.bf16.mxu0 %v1762
    %2245 = vmatpush1.bf16.msra.mxu0 %v1761
    %2246 = vmatprep.subr.bf16.mxu0 %v1822
    %2247 = vmatpush2.bf16.msra.mxu0 %v1821
    %2248 = vmatprep.subr.bf16.mxu0 %v1818
    %2249 = vmatpush2.bf16.msra.mxu0 %v1817
    %2250 = vmatprep.subr.bf16.mxu0 %v1814
    %2251 = vmatpush2.bf16.msra.mxu0 %v1813
    %2252 = vmatprep.subr.bf16.mxu0 %v1810
    %2253 = vmatpush2.bf16.msra.mxu0 %v1809
    %2254 = vmatprep.subr.bf16.mxu0 %v1806
    %2255 = vmatpush2.bf16.msra.mxu0 %v1805
    %2256 = vmatprep.subr.bf16.mxu0 %v1802
    %2257 = vmatpush2.bf16.msra.mxu0 %v1801
    %2258 = vmatprep.subr.bf16.mxu0 %v1798
    %2259 = vmatpush2.bf16.msra.mxu0 %v1797
    %2260 = vmatprep.subr.bf16.mxu0 %v1794
    %2261 = vmatpush2.bf16.msra.mxu0 %v1793
    %2262 = vmatprep.mubr.bf16.mxu0 %v2188
    %2263 = vmatmul.mubr.bf16.gmra.mxu0 %v2090
    %v2264 = vpop.f32.mrf.mxu0
    %v2265 = vadd.f32 %v405, %v2264
    %v2266 = vpop.f32.mrf.mxu0
    %v2267 = vadd.f32 %v409, %v2266
    %v2268 = vpop.f32.mrf.mxu0
    %v2269 = vpop.f32.mrf.mxu0
    %2270 = vdwg.mxu0
    %v2271 = vtanh.pop %v2224
    %v2272 = vtanh.pop %v2226
    %v2273 = vtanh.pop %v2265
    %v2274 = vmul.f32 %v2271, 0.5
    %v2275 = vmul.f32 %v2272, 0.5
    %v2276 = vmul.f32 %v2273, 0.5
    %v2277 = vadd.f32 %v2274, 0.5
    %v2278 = vadd.f32 %v2275, 0.5
    %v2279 = vadd.f32 %v2276, 0.5
    %v2280 = vtanh.pop %v2267
    %v2281 = vmul.f32 %v2278, %v1981
    %v2282 = vmul.f32 %v2277, %v2280
    %v2283 = vadd.f32 %v2281, %v2282
    %v2284 = vtanh.pop %v2283
    %v2285 = vmul.f32 %v2279, %v2284
    %v2286 = vld [vmem:[#allocation2 + $0x80] sm:$0xff]
    %v2287 = vld [vmem:[#allocation2 + $0x88] sm:$0xff]
    %v2288 = vld [vmem:[#allocation2 + $0x90] sm:$0xff]
    %v2289 = vld [vmem:[#allocation2 + $0x98] sm:$0xff]
    %v2290 = vpack.c.bf16 %v2089, %v2089
    %2291 = vmatprep.subr.bf16.mxu0 %v575
    %2292 = vmatpush1.bf16.msra.mxu0 %v574
    %2293 = vmatprep.subr.bf16.mxu0 %v571
    %2294 = vmatpush1.bf16.msra.mxu0 %v570
    %2295 = vmatprep.subr.bf16.mxu0 %v567
    %2296 = vmatpush1.bf16.msra.mxu0 %v566
    %2297 = vmatprep.subr.bf16.mxu0 %v563
    %2298 = vmatpush1.bf16.msra.mxu0 %v562
    %2299 = vmatprep.subr.bf16.mxu0 %v559
    %2300 = vmatpush1.bf16.msra.mxu0 %v558
    %2301 = vmatprep.subr.bf16.mxu0 %v555
    %2302 = vmatpush1.bf16.msra.mxu0 %v554
    %2303 = vmatprep.subr.bf16.mxu0 %v551
    %2304 = vmatpush1.bf16.msra.mxu0 %v550
    %2305 = vmatprep.subr.bf16.mxu0 %v547
    %2306 = vmatpush1.bf16.msra.mxu0 %v546
    %2307 = vmatprep.subr.bf16.mxu0 0
    %2308 = vmatpush2.bf16.msra.mxu0 0
    %2309 = vmatprep.subr.bf16.mxu0 0
    %2310 = vmatpush2.bf16.msra.mxu0 0
    %2311 = vmatprep.subr.bf16.mxu0 0
    %2312 = vmatpush2.bf16.msra.mxu0 0
    %2313 = vmatprep.subr.bf16.mxu0 0
    %2314 = vmatpush2.bf16.msra.mxu0 0
    %2315 = vmatprep.subr.bf16.mxu0 0
    %2316 = vmatpush2.bf16.msra.mxu0 0
    %2317 = vmatprep.subr.bf16.mxu0 0
    %2318 = vmatpush2.bf16.msra.mxu0 0
    %2319 = vmatprep.subr.bf16.mxu0 0
    %2320 = vmatpush2.bf16.msra.mxu0 0
    %2321 = vmatprep.subr.bf16.mxu0 0
    %2322 = vmatpush2.bf16.msra.mxu0 0
    %2323 = vmatprep.mubr.bf16.mxu0 0
    %2324 = vmatmul.mubr.bf16.gmra.mxu0 %v2290
    %v2325 = vpop.f32.mrf.mxu0
    %v2326 = vadd.f32 0.0, %v2325
    %v2327 = vpop.f32.mrf.mxu0
    %v2328 = vadd.f32 0.0, %v2327
    %v2329 = vpop.f32.mrf.mxu0
    %v2330 = vpop.f32.mrf.mxu0
    %2331 = vdwg.mxu0
    %2332 = vmatprep.subr.bf16.mxu0 %v577
    %2333 = vmatpush1.bf16.msra.mxu0 %v576
    %2334 = vmatprep.subr.bf16.mxu0 %v573
    %2335 = vmatpush1.bf16.msra.mxu0 %v572
    %2336 = vmatprep.subr.bf16.mxu0 %v569
    %2337 = vmatpush1.bf16.msra.mxu0 %v568
    %2338 = vmatprep.subr.bf16.mxu0 %v565
    %2339 = vmatpush1.bf16.msra.mxu0 %v564
    %2340 = vmatprep.subr.bf16.mxu0 %v561
    %2341 = vmatpush1.bf16.msra.mxu0 %v560
    %2342 = vmatprep.subr.bf16.mxu0 %v557
    %2343 = vmatpush1.bf16.msra.mxu0 %v556
    %2344 = vmatprep.subr.bf16.mxu0 %v553
    %2345 = vmatpush1.bf16.msra.mxu0 %v552
    %2346 = vmatprep.subr.bf16.mxu0 %v549
    %2347 = vmatpush1.bf16.msra.mxu0 %v548
    %2348 = vmatprep.subr.bf16.mxu0 0
    %2349 = vmatpush2.bf16.msra.mxu0 0
    %2350 = vmatprep.subr.bf16.mxu0 0
    %2351 = vmatpush2.bf16.msra.mxu0 0
    %2352 = vmatprep.subr.bf16.mxu0 0
    %2353 = vmatpush2.bf16.msra.mxu0 0
    %2354 = vmatprep.subr.bf16.mxu0 0
    %2355 = vmatpush2.bf16.msra.mxu0 0
    %2356 = vmatprep.subr.bf16.mxu0 0
    %2357 = vmatpush2.bf16.msra.mxu0 0
    %2358 = vmatprep.subr.bf16.mxu0 0
    %2359 = vmatpush2.bf16.msra.mxu0 0
    %2360 = vmatprep.subr.bf16.mxu0 0
    %2361 = vmatpush2.bf16.msra.mxu0 0
    %2362 = vmatprep.subr.bf16.mxu0 0
    %2363 = vmatpush2.bf16.msra.mxu0 0
    %2364 = vmatprep.mubr.bf16.mxu0 0
    %2365 = vmatmul.mubr.bf16.gmra.mxu0 %v2290
    %v2366 = vpop.f32.mrf.mxu0
    %v2367 = vadd.f32 0.0, %v2366
    %v2368 = vpop.f32.mrf.mxu0
    %v2369 = vadd.f32 0.0, %v2368
    %v2370 = vpop.f32.mrf.mxu0
    %v2371 = vpop.f32.mrf.mxu0
    %2372 = vdwg.mxu0
    %v2373 = vadd.f32 %v2286, %v2326
    %v2374 = vadd.f32 %v2287, %v2328
    %v2375 = vadd.f32 %v2288, %v2367
    %v2376 = vadd.f32 %v2289, %v2369
    %v2377 = vtanh.pop %v2373
    %v2378 = vtanh.pop %v2374
    %v2379 = vtanh.pop %v2375
    %v2380 = vmul.f32 %v2377, 0.5
    %v2381 = vmul.f32 %v2378, 0.5
    %v2382 = vmul.f32 %v2379, 0.5
    %v2383 = vadd.f32 %v2380, 0.5
    %v2384 = vadd.f32 %v2381, 0.5
    %v2385 = vadd.f32 %v2382, 0.5
    %v2386 = vtanh.pop %v2376
    %v2387 = vmul.f32 %v2384, %v2087
    %v2388 = vmul.f32 %v2383, %v2386
    %v2389 = vadd.f32 %v2387, %v2388
    %v2390 = vtanh.pop %v2389
    %v2391 = vmul.f32 %v2385, %v2390
    %v2392 = vpack.c.bf16 %v2187, %v2187
    %2393 = vmatprep.subr.bf16.mxu0 %v1103
    %2394 = vmatpush1.bf16.msra.mxu0 %v1102
    %2395 = vmatprep.subr.bf16.mxu0 %v1099
    %2396 = vmatpush1.bf16.msra.mxu0 %v1098
    %2397 = vmatprep.subr.bf16.mxu0 %v1095
    %2398 = vmatpush1.bf16.msra.mxu0 %v1094
    %2399 = vmatprep.subr.bf16.mxu0 %v1091
    %2400 = vmatpush1.bf16.msra.mxu0 %v1090
    %2401 = vmatprep.subr.bf16.mxu0 %v1087
    %2402 = vmatpush1.bf16.msra.mxu0 %v1086
    %2403 = vmatprep.subr.bf16.mxu0 %v1083
    %2404 = vmatpush1.bf16.msra.mxu0 %v1082
    %2405 = vmatprep.subr.bf16.mxu0 %v1079
    %2406 = vmatpush1.bf16.msra.mxu0 %v1078
    %2407 = vmatprep.subr.bf16.mxu0 %v1075
    %2408 = vmatpush1.bf16.msra.mxu0 %v1074
    %2409 = vmatprep.subr.bf16.mxu0 %v1135
    %2410 = vmatpush2.bf16.msra.mxu0 %v1134
    %2411 = vmatprep.subr.bf16.mxu0 %v1131
    %2412 = vmatpush2.bf16.msra.mxu0 %v1130
    %2413 = vmatprep.subr.bf16.mxu0 %v1127
    %2414 = vmatpush2.bf16.msra.mxu0 %v1126
    %2415 = vmatprep.subr.bf16.mxu0 %v1123
    %2416 = vmatpush2.bf16.msra.mxu0 %v1122
    %2417 = vmatprep.subr.bf16.mxu0 %v1119
    %2418 = vmatpush2.bf16.msra.mxu0 %v1118
    %2419 = vmatprep.subr.bf16.mxu0 %v1115
    %2420 = vmatpush2.bf16.msra.mxu0 %v1114
    %2421 = vmatprep.subr.bf16.mxu0 %v1111
    %2422 = vmatpush2.bf16.msra.mxu0 %v1110
    %2423 = vmatprep.subr.bf16.mxu0 %v1107
    %2424 = vmatpush2.bf16.msra.mxu0 %v1106
    %2425 = vmatprep.mubr.bf16.mxu0 %v2392
    %2426 = vmatmul.mubr.bf16.gmra.mxu0 %v2290
    %v2427 = vpop.f32.mrf.mxu0
    %v2428 = vadd.f32 %v375, %v2427
    %v2429 = vpop.f32.mrf.mxu0
    %v2430 = vadd.f32 %v379, %v2429
    %v2431 = vpop.f32.mrf.mxu0
    %v2432 = vpop.f32.mrf.mxu0
    %2433 = vdwg.mxu0
    %2434 = vmatprep.subr.bf16.mxu0 %v1105
    %2435 = vmatpush1.bf16.msra.mxu0 %v1104
    %2436 = vmatprep.subr.bf16.mxu0 %v1101
    %2437 = vmatpush1.bf16.msra.mxu0 %v1100
    %2438 = vmatprep.subr.bf16.mxu0 %v1097
    %2439 = vmatpush1.bf16.msra.mxu0 %v1096
    %2440 = vmatprep.subr.bf16.mxu0 %v1093
    %2441 = vmatpush1.bf16.msra.mxu0 %v1092
    %2442 = vmatprep.subr.bf16.mxu0 %v1089
    %2443 = vmatpush1.bf16.msra.mxu0 %v1088
    %2444 = vmatprep.subr.bf16.mxu0 %v1085
    %2445 = vmatpush1.bf16.msra.mxu0 %v1084
    %2446 = vmatprep.subr.bf16.mxu0 %v1081
    %2447 = vmatpush1.bf16.msra.mxu0 %v1080
    %2448 = vmatprep.subr.bf16.mxu0 %v1077
    %2449 = vmatpush1.bf16.msra.mxu0 %v1076
    %2450 = vmatprep.subr.bf16.mxu0 %v1137
    %2451 = vmatpush2.bf16.msra.mxu0 %v1136
    %2452 = vmatprep.subr.bf16.mxu0 %v1133
    %2453 = vmatpush2.bf16.msra.mxu0 %v1132
    %2454 = vmatprep.subr.bf16.mxu0 %v1129
    %2455 = vmatpush2.bf16.msra.mxu0 %v1128
    %2456 = vmatprep.subr.bf16.mxu0 %v1125
    %2457 = vmatpush2.bf16.msra.mxu0 %v1124
    %2458 = vmatprep.subr.bf16.mxu0 %v1121
    %2459 = vmatpush2.bf16.msra.mxu0 %v1120
    %2460 = vmatprep.subr.bf16.mxu0 %v1117
    %2461 = vmatpush2.bf16.msra.mxu0 %v1116
    %2462 = vmatprep.subr.bf16.mxu0 %v1113
    %2463 = vmatpush2.bf16.msra.mxu0 %v1112
    %2464 = vmatprep.subr.bf16.mxu0 %v1109
    %2465 = vmatpush2.bf16.msra.mxu0 %v1108
    %2466 = vmatprep.mubr.bf16.mxu0 %v2392
    %2467 = vmatmul.mubr.bf16.gmra.mxu0 %v2290
    %v2468 = vpop.f32.mrf.mxu0
    %v2469 = vadd.f32 %v383, %v2468
    %v2470 = vpop.f32.mrf.mxu0
    %v2471 = vadd.f32 %v387, %v2470
    %v2472 = vpop.f32.mrf.mxu0
    %v2473 = vpop.f32.mrf.mxu0
    %2474 = vdwg.mxu0
    %v2475 = vtanh.pop %v2428
    %v2476 = vtanh.pop %v2430
    %v2477 = vtanh.pop %v2469
    %v2478 = vmul.f32 %v2475, 0.5
    %v2479 = vmul.f32 %v2476, 0.5
    %v2480 = vmul.f32 %v2477, 0.5
    %v2481 = vadd.f32 %v2478, 0.5
    %v2482 = vadd.f32 %v2479, 0.5
    %v2483 = vadd.f32 %v2480, 0.5
    %v2484 = vtanh.pop %v2471
    %v2485 = vmul.f32 %v2482, %v2185
    %v2486 = vmul.f32 %v2481, %v2484
    %v2487 = vadd.f32 %v2485, %v2486
    %v2488 = vtanh.pop %v2487
    %v2489 = vmul.f32 %v2483, %v2488
    %v2490 = vpack.c.bf16 %v2285, %v2285
    %2491 = vmatprep.subr.bf16.mxu0 %v1788
    %2492 = vmatpush1.bf16.msra.mxu0 %v1787
    %2493 = vmatprep.subr.bf16.mxu0 %v1784
    %2494 = vmatpush1.bf16.msra.mxu0 %v1783
    %2495 = vmatprep.subr.bf16.mxu0 %v1780
    %2496 = vmatpush1.bf16.msra.mxu0 %v1779
    %2497 = vmatprep.subr.bf16.mxu0 %v1776
    %2498 = vmatpush1.bf16.msra.mxu0 %v1775
    %2499 = vmatprep.subr.bf16.mxu0 %v1772
    %2500 = vmatpush1.bf16.msra.mxu0 %v1771
    %2501 = vmatprep.subr.bf16.mxu0 %v1768
    %2502 = vmatpush1.bf16.msra.mxu0 %v1767
    %2503 = vmatprep.subr.bf16.mxu0 %v1764
    %2504 = vmatpush1.bf16.msra.mxu0 %v1763
    %2505 = vmatprep.subr.bf16.mxu0 %v1760
    %2506 = vmatpush1.bf16.msra.mxu0 %v1759
    %2507 = vmatprep.subr.bf16.mxu0 %v1820
    %2508 = vmatpush2.bf16.msra.mxu0 %v1819
    %2509 = vmatprep.subr.bf16.mxu0 %v1816
    %2510 = vmatpush2.bf16.msra.mxu0 %v1815
    %2511 = vmatprep.subr.bf16.mxu0 %v1812
    %2512 = vmatpush2.bf16.msra.mxu0 %v1811
    %2513 = vmatprep.subr.bf16.mxu0 %v1808
    %2514 = vmatpush2.bf16.msra.mxu0 %v1807
    %2515 = vmatprep.subr.bf16.mxu0 %v1804
    %2516 = vmatpush2.bf16.msra.mxu0 %v1803
    %2517 = vmatprep.subr.bf16.mxu0 %v1800
    %2518 = vmatpush2.bf16.msra.mxu0 %v1799
    %2519 = vmatprep.subr.bf16.mxu0 %v1796
    %2520 = vmatpush2.bf16.msra.mxu0 %v1795
    %2521 = vmatprep.subr.bf16.mxu0 %v1792
    %2522 = vmatpush2.bf16.msra.mxu0 %v1791
    %2523 = vmatprep.mubr.bf16.mxu0 %v2490
    %2524 = vmatmul.mubr.bf16.gmra.mxu0 %v2392
    %v2525 = vpop.f32.mrf.mxu0
    %v2526 = vadd.f32 %v397, %v2525
    %v2527 = vpop.f32.mrf.mxu0
    %v2528 = vadd.f32 %v401, %v2527
    %v2529 = vpop.f32.mrf.mxu0
    %v2530 = vpop.f32.mrf.mxu0
    %2531 = vdwg.mxu0
    %2532 = vmatprep.subr.bf16.mxu0 %v1790
    %2533 = vmatpush1.bf16.msra.mxu0 %v1789
    %2534 = vmatprep.subr.bf16.mxu0 %v1786
    %2535 = vmatpush1.bf16.msra.mxu0 %v1785
    %2536 = vmatprep.subr.bf16.mxu0 %v1782
    %2537 = vmatpush1.bf16.msra.mxu0 %v1781
    %2538 = vmatprep.subr.bf16.mxu0 %v1778
    %2539 = vmatpush1.bf16.msra.mxu0 %v1777
    %2540 = vmatprep.subr.bf16.mxu0 %v1774
    %2541 = vmatpush1.bf16.msra.mxu0 %v1773
    %2542 = vmatprep.subr.bf16.mxu0 %v1770
    %2543 = vmatpush1.bf16.msra.mxu0 %v1769
    %2544 = vmatprep.subr.bf16.mxu0 %v1766
    %2545 = vmatpush1.bf16.msra.mxu0 %v1765
    %2546 = vmatprep.subr.bf16.mxu0 %v1762
    %2547 = vmatpush1.bf16.msra.mxu0 %v1761
    %2548 = vmatprep.subr.bf16.mxu0 %v1822
    %2549 = vmatpush2.bf16.msra.mxu0 %v1821
    %2550 = vmatprep.subr.bf16.mxu0 %v1818
    %2551 = vmatpush2.bf16.msra.mxu0 %v1817
    %2552 = vmatprep.subr.bf16.mxu0 %v1814
    %2553 = vmatpush2.bf16.msra.mxu0 %v1813
    %2554 = vmatprep.subr.bf16.mxu0 %v1810
    %2555 = vmatpush2.bf16.msra.mxu0 %v1809
    %2556 = vmatprep.subr.bf16.mxu0 %v1806
    %2557 = vmatpush2.bf16.msra.mxu0 %v1805
    %2558 = vmatprep.subr.bf16.mxu0 %v1802
    %2559 = vmatpush2.bf16.msra.mxu0 %v1801
    %2560 = vmatprep.subr.bf16.mxu0 %v1798
    %2561 = vmatpush2.bf16.msra.mxu0 %v1797
    %2562 = vmatprep.subr.bf16.mxu0 %v1794
    %2563 = vmatpush2.bf16.msra.mxu0 %v1793
    %2564 = vmatprep.mubr.bf16.mxu0 %v2490
    %2565 = vmatmul.mubr.bf16.gmra.mxu0 %v2392
    %v2566 = vpop.f32.mrf.mxu0
    %v2567 = vadd.f32 %v405, %v2566
    %v2568 = vpop.f32.mrf.mxu0
    %v2569 = vadd.f32 %v409, %v2568
    %v2570 = vpop.f32.mrf.mxu0
    %v2571 = vpop.f32.mrf.mxu0
    %2572 = vdwg.mxu0
    %v2573 = vtanh.pop %v2526
    %v2574 = vtanh.pop %v2528
    %v2575 = vtanh.pop %v2567
    %v2576 = vmul.f32 %v2573, 0.5
    %v2577 = vmul.f32 %v2574, 0.5
    %v2578 = vmul.f32 %v2575, 0.5
    %v2579 = vadd.f32 %v2576, 0.5
    %v2580 = vadd.f32 %v2577, 0.5
    %v2581 = vadd.f32 %v2578, 0.5
    %v2582 = vtanh.pop %v2569
    %v2583 = vmul.f32 %v2580, %v2283
    %v2584 = vmul.f32 %v2579, %v2582
    %v2585 = vadd.f32 %v2583, %v2584
    %v2586 = vtanh.pop %v2585
    %v2587 = vmul.f32 %v2581, %v2586
    %v2588 = vld [vmem:[#allocation2 + $0xa0] sm:$0xff]
    %v2589 = vld [vmem:[#allocation2 + $0xa8] sm:$0xff]
    %v2590 = vld [vmem:[#allocation2 + $0xb0] sm:$0xff]
    %v2591 = vld [vmem:[#allocation2 + $0xb8] sm:$0xff]
    %v2592 = vpack.c.bf16 %v2391, %v2391
    %2593 = vmatprep.subr.bf16.mxu0 %v575
    %2594 = vmatpush1.bf16.msra.mxu0 %v574
    %2595 = vmatprep.subr.bf16.mxu0 %v571
    %2596 = vmatpush1.bf16.msra.mxu0 %v570
    %2597 = vmatprep.subr.bf16.mxu0 %v567
    %2598 = vmatpush1.bf16.msra.mxu0 %v566
    %2599 = vmatprep.subr.bf16.mxu0 %v563
    %2600 = vmatpush1.bf16.msra.mxu0 %v562
    %2601 = vmatprep.subr.bf16.mxu0 %v559
    %2602 = vmatpush1.bf16.msra.mxu0 %v558
    %2603 = vmatprep.subr.bf16.mxu0 %v555
    %2604 = vmatpush1.bf16.msra.mxu0 %v554
    %2605 = vmatprep.subr.bf16.mxu0 %v551
    %2606 = vmatpush1.bf16.msra.mxu0 %v550
    %2607 = vmatprep.subr.bf16.mxu0 %v547
    %2608 = vmatpush1.bf16.msra.mxu0 %v546
    %2609 = vmatprep.subr.bf16.mxu0 0
    %2610 = vmatpush2.bf16.msra.mxu0 0
    %2611 = vmatprep.subr.bf16.mxu0 0
    %2612 = vmatpush2.bf16.msra.mxu0 0
    %2613 = vmatprep.subr.bf16.mxu0 0
    %2614 = vmatpush2.bf16.msra.mxu0 0
    %2615 = vmatprep.subr.bf16.mxu0 0
    %2616 = vmatpush2.bf16.msra.mxu0 0
    %2617 = vmatprep.subr.bf16.mxu0 0
    %2618 = vmatpush2.bf16.msra.mxu0 0
    %2619 = vmatprep.subr.bf16.mxu0 0
    %2620 = vmatpush2.bf16.msra.mxu0 0
    %2621 = vmatprep.subr.bf16.mxu0 0
    %2622 = vmatpush2.bf16.msra.mxu0 0
    %2623 = vmatprep.subr.bf16.mxu0 0
    %2624 = vmatpush2.bf16.msra.mxu0 0
    %2625 = vmatprep.mubr.bf16.mxu0 0
    %2626 = vmatmul.mubr.bf16.gmra.mxu0 %v2592
    %v2627 = vpop.f32.mrf.mxu0
    %v2628 = vadd.f32 0.0, %v2627
    %v2629 = vpop.f32.mrf.mxu0
    %v2630 = vadd.f32 0.0, %v2629
    %v2631 = vpop.f32.mrf.mxu0
    %v2632 = vpop.f32.mrf.mxu0
    %2633 = vdwg.mxu0
    %2634 = vmatprep.subr.bf16.mxu0 %v577
    %2635 = vmatpush1.bf16.msra.mxu0 %v576
    %2636 = vmatprep.subr.bf16.mxu0 %v573
    %2637 = vmatpush1.bf16.msra.mxu0 %v572
    %2638 = vmatprep.subr.bf16.mxu0 %v569
    %2639 = vmatpush1.bf16.msra.mxu0 %v568
    %2640 = vmatprep.subr.bf16.mxu0 %v565
    %2641 = vmatpush1.bf16.msra.mxu0 %v564
    %2642 = vmatprep.subr.bf16.mxu0 %v561
    %2643 = vmatpush1.bf16.msra.mxu0 %v560
    %2644 = vmatprep.subr.bf16.mxu0 %v557
    %2645 = vmatpush1.bf16.msra.mxu0 %v556
    %2646 = vmatprep.subr.bf16.mxu0 %v553
    %2647 = vmatpush1.bf16.msra.mxu0 %v552
    %2648 = vmatprep.subr.bf16.mxu0 %v549
    %2649 = vmatpush1.bf16.msra.mxu0 %v548
    %2650 = vmatprep.subr.bf16.mxu0 0
    %2651 = vmatpush2.bf16.msra.mxu0 0
    %2652 = vmatprep.subr.bf16.mxu0 0
    %2653 = vmatpush2.bf16.msra.mxu0 0
    %2654 = vmatprep.subr.bf16.mxu0 0
    %2655 = vmatpush2.bf16.msra.mxu0 0
    %2656 = vmatprep.subr.bf16.mxu0 0
    %2657 = vmatpush2.bf16.msra.mxu0 0
    %2658 = vmatprep.subr.bf16.mxu0 0
    %2659 = vmatpush2.bf16.msra.mxu0 0
    %2660 = vmatprep.subr.bf16.mxu0 0
    %2661 = vmatpush2.bf16.msra.mxu0 0
    %2662 = vmatprep.subr.bf16.mxu0 0
    %2663 = vmatpush2.bf16.msra.mxu0 0
    %2664 = vmatprep.subr.bf16.mxu0 0
    %2665 = vmatpush2.bf16.msra.mxu0 0
    %2666 = vmatprep.mubr.bf16.mxu0 0
    %2667 = vmatmul.mubr.bf16.gmra.mxu0 %v2592
    %v2668 = vpop.f32.mrf.mxu0
    %v2669 = vadd.f32 0.0, %v2668
    %v2670 = vpop.f32.mrf.mxu0
    %v2671 = vadd.f32 0.0, %v2670
    %v2672 = vpop.f32.mrf.mxu0
    %v2673 = vpop.f32.mrf.mxu0
    %2674 = vdwg.mxu0
    %v2675 = vadd.f32 %v2588, %v2628
    %v2676 = vadd.f32 %v2589, %v2630
    %v2677 = vadd.f32 %v2590, %v2669
    %v2678 = vadd.f32 %v2591, %v2671
    %v2679 = vtanh.pop %v2675
    %v2680 = vtanh.pop %v2676
    %v2681 = vtanh.pop %v2677
    %v2682 = vmul.f32 %v2679, 0.5
    %v2683 = vmul.f32 %v2680, 0.5
    %v2684 = vmul.f32 %v2681, 0.5
    %v2685 = vadd.f32 %v2682, 0.5
    %v2686 = vadd.f32 %v2683, 0.5
    %v2687 = vadd.f32 %v2684, 0.5
    %v2688 = vtanh.pop %v2678
    %v2689 = vmul.f32 %v2686, %v2389
    %v2690 = vmul.f32 %v2685, %v2688
    %v2691 = vadd.f32 %v2689, %v2690
    %v2692 = vtanh.pop %v2691
    %v2693 = vmul.f32 %v2687, %v2692
    %v2694 = vpack.c.bf16 %v2489, %v2489
    %2695 = vmatprep.subr.bf16.mxu0 %v1103
    %2696 = vmatpush1.bf16.msra.mxu0 %v1102
    %2697 = vmatprep.subr.bf16.mxu0 %v1099
    %2698 = vmatpush1.bf16.msra.mxu0 %v1098
    %2699 = vmatprep.subr.bf16.mxu0 %v1095
    %2700 = vmatpush1.bf16.msra.mxu0 %v1094
    %2701 = vmatprep.subr.bf16.mxu0 %v1091
    %2702 = vmatpush1.bf16.msra.mxu0 %v1090
    %2703 = vmatprep.subr.bf16.mxu0 %v1087
    %2704 = vmatpush1.bf16.msra.mxu0 %v1086
    %2705 = vmatprep.subr.bf16.mxu0 %v1083
    %2706 = vmatpush1.bf16.msra.mxu0 %v1082
    %2707 = vmatprep.subr.bf16.mxu0 %v1079
    %2708 = vmatpush1.bf16.msra.mxu0 %v1078
    %2709 = vmatprep.subr.bf16.mxu0 %v1075
    %2710 = vmatpush1.bf16.msra.mxu0 %v1074
    %2711 = vmatprep.subr.bf16.mxu0 %v1135
    %2712 = vmatpush2.bf16.msra.mxu0 %v1134
    %2713 = vmatprep.subr.bf16.mxu0 %v1131
    %2714 = vmatpush2.bf16.msra.mxu0 %v1130
    %2715 = vmatprep.subr.bf16.mxu0 %v1127
    %2716 = vmatpush2.bf16.msra.mxu0 %v1126
    %2717 = vmatprep.subr.bf16.mxu0 %v1123
    %2718 = vmatpush2.bf16.msra.mxu0 %v1122
    %2719 = vmatprep.subr.bf16.mxu0 %v1119
    %2720 = vmatpush2.bf16.msra.mxu0 %v1118
    %2721 = vmatprep.subr.bf16.mxu0 %v1115
    %2722 = vmatpush2.bf16.msra.mxu0 %v1114
    %2723 = vmatprep.subr.bf16.mxu0 %v1111
    %2724 = vmatpush2.bf16.msra.mxu0 %v1110
    %2725 = vmatprep.subr.bf16.mxu0 %v1107
    %2726 = vmatpush2.bf16.msra.mxu0 %v1106
    %2727 = vmatprep.mubr.bf16.mxu0 %v2694
    %2728 = vmatmul.mubr.bf16.gmra.mxu0 %v2592
    %v2729 = vpop.f32.mrf.mxu0
    %v2730 = vadd.f32 %v375, %v2729
    %v2731 = vpop.f32.mrf.mxu0
    %v2732 = vadd.f32 %v379, %v2731
    %v2733 = vpop.f32.mrf.mxu0
    %v2734 = vpop.f32.mrf.mxu0
    %2735 = vdwg.mxu0
    %2736 = vmatprep.subr.bf16.mxu0 %v1105
    %2737 = vmatpush1.bf16.msra.mxu0 %v1104
    %2738 = vmatprep.subr.bf16.mxu0 %v1101
    %2739 = vmatpush1.bf16.msra.mxu0 %v1100
    %2740 = vmatprep.subr.bf16.mxu0 %v1097
    %2741 = vmatpush1.bf16.msra.mxu0 %v1096
    %2742 = vmatprep.subr.bf16.mxu0 %v1093
    %2743 = vmatpush1.bf16.msra.mxu0 %v1092
    %2744 = vmatprep.subr.bf16.mxu0 %v1089
    %2745 = vmatpush1.bf16.msra.mxu0 %v1088
    %2746 = vmatprep.subr.bf16.mxu0 %v1085
    %2747 = vmatpush1.bf16.msra.mxu0 %v1084
    %2748 = vmatprep.subr.bf16.mxu0 %v1081
    %2749 = vmatpush1.bf16.msra.mxu0 %v1080
    %2750 = vmatprep.subr.bf16.mxu0 %v1077
    %2751 = vmatpush1.bf16.msra.mxu0 %v1076
    %2752 = vmatprep.subr.bf16.mxu0 %v1137
    %2753 = vmatpush2.bf16.msra.mxu0 %v1136
    %2754 = vmatprep.subr.bf16.mxu0 %v1133
    %2755 = vmatpush2.bf16.msra.mxu0 %v1132
    %2756 = vmatprep.subr.bf16.mxu0 %v1129
    %2757 = vmatpush2.bf16.msra.mxu0 %v1128
    %2758 = vmatprep.subr.bf16.mxu0 %v1125
    %2759 = vmatpush2.bf16.msra.mxu0 %v1124
    %2760 = vmatprep.subr.bf16.mxu0 %v1121
    %2761 = vmatpush2.bf16.msra.mxu0 %v1120
    %2762 = vmatprep.subr.bf16.mxu0 %v1117
    %2763 = vmatpush2.bf16.msra.mxu0 %v1116
    %2764 = vmatprep.subr.bf16.mxu0 %v1113
    %2765 = vmatpush2.bf16.msra.mxu0 %v1112
    %2766 = vmatprep.subr.bf16.mxu0 %v1109
    %2767 = vmatpush2.bf16.msra.mxu0 %v1108
    %2768 = vmatprep.mubr.bf16.mxu0 %v2694
    %2769 = vmatmul.mubr.bf16.gmra.mxu0 %v2592
    %v2770 = vpop.f32.mrf.mxu0
    %v2771 = vadd.f32 %v383, %v2770
    %v2772 = vpop.f32.mrf.mxu0
    %v2773 = vadd.f32 %v387, %v2772
    %v2774 = vpop.f32.mrf.mxu0
    %v2775 = vpop.f32.mrf.mxu0
    %2776 = vdwg.mxu0
    %v2777 = vtanh.pop %v2730
    %v2778 = vtanh.pop %v2732
    %v2779 = vtanh.pop %v2771
    %v2780 = vmul.f32 %v2777, 0.5
    %v2781 = vmul.f32 %v2778, 0.5
    %v2782 = vmul.f32 %v2779, 0.5
    %v2783 = vadd.f32 %v2780, 0.5
    %v2784 = vadd.f32 %v2781, 0.5
    %v2785 = vadd.f32 %v2782, 0.5
    %v2786 = vtanh.pop %v2773
    %v2787 = vmul.f32 %v2784, %v2487
    %v2788 = vmul.f32 %v2783, %v2786
    %v2789 = vadd.f32 %v2787, %v2788
    %v2790 = vtanh.pop %v2789
    %v2791 = vmul.f32 %v2785, %v2790
    %v2792 = vpack.c.bf16 %v2587, %v2587
    %2793 = vmatprep.subr.bf16.mxu0 %v1788
    %2794 = vmatpush1.bf16.msra.mxu0 %v1787
    %2795 = vmatprep.subr.bf16.mxu0 %v1784
    %2796 = vmatpush1.bf16.msra.mxu0 %v1783
    %2797 = vmatprep.subr.bf16.mxu0 %v1780
    %2798 = vmatpush1.bf16.msra.mxu0 %v1779
    %2799 = vmatprep.subr.bf16.mxu0 %v1776
    %2800 = vmatpush1.bf16.msra.mxu0 %v1775
    %2801 = vmatprep.subr.bf16.mxu0 %v1772
    %2802 = vmatpush1.bf16.msra.mxu0 %v1771
    %2803 = vmatprep.subr.bf16.mxu0 %v1768
    %2804 = vmatpush1.bf16.msra.mxu0 %v1767
    %2805 = vmatprep.subr.bf16.mxu0 %v1764
    %2806 = vmatpush1.bf16.msra.mxu0 %v1763
    %2807 = vmatprep.subr.bf16.mxu0 %v1760
    %2808 = vmatpush1.bf16.msra.mxu0 %v1759
    %2809 = vmatprep.subr.bf16.mxu0 %v1820
    %2810 = vmatpush2.bf16.msra.mxu0 %v1819
    %2811 = vmatprep.subr.bf16.mxu0 %v1816
    %2812 = vmatpush2.bf16.msra.mxu0 %v1815
    %2813 = vmatprep.subr.bf16.mxu0 %v1812
    %2814 = vmatpush2.bf16.msra.mxu0 %v1811
    %2815 = vmatprep.subr.bf16.mxu0 %v1808
    %2816 = vmatpush2.bf16.msra.mxu0 %v1807
    %2817 = vmatprep.subr.bf16.mxu0 %v1804
    %2818 = vmatpush2.bf16.msra.mxu0 %v1803
    %2819 = vmatprep.subr.bf16.mxu0 %v1800
    %2820 = vmatpush2.bf16.msra.mxu0 %v1799
    %2821 = vmatprep.subr.bf16.mxu0 %v1796
    %2822 = vmatpush2.bf16.msra.mxu0 %v1795
    %2823 = vmatprep.subr.bf16.mxu0 %v1792
    %2824 = vmatpush2.bf16.msra.mxu0 %v1791
    %2825 = vmatprep.mubr.bf16.mxu0 %v2792
    %2826 = vmatmul.mubr.bf16.gmra.mxu0 %v2694
    %v2827 = vpop.f32.mrf.mxu0
    %v2828 = vadd.f32 %v397, %v2827
    %v2829 = vpop.f32.mrf.mxu0
    %v2830 = vadd.f32 %v401, %v2829
    %v2831 = vpop.f32.mrf.mxu0
    %v2832 = vpop.f32.mrf.mxu0
    %2833 = vdwg.mxu0
    %2834 = vmatprep.subr.bf16.mxu0 %v1790
    %2835 = vmatpush1.bf16.msra.mxu0 %v1789
    %2836 = vmatprep.subr.bf16.mxu0 %v1786
    %2837 = vmatpush1.bf16.msra.mxu0 %v1785
    %2838 = vmatprep.subr.bf16.mxu0 %v1782
    %2839 = vmatpush1.bf16.msra.mxu0 %v1781
    %2840 = vmatprep.subr.bf16.mxu0 %v1778
    %2841 = vmatpush1.bf16.msra.mxu0 %v1777
    %2842 = vmatprep.subr.bf16.mxu0 %v1774
    %2843 = vmatpush1.bf16.msra.mxu0 %v1773
    %2844 = vmatprep.subr.bf16.mxu0 %v1770
    %2845 = vmatpush1.bf16.msra.mxu0 %v1769
    %2846 = vmatprep.subr.bf16.mxu0 %v1766
    %2847 = vmatpush1.bf16.msra.mxu0 %v1765
    %2848 = vmatprep.subr.bf16.mxu0 %v1762
    %2849 = vmatpush1.bf16.msra.mxu0 %v1761
    %2850 = vmatprep.subr.bf16.mxu0 %v1822
    %2851 = vmatpush2.bf16.msra.mxu0 %v1821
    %2852 = vmatprep.subr.bf16.mxu0 %v1818
    %2853 = vmatpush2.bf16.msra.mxu0 %v1817
    %2854 = vmatprep.subr.bf16.mxu0 %v1814
    %2855 = vmatpush2.bf16.msra.mxu0 %v1813
    %2856 = vmatprep.subr.bf16.mxu0 %v1810
    %2857 = vmatpush2.bf16.msra.mxu0 %v1809
    %2858 = vmatprep.subr.bf16.mxu0 %v1806
    %2859 = vmatpush2.bf16.msra.mxu0 %v1805
    %2860 = vmatprep.subr.bf16.mxu0 %v1802
    %2861 = vmatpush2.bf16.msra.mxu0 %v1801
    %2862 = vmatprep.subr.bf16.mxu0 %v1798
    %2863 = vmatpush2.bf16.msra.mxu0 %v1797
    %2864 = vmatprep.subr.bf16.mxu0 %v1794
    %2865 = vmatpush2.bf16.msra.mxu0 %v1793
    %2866 = vmatprep.mubr.bf16.mxu0 %v2792
    %2867 = vmatmul.mubr.bf16.gmra.mxu0 %v2694
    %v2868 = vpop.f32.mrf.mxu0
    %v2869 = vadd.f32 %v405, %v2868
    %v2870 = vpop.f32.mrf.mxu0
    %v2871 = vadd.f32 %v409, %v2870
    %v2872 = vpop.f32.mrf.mxu0
    %v2873 = vpop.f32.mrf.mxu0
    %2874 = vdwg.mxu0
    %v2875 = vtanh.pop %v2828
    %v2876 = vtanh.pop %v2830
    %v2877 = vtanh.pop %v2869
    %v2878 = vmul.f32 %v2875, 0.5
    %v2879 = vmul.f32 %v2876, 0.5
    %v2880 = vmul.f32 %v2877, 0.5
    %v2881 = vadd.f32 %v2878, 0.5
    %v2882 = vadd.f32 %v2879, 0.5
    %v2883 = vadd.f32 %v2880, 0.5
    %v2884 = vtanh.pop %v2871
    %v2885 = vmul.f32 %v2882, %v2585
    %v2886 = vmul.f32 %v2881, %v2884
    %v2887 = vadd.f32 %v2885, %v2886
    %v2888 = vtanh.pop %v2887
    %v2889 = vmul.f32 %v2883, %v2888
    %v2890 = vld [vmem:[#allocation2 + $0xc0] sm:$0xff]
    %v2891 = vld [vmem:[#allocation2 + $0xc8] sm:$0xff]
    %v2892 = vld [vmem:[#allocation2 + $0xd0] sm:$0xff]
    %v2893 = vld [vmem:[#allocation2 + $0xd8] sm:$0xff]
    %v2894 = vpack.c.bf16 %v2693, %v2693
    %2895 = vmatprep.subr.bf16.mxu0 %v575
    %2896 = vmatpush1.bf16.msra.mxu0 %v574
    %2897 = vmatprep.subr.bf16.mxu0 %v571
    %2898 = vmatpush1.bf16.msra.mxu0 %v570
    %2899 = vmatprep.subr.bf16.mxu0 %v567
    %2900 = vmatpush1.bf16.msra.mxu0 %v566
    %2901 = vmatprep.subr.bf16.mxu0 %v563
    %2902 = vmatpush1.bf16.msra.mxu0 %v562
    %2903 = vmatprep.subr.bf16.mxu0 %v559
    %2904 = vmatpush1.bf16.msra.mxu0 %v558
    %2905 = vmatprep.subr.bf16.mxu0 %v555
    %2906 = vmatpush1.bf16.msra.mxu0 %v554
    %2907 = vmatprep.subr.bf16.mxu0 %v551
    %2908 = vmatpush1.bf16.msra.mxu0 %v550
    %2909 = vmatprep.subr.bf16.mxu0 %v547
    %2910 = vmatpush1.bf16.msra.mxu0 %v546
    %2911 = vmatprep.subr.bf16.mxu0 0
    %2912 = vmatpush2.bf16.msra.mxu0 0
    %2913 = vmatprep.subr.bf16.mxu0 0
    %2914 = vmatpush2.bf16.msra.mxu0 0
    %2915 = vmatprep.subr.bf16.mxu0 0
    %2916 = vmatpush2.bf16.msra.mxu0 0
    %2917 = vmatprep.subr.bf16.mxu0 0
    %2918 = vmatpush2.bf16.msra.mxu0 0
    %2919 = vmatprep.subr.bf16.mxu0 0
    %2920 = vmatpush2.bf16.msra.mxu0 0
    %2921 = vmatprep.subr.bf16.mxu0 0
    %2922 = vmatpush2.bf16.msra.mxu0 0
    %2923 = vmatprep.subr.bf16.mxu0 0
    %2924 = vmatpush2.bf16.msra.mxu0 0
    %2925 = vmatprep.subr.bf16.mxu0 0
    %2926 = vmatpush2.bf16.msra.mxu0 0
    %2927 = vmatprep.mubr.bf16.mxu0 0
    %2928 = vmatmul.mubr.bf16.gmra.mxu0 %v2894
    %v2929 = vpop.f32.mrf.mxu0
    %v2930 = vadd.f32 0.0, %v2929
    %v2931 = vpop.f32.mrf.mxu0
    %v2932 = vadd.f32 0.0, %v2931
    %v2933 = vpop.f32.mrf.mxu0
    %v2934 = vpop.f32.mrf.mxu0
    %2935 = vdwg.mxu0
    %2936 = vmatprep.subr.bf16.mxu0 %v577
    %2937 = vmatpush1.bf16.msra.mxu0 %v576
    %2938 = vmatprep.subr.bf16.mxu0 %v573
    %2939 = vmatpush1.bf16.msra.mxu0 %v572
    %2940 = vmatprep.subr.bf16.mxu0 %v569
    %2941 = vmatpush1.bf16.msra.mxu0 %v568
    %2942 = vmatprep.subr.bf16.mxu0 %v565
    %2943 = vmatpush1.bf16.msra.mxu0 %v564
    %2944 = vmatprep.subr.bf16.mxu0 %v561
    %2945 = vmatpush1.bf16.msra.mxu0 %v560
    %2946 = vmatprep.subr.bf16.mxu0 %v557
    %2947 = vmatpush1.bf16.msra.mxu0 %v556
    %2948 = vmatprep.subr.bf16.mxu0 %v553
    %2949 = vmatpush1.bf16.msra.mxu0 %v552
    %2950 = vmatprep.subr.bf16.mxu0 %v549
    %2951 = vmatpush1.bf16.msra.mxu0 %v548
    %2952 = vmatprep.subr.bf16.mxu0 0
    %2953 = vmatpush2.bf16.msra.mxu0 0
    %2954 = vmatprep.subr.bf16.mxu0 0
    %2955 = vmatpush2.bf16.msra.mxu0 0
    %2956 = vmatprep.subr.bf16.mxu0 0
    %2957 = vmatpush2.bf16.msra.mxu0 0
    %2958 = vmatprep.subr.bf16.mxu0 0
    %2959 = vmatpush2.bf16.msra.mxu0 0
    %2960 = vmatprep.subr.bf16.mxu0 0
    %2961 = vmatpush2.bf16.msra.mxu0 0
    %2962 = vmatprep.subr.bf16.mxu0 0
    %2963 = vmatpush2.bf16.msra.mxu0 0
    %2964 = vmatprep.subr.bf16.mxu0 0
    %2965 = vmatpush2.bf16.msra.mxu0 0
    %2966 = vmatprep.subr.bf16.mxu0 0
    %2967 = vmatpush2.bf16.msra.mxu0 0
    %2968 = vmatprep.mubr.bf16.mxu0 0
    %2969 = vmatmul.mubr.bf16.gmra.mxu0 %v2894
    %v2970 = vpop.f32.mrf.mxu0
    %v2971 = vadd.f32 0.0, %v2970
    %v2972 = vpop.f32.mrf.mxu0
    %v2973 = vadd.f32 0.0, %v2972
    %v2974 = vpop.f32.mrf.mxu0
    %v2975 = vpop.f32.mrf.mxu0
    %2976 = vdwg.mxu0
    %v2977 = vadd.f32 %v2890, %v2930
    %v2978 = vadd.f32 %v2891, %v2932
    %v2979 = vadd.f32 %v2892, %v2971
    %v2980 = vadd.f32 %v2893, %v2973
    %v2981 = vtanh.pop %v2977
    %v2982 = vtanh.pop %v2978
    %v2983 = vtanh.pop %v2979
    %v2984 = vmul.f32 %v2981, 0.5
    %v2985 = vmul.f32 %v2982, 0.5
    %v2986 = vmul.f32 %v2983, 0.5
    %v2987 = vadd.f32 %v2984, 0.5
    %v2988 = vadd.f32 %v2985, 0.5
    %v2989 = vadd.f32 %v2986, 0.5
    %v2990 = vtanh.pop %v2980
    %v2991 = vmul.f32 %v2988, %v2691
    %v2992 = vmul.f32 %v2987, %v2990
    %v2993 = vadd.f32 %v2991, %v2992
    %v2994 = vtanh.pop %v2993
    %v2995 = vmul.f32 %v2989, %v2994
    %v2996 = vpack.c.bf16 %v2791, %v2791
    %2997 = vmatprep.subr.bf16.mxu0 %v1103
    %2998 = vmatpush1.bf16.msra.mxu0 %v1102
    %2999 = vmatprep.subr.bf16.mxu0 %v1099
    %3000 = vmatpush1.bf16.msra.mxu0 %v1098
    %3001 = vmatprep.subr.bf16.mxu0 %v1095
    %3002 = vmatpush1.bf16.msra.mxu0 %v1094
    %3003 = vmatprep.subr.bf16.mxu0 %v1091
    %3004 = vmatpush1.bf16.msra.mxu0 %v1090
    %3005 = vmatprep.subr.bf16.mxu0 %v1087
    %3006 = vmatpush1.bf16.msra.mxu0 %v1086
    %3007 = vmatprep.subr.bf16.mxu0 %v1083
    %3008 = vmatpush1.bf16.msra.mxu0 %v1082
    %3009 = vmatprep.subr.bf16.mxu0 %v1079
    %3010 = vmatpush1.bf16.msra.mxu0 %v1078
    %3011 = vmatprep.subr.bf16.mxu0 %v1075
    %3012 = vmatpush1.bf16.msra.mxu0 %v1074
    %3013 = vmatprep.subr.bf16.mxu0 %v1135
    %3014 = vmatpush2.bf16.msra.mxu0 %v1134
    %3015 = vmatprep.subr.bf16.mxu0 %v1131
    %3016 = vmatpush2.bf16.msra.mxu0 %v1130
    %3017 = vmatprep.subr.bf16.mxu0 %v1127
    %3018 = vmatpush2.bf16.msra.mxu0 %v1126
    %3019 = vmatprep.subr.bf16.mxu0 %v1123
    %3020 = vmatpush2.bf16.msra.mxu0 %v1122
    %3021 = vmatprep.subr.bf16.mxu0 %v1119
    %3022 = vmatpush2.bf16.msra.mxu0 %v1118
    %3023 = vmatprep.subr.bf16.mxu0 %v1115
    %3024 = vmatpush2.bf16.msra.mxu0 %v1114
    %3025 = vmatprep.subr.bf16.mxu0 %v1111
    %3026 = vmatpush2.bf16.msra.mxu0 %v1110
    %3027 = vmatprep.subr.bf16.mxu0 %v1107
    %3028 = vmatpush2.bf16.msra.mxu0 %v1106
    %3029 = vmatprep.mubr.bf16.mxu0 %v2996
    %3030 = vmatmul.mubr.bf16.gmra.mxu0 %v2894
    %v3031 = vpop.f32.mrf.mxu0
    %v3032 = vadd.f32 %v375, %v3031
    %v3033 = vpop.f32.mrf.mxu0
    %v3034 = vadd.f32 %v379, %v3033
    %v3035 = vpop.f32.mrf.mxu0
    %v3036 = vpop.f32.mrf.mxu0
    %3037 = vdwg.mxu0
    %3038 = vmatprep.subr.bf16.mxu0 %v1105
    %3039 = vmatpush1.bf16.msra.mxu0 %v1104
    %3040 = vmatprep.subr.bf16.mxu0 %v1101
    %3041 = vmatpush1.bf16.msra.mxu0 %v1100
    %3042 = vmatprep.subr.bf16.mxu0 %v1097
    %3043 = vmatpush1.bf16.msra.mxu0 %v1096
    %3044 = vmatprep.subr.bf16.mxu0 %v1093
    %3045 = vmatpush1.bf16.msra.mxu0 %v1092
    %3046 = vmatprep.subr.bf16.mxu0 %v1089
    %3047 = vmatpush1.bf16.msra.mxu0 %v1088
    %3048 = vmatprep.subr.bf16.mxu0 %v1085
    %3049 = vmatpush1.bf16.msra.mxu0 %v1084
    %3050 = vmatprep.subr.bf16.mxu0 %v1081
    %3051 = vmatpush1.bf16.msra.mxu0 %v1080
    %3052 = vmatprep.subr.bf16.mxu0 %v1077
    %3053 = vmatpush1.bf16.msra.mxu0 %v1076
    %3054 = vmatprep.subr.bf16.mxu0 %v1137
    %3055 = vmatpush2.bf16.msra.mxu0 %v1136
    %3056 = vmatprep.subr.bf16.mxu0 %v1133
    %3057 = vmatpush2.bf16.msra.mxu0 %v1132
    %3058 = vmatprep.subr.bf16.mxu0 %v1129
    %3059 = vmatpush2.bf16.msra.mxu0 %v1128
    %3060 = vmatprep.subr.bf16.mxu0 %v1125
    %3061 = vmatpush2.bf16.msra.mxu0 %v1124
    %3062 = vmatprep.subr.bf16.mxu0 %v1121
    %3063 = vmatpush2.bf16.msra.mxu0 %v1120
    %3064 = vmatprep.subr.bf16.mxu0 %v1117
    %3065 = vmatpush2.bf16.msra.mxu0 %v1116
    %3066 = vmatprep.subr.bf16.mxu0 %v1113
    %3067 = vmatpush2.bf16.msra.mxu0 %v1112
    %3068 = vmatprep.subr.bf16.mxu0 %v1109
    %3069 = vmatpush2.bf16.msra.mxu0 %v1108
    %3070 = vmatprep.mubr.bf16.mxu0 %v2996
    %3071 = vmatmul.mubr.bf16.gmra.mxu0 %v2894
    %v3072 = vpop.f32.mrf.mxu0
    %v3073 = vadd.f32 %v383, %v3072
    %v3074 = vpop.f32.mrf.mxu0
    %v3075 = vadd.f32 %v387, %v3074
    %v3076 = vpop.f32.mrf.mxu0
    %v3077 = vpop.f32.mrf.mxu0
    %3078 = vdwg.mxu0
    %v3079 = vtanh.pop %v3032
    %v3080 = vtanh.pop %v3034
    %v3081 = vtanh.pop %v3073
    %v3082 = vmul.f32 %v3079, 0.5
    %v3083 = vmul.f32 %v3080, 0.5
    %v3084 = vmul.f32 %v3081, 0.5
    %v3085 = vadd.f32 %v3082, 0.5
    %v3086 = vadd.f32 %v3083, 0.5
    %v3087 = vadd.f32 %v3084, 0.5
    %v3088 = vtanh.pop %v3075
    %v3089 = vmul.f32 %v3086, %v2789
    %v3090 = vmul.f32 %v3085, %v3088
    %v3091 = vadd.f32 %v3089, %v3090
    %v3092 = vtanh.pop %v3091
    %v3093 = vmul.f32 %v3087, %v3092
    %v3094 = vpack.c.bf16 %v2889, %v2889
    %3095 = vmatprep.subr.bf16.mxu0 %v1788
    %3096 = vmatpush1.bf16.msra.mxu0 %v1787
    %3097 = vmatprep.subr.bf16.mxu0 %v1784
    %3098 = vmatpush1.bf16.msra.mxu0 %v1783
    %3099 = vmatprep.subr.bf16.mxu0 %v1780
    %3100 = vmatpush1.bf16.msra.mxu0 %v1779
    %3101 = vmatprep.subr.bf16.mxu0 %v1776
    %3102 = vmatpush1.bf16.msra.mxu0 %v1775
    %3103 = vmatprep.subr.bf16.mxu0 %v1772
    %3104 = vmatpush1.bf16.msra.mxu0 %v1771
    %3105 = vmatprep.subr.bf16.mxu0 %v1768
    %3106 = vmatpush1.bf16.msra.mxu0 %v1767
    %3107 = vmatprep.subr.bf16.mxu0 %v1764
    %3108 = vmatpush1.bf16.msra.mxu0 %v1763
    %3109 = vmatprep.subr.bf16.mxu0 %v1760
    %3110 = vmatpush1.bf16.msra.mxu0 %v1759
    %3111 = vmatprep.subr.bf16.mxu0 %v1820
    %3112 = vmatpush2.bf16.msra.mxu0 %v1819
    %3113 = vmatprep.subr.bf16.mxu0 %v1816
    %3114 = vmatpush2.bf16.msra.mxu0 %v1815
    %3115 = vmatprep.subr.bf16.mxu0 %v1812
    %3116 = vmatpush2.bf16.msra.mxu0 %v1811
    %3117 = vmatprep.subr.bf16.mxu0 %v1808
    %3118 = vmatpush2.bf16.msra.mxu0 %v1807
    %3119 = vmatprep.subr.bf16.mxu0 %v1804
    %3120 = vmatpush2.bf16.msra.mxu0 %v1803
    %3121 = vmatprep.subr.bf16.mxu0 %v1800
    %3122 = vmatpush2.bf16.msra.mxu0 %v1799
    %3123 = vmatprep.subr.bf16.mxu0 %v1796
    %3124 = vmatpush2.bf16.msra.mxu0 %v1795
    %3125 = vmatprep.subr.bf16.mxu0 %v1792
    %3126 = vmatpush2.bf16.msra.mxu0 %v1791
    %3127 = vmatprep.mubr.bf16.mxu0 %v3094
    %3128 = vmatmul.mubr.bf16.gmra.mxu0 %v2996
    %v3129 = vpop.f32.mrf.mxu0
    %v3130 = vadd.f32 %v397, %v3129
    %v3131 = vpop.f32.mrf.mxu0
    %v3132 = vadd.f32 %v401, %v3131
    %v3133 = vpop.f32.mrf.mxu0
    %v3134 = vpop.f32.mrf.mxu0
    %3135 = vdwg.mxu0
    %3136 = vmatprep.subr.bf16.mxu0 %v1790
    %3137 = vmatpush1.bf16.msra.mxu0 %v1789
    %3138 = vmatprep.subr.bf16.mxu0 %v1786
    %3139 = vmatpush1.bf16.msra.mxu0 %v1785
    %3140 = vmatprep.subr.bf16.mxu0 %v1782
    %3141 = vmatpush1.bf16.msra.mxu0 %v1781
    %3142 = vmatprep.subr.bf16.mxu0 %v1778
    %3143 = vmatpush1.bf16.msra.mxu0 %v1777
    %3144 = vmatprep.subr.bf16.mxu0 %v1774
    %3145 = vmatpush1.bf16.msra.mxu0 %v1773
    %3146 = vmatprep.subr.bf16.mxu0 %v1770
    %3147 = vmatpush1.bf16.msra.mxu0 %v1769
    %3148 = vmatprep.subr.bf16.mxu0 %v1766
    %3149 = vmatpush1.bf16.msra.mxu0 %v1765
    %3150 = vmatprep.subr.bf16.mxu0 %v1762
    %3151 = vmatpush1.bf16.msra.mxu0 %v1761
    %3152 = vmatprep.subr.bf16.mxu0 %v1822
    %3153 = vmatpush2.bf16.msra.mxu0 %v1821
    %3154 = vmatprep.subr.bf16.mxu0 %v1818
    %3155 = vmatpush2.bf16.msra.mxu0 %v1817
    %3156 = vmatprep.subr.bf16.mxu0 %v1814
    %3157 = vmatpush2.bf16.msra.mxu0 %v1813
    %3158 = vmatprep.subr.bf16.mxu0 %v1810
    %3159 = vmatpush2.bf16.msra.mxu0 %v1809
    %3160 = vmatprep.subr.bf16.mxu0 %v1806
    %3161 = vmatpush2.bf16.msra.mxu0 %v1805
    %3162 = vmatprep.subr.bf16.mxu0 %v1802
    %3163 = vmatpush2.bf16.msra.mxu0 %v1801
    %3164 = vmatprep.subr.bf16.mxu0 %v1798
    %3165 = vmatpush2.bf16.msra.mxu0 %v1797
    %3166 = vmatprep.subr.bf16.mxu0 %v1794
    %3167 = vmatpush2.bf16.msra.mxu0 %v1793
    %3168 = vmatprep.mubr.bf16.mxu0 %v3094
    %3169 = vmatmul.mubr.bf16.gmra.mxu0 %v2996
    %v3170 = vpop.f32.mrf.mxu0
    %v3171 = vadd.f32 %v405, %v3170
    %v3172 = vpop.f32.mrf.mxu0
    %v3173 = vadd.f32 %v409, %v3172
    %v3174 = vpop.f32.mrf.mxu0
    %v3175 = vpop.f32.mrf.mxu0
    %3176 = vdwg.mxu0
    %v3177 = vtanh.pop %v3130
    %v3178 = vtanh.pop %v3132
    %v3179 = vtanh.pop %v3171
    %v3180 = vmul.f32 %v3177, 0.5
    %v3181 = vmul.f32 %v3178, 0.5
    %v3182 = vmul.f32 %v3179, 0.5
    %v3183 = vadd.f32 %v3180, 0.5
    %v3184 = vadd.f32 %v3181, 0.5
    %v3185 = vadd.f32 %v3182, 0.5
    %v3186 = vtanh.pop %v3173
    %v3187 = vmul.f32 %v3184, %v2887
    %v3188 = vmul.f32 %v3183, %v3186
    %v3189 = vadd.f32 %v3187, %v3188
    %v3190 = vtanh.pop %v3189
    %v3191 = vmul.f32 %v3185, %v3190
    %v3192 = vld [vmem:[#allocation2 + $0xe0] sm:$0xff]
    %v3193 = vld [vmem:[#allocation2 + $0xe8] sm:$0xff]
    %v3194 = vld [vmem:[#allocation2 + $0xf0] sm:$0xff]
    %v3195 = vld [vmem:[#allocation2 + $0xf8] sm:$0xff]
    %v3196 = vpack.c.bf16 %v2995, %v2995
    %3197 = vmatprep.subr.bf16.mxu0 %v575
    %3198 = vmatpush1.bf16.msra.mxu0 %v574
    %3199 = vmatprep.subr.bf16.mxu0 %v571
    %3200 = vmatpush1.bf16.msra.mxu0 %v570
    %3201 = vmatprep.subr.bf16.mxu0 %v567
    %3202 = vmatpush1.bf16.msra.mxu0 %v566
    %3203 = vmatprep.subr.bf16.mxu0 %v563
    %3204 = vmatpush1.bf16.msra.mxu0 %v562
    %3205 = vmatprep.subr.bf16.mxu0 %v559
    %3206 = vmatpush1.bf16.msra.mxu0 %v558
    %3207 = vmatprep.subr.bf16.mxu0 %v555
    %3208 = vmatpush1.bf16.msra.mxu0 %v554
    %3209 = vmatprep.subr.bf16.mxu0 %v551
    %3210 = vmatpush1.bf16.msra.mxu0 %v550
    %3211 = vmatprep.subr.bf16.mxu0 %v547
    %3212 = vmatpush1.bf16.msra.mxu0 %v546
    %3213 = vmatprep.subr.bf16.mxu0 0
    %3214 = vmatpush2.bf16.msra.mxu0 0
    %3215 = vmatprep.subr.bf16.mxu0 0
    %3216 = vmatpush2.bf16.msra.mxu0 0
    %3217 = vmatprep.subr.bf16.mxu0 0
    %3218 = vmatpush2.bf16.msra.mxu0 0
    %3219 = vmatprep.subr.bf16.mxu0 0
    %3220 = vmatpush2.bf16.msra.mxu0 0
    %3221 = vmatprep.subr.bf16.mxu0 0
    %3222 = vmatpush2.bf16.msra.mxu0 0
    %3223 = vmatprep.subr.bf16.mxu0 0
    %3224 = vmatpush2.bf16.msra.mxu0 0
    %3225 = vmatprep.subr.bf16.mxu0 0
    %3226 = vmatpush2.bf16.msra.mxu0 0
    %3227 = vmatprep.subr.bf16.mxu0 0
    %3228 = vmatpush2.bf16.msra.mxu0 0
    %3229 = vmatprep.mubr.bf16.mxu0 0
    %3230 = vmatmul.mubr.bf16.gmra.mxu0 %v3196
    %v3231 = vpop.f32.mrf.mxu0
    %v3232 = vadd.f32 0.0, %v3231
    %v3233 = vpop.f32.mrf.mxu0
    %v3234 = vadd.f32 0.0, %v3233
    %v3235 = vpop.f32.mrf.mxu0
    %v3236 = vpop.f32.mrf.mxu0
    %3237 = vdwg.mxu0
    %3238 = vmatprep.subr.bf16.mxu0 %v577
    %3239 = vmatpush1.bf16.msra.mxu0 %v576
    %3240 = vmatprep.subr.bf16.mxu0 %v573
    %3241 = vmatpush1.bf16.msra.mxu0 %v572
    %3242 = vmatprep.subr.bf16.mxu0 %v569
    %3243 = vmatpush1.bf16.msra.mxu0 %v568
    %3244 = vmatprep.subr.bf16.mxu0 %v565
    %3245 = vmatpush1.bf16.msra.mxu0 %v564
    %3246 = vmatprep.subr.bf16.mxu0 %v561
    %3247 = vmatpush1.bf16.msra.mxu0 %v560
    %3248 = vmatprep.subr.bf16.mxu0 %v557
    %3249 = vmatpush1.bf16.msra.mxu0 %v556
    %3250 = vmatprep.subr.bf16.mxu0 %v553
    %3251 = vmatpush1.bf16.msra.mxu0 %v552
    %3252 = vmatprep.subr.bf16.mxu0 %v549
    %3253 = vmatpush1.bf16.msra.mxu0 %v548
    %3254 = vmatprep.subr.bf16.mxu0 0
    %3255 = vmatpush2.bf16.msra.mxu0 0
    %3256 = vmatprep.subr.bf16.mxu0 0
    %3257 = vmatpush2.bf16.msra.mxu0 0
    %3258 = vmatprep.subr.bf16.mxu0 0
    %3259 = vmatpush2.bf16.msra.mxu0 0
    %3260 = vmatprep.subr.bf16.mxu0 0
    %3261 = vmatpush2.bf16.msra.mxu0 0
    %3262 = vmatprep.subr.bf16.mxu0 0
    %3263 = vmatpush2.bf16.msra.mxu0 0
    %3264 = vmatprep.subr.bf16.mxu0 0
    %3265 = vmatpush2.bf16.msra.mxu0 0
    %3266 = vmatprep.subr.bf16.mxu0 0
    %3267 = vmatpush2.bf16.msra.mxu0 0
    %3268 = vmatprep.subr.bf16.mxu0 0
    %3269 = vmatpush2.bf16.msra.mxu0 0
    %3270 = vmatprep.mubr.bf16.mxu0 0
    %3271 = vmatmul.mubr.bf16.gmra.mxu0 %v3196
    %v3272 = vpop.f32.mrf.mxu0
    %v3273 = vadd.f32 0.0, %v3272
    %v3274 = vpop.f32.mrf.mxu0
    %v3275 = vadd.f32 0.0, %v3274
    %v3276 = vpop.f32.mrf.mxu0
    %v3277 = vpop.f32.mrf.mxu0
    %3278 = vdwg.mxu0
    %v3279 = vadd.f32 %v3192, %v3232
    %v3280 = vadd.f32 %v3193, %v3234
    %v3281 = vadd.f32 %v3194, %v3273
    %v3282 = vadd.f32 %v3195, %v3275
    %v3283 = vtanh.pop %v3279
    %v3284 = vtanh.pop %v3280
    %v3285 = vtanh.pop %v3281
    %v3286 = vmul.f32 %v3283, 0.5
    %v3287 = vmul.f32 %v3284, 0.5
    %v3288 = vmul.f32 %v3285, 0.5
    %v3289 = vadd.f32 %v3286, 0.5
    %v3290 = vadd.f32 %v3287, 0.5
    %v3291 = vadd.f32 %v3288, 0.5
    %v3292 = vtanh.pop %v3282
    %v3293 = vmul.f32 %v3290, %v2993
    %v3294 = vmul.f32 %v3289, %v3292
    %v3295 = vadd.f32 %v3293, %v3294
    %v3296 = vtanh.pop %v3295
    %v3297 = vmul.f32 %v3291, %v3296
    %v3298 = vpack.c.bf16 %v3093, %v3093
    %3299 = vmatprep.subr.bf16.mxu0 %v1103
    %3300 = vmatpush1.bf16.msra.mxu0 %v1102
    %3301 = vmatprep.subr.bf16.mxu0 %v1099
    %3302 = vmatpush1.bf16.msra.mxu0 %v1098
    %3303 = vmatprep.subr.bf16.mxu0 %v1095
    %3304 = vmatpush1.bf16.msra.mxu0 %v1094
    %3305 = vmatprep.subr.bf16.mxu0 %v1091
    %3306 = vmatpush1.bf16.msra.mxu0 %v1090
    %3307 = vmatprep.subr.bf16.mxu0 %v1087
    %3308 = vmatpush1.bf16.msra.mxu0 %v1086
    %3309 = vmatprep.subr.bf16.mxu0 %v1083
    %3310 = vmatpush1.bf16.msra.mxu0 %v1082
    %3311 = vmatprep.subr.bf16.mxu0 %v1079
    %3312 = vmatpush1.bf16.msra.mxu0 %v1078
    %3313 = vmatprep.subr.bf16.mxu0 %v1075
    %3314 = vmatpush1.bf16.msra.mxu0 %v1074
    %3315 = vmatprep.subr.bf16.mxu0 %v1135
    %3316 = vmatpush2.bf16.msra.mxu0 %v1134
    %3317 = vmatprep.subr.bf16.mxu0 %v1131
    %3318 = vmatpush2.bf16.msra.mxu0 %v1130
    %3319 = vmatprep.subr.bf16.mxu0 %v1127
    %3320 = vmatpush2.bf16.msra.mxu0 %v1126
    %3321 = vmatprep.subr.bf16.mxu0 %v1123
    %3322 = vmatpush2.bf16.msra.mxu0 %v1122
    %3323 = vmatprep.subr.bf16.mxu0 %v1119
    %3324 = vmatpush2.bf16.msra.mxu0 %v1118
    %3325 = vmatprep.subr.bf16.mxu0 %v1115
    %3326 = vmatpush2.bf16.msra.mxu0 %v1114
    %3327 = vmatprep.subr.bf16.mxu0 %v1111
    %3328 = vmatpush2.bf16.msra.mxu0 %v1110
    %3329 = vmatprep.subr.bf16.mxu0 %v1107
    %3330 = vmatpush2.bf16.msra.mxu0 %v1106
    %3331 = vmatprep.mubr.bf16.mxu0 %v3298
    %3332 = vmatmul.mubr.bf16.gmra.mxu0 %v3196
    %v3333 = vpop.f32.mrf.mxu0
    %v3334 = vadd.f32 %v375, %v3333
    %v3335 = vpop.f32.mrf.mxu0
    %v3336 = vadd.f32 %v379, %v3335
    %v3337 = vpop.f32.mrf.mxu0
    %v3338 = vpop.f32.mrf.mxu0
    %3339 = vdwg.mxu0
    %3340 = vmatprep.subr.bf16.mxu0 %v1105
    %3341 = vmatpush1.bf16.msra.mxu0 %v1104
    %3342 = vmatprep.subr.bf16.mxu0 %v1101
    %3343 = vmatpush1.bf16.msra.mxu0 %v1100
    %3344 = vmatprep.subr.bf16.mxu0 %v1097
    %3345 = vmatpush1.bf16.msra.mxu0 %v1096
    %3346 = vmatprep.subr.bf16.mxu0 %v1093
    %3347 = vmatpush1.bf16.msra.mxu0 %v1092
    %3348 = vmatprep.subr.bf16.mxu0 %v1089
    %3349 = vmatpush1.bf16.msra.mxu0 %v1088
    %3350 = vmatprep.subr.bf16.mxu0 %v1085
    %3351 = vmatpush1.bf16.msra.mxu0 %v1084
    %3352 = vmatprep.subr.bf16.mxu0 %v1081
    %3353 = vmatpush1.bf16.msra.mxu0 %v1080
    %3354 = vmatprep.subr.bf16.mxu0 %v1077
    %3355 = vmatpush1.bf16.msra.mxu0 %v1076
    %3356 = vmatprep.subr.bf16.mxu0 %v1137
    %3357 = vmatpush2.bf16.msra.mxu0 %v1136
    %3358 = vmatprep.subr.bf16.mxu0 %v1133
    %3359 = vmatpush2.bf16.msra.mxu0 %v1132
    %3360 = vmatprep.subr.bf16.mxu0 %v1129
    %3361 = vmatpush2.bf16.msra.mxu0 %v1128
    %3362 = vmatprep.subr.bf16.mxu0 %v1125
    %3363 = vmatpush2.bf16.msra.mxu0 %v1124
    %3364 = vmatprep.subr.bf16.mxu0 %v1121
    %3365 = vmatpush2.bf16.msra.mxu0 %v1120
    %3366 = vmatprep.subr.bf16.mxu0 %v1117
    %3367 = vmatpush2.bf16.msra.mxu0 %v1116
    %3368 = vmatprep.subr.bf16.mxu0 %v1113
    %3369 = vmatpush2.bf16.msra.mxu0 %v1112
    %3370 = vmatprep.subr.bf16.mxu0 %v1109
    %3371 = vmatpush2.bf16.msra.mxu0 %v1108
    %3372 = vmatprep.mubr.bf16.mxu0 %v3298
    %3373 = vmatmul.mubr.bf16.gmra.mxu0 %v3196
    %v3374 = vpop.f32.mrf.mxu0
    %v3375 = vadd.f32 %v383, %v3374
    %v3376 = vpop.f32.mrf.mxu0
    %v3377 = vadd.f32 %v387, %v3376
    %v3378 = vpop.f32.mrf.mxu0
    %v3379 = vpop.f32.mrf.mxu0
    %3380 = vdwg.mxu0
    %v3381 = vtanh.pop %v3334
    %v3382 = vtanh.pop %v3336
    %v3383 = vtanh.pop %v3375
    %v3384 = vmul.f32 %v3381, 0.5
    %v3385 = vmul.f32 %v3382, 0.5
    %v3386 = vmul.f32 %v3383, 0.5
    %v3387 = vadd.f32 %v3384, 0.5
    %v3388 = vadd.f32 %v3385, 0.5
    %v3389 = vadd.f32 %v3386, 0.5
    %v3390 = vtanh.pop %v3377
    %v3391 = vmul.f32 %v3388, %v3091
    %v3392 = vmul.f32 %v3387, %v3390
    %v3393 = vadd.f32 %v3391, %v3392
    %v3394 = vtanh.pop %v3393
    %v3395 = vmul.f32 %v3389, %v3394
    %v3396 = vpack.c.bf16 %v3191, %v3191
    %3397 = vmatprep.subr.bf16.mxu0 %v1788
    %3398 = vmatpush1.bf16.msra.mxu0 %v1787
    %3399 = vmatprep.subr.bf16.mxu0 %v1784
    %3400 = vmatpush1.bf16.msra.mxu0 %v1783
    %3401 = vmatprep.subr.bf16.mxu0 %v1780
    %3402 = vmatpush1.bf16.msra.mxu0 %v1779
    %3403 = vmatprep.subr.bf16.mxu0 %v1776
    %3404 = vmatpush1.bf16.msra.mxu0 %v1775
    %3405 = vmatprep.subr.bf16.mxu0 %v1772
    %3406 = vmatpush1.bf16.msra.mxu0 %v1771
    %3407 = vmatprep.subr.bf16.mxu0 %v1768
    %3408 = vmatpush1.bf16.msra.mxu0 %v1767
    %3409 = vmatprep.subr.bf16.mxu0 %v1764
    %3410 = vmatpush1.bf16.msra.mxu0 %v1763
    %3411 = vmatprep.subr.bf16.mxu0 %v1760
    %3412 = vmatpush1.bf16.msra.mxu0 %v1759
    %3413 = vmatprep.subr.bf16.mxu0 %v1820
    %3414 = vmatpush2.bf16.msra.mxu0 %v1819
    %3415 = vmatprep.subr.bf16.mxu0 %v1816
    %3416 = vmatpush2.bf16.msra.mxu0 %v1815
    %3417 = vmatprep.subr.bf16.mxu0 %v1812
    %3418 = vmatpush2.bf16.msra.mxu0 %v1811
    %3419 = vmatprep.subr.bf16.mxu0 %v1808
    %3420 = vmatpush2.bf16.msra.mxu0 %v1807
    %3421 = vmatprep.subr.bf16.mxu0 %v1804
    %3422 = vmatpush2.bf16.msra.mxu0 %v1803
    %3423 = vmatprep.subr.bf16.mxu0 %v1800
    %3424 = vmatpush2.bf16.msra.mxu0 %v1799
    %3425 = vmatprep.subr.bf16.mxu0 %v1796
    %3426 = vmatpush2.bf16.msra.mxu0 %v1795
    %3427 = vmatprep.subr.bf16.mxu0 %v1792
    %3428 = vmatpush2.bf16.msra.mxu0 %v1791
    %3429 = vmatprep.mubr.bf16.mxu0 %v3396
    %3430 = vmatmul.mubr.bf16.gmra.mxu0 %v3298
    %v3431 = vpop.f32.mrf.mxu0
    %v3432 = vadd.f32 %v397, %v3431
    %v3433 = vpop.f32.mrf.mxu0
    %v3434 = vadd.f32 %v401, %v3433
    %v3435 = vpop.f32.mrf.mxu0
    %v3436 = vpop.f32.mrf.mxu0
    %3437 = vdwg.mxu0
    %3438 = vmatprep.subr.bf16.mxu0 %v1790
    %3439 = vmatpush1.bf16.msra.mxu0 %v1789
    %3440 = vmatprep.subr.bf16.mxu0 %v1786
    %3441 = vmatpush1.bf16.msra.mxu0 %v1785
    %3442 = vmatprep.subr.bf16.mxu0 %v1782
    %3443 = vmatpush1.bf16.msra.mxu0 %v1781
    %3444 = vmatprep.subr.bf16.mxu0 %v1778
    %3445 = vmatpush1.bf16.msra.mxu0 %v1777
    %3446 = vmatprep.subr.bf16.mxu0 %v1774
    %3447 = vmatpush1.bf16.msra.mxu0 %v1773
    %3448 = vmatprep.subr.bf16.mxu0 %v1770
    %3449 = vmatpush1.bf16.msra.mxu0 %v1769
    %3450 = vmatprep.subr.bf16.mxu0 %v1766
    %3451 = vmatpush1.bf16.msra.mxu0 %v1765
    %3452 = vmatprep.subr.bf16.mxu0 %v1762
    %3453 = vmatpush1.bf16.msra.mxu0 %v1761
    %3454 = vmatprep.subr.bf16.mxu0 %v1822
    %3455 = vmatpush2.bf16.msra.mxu0 %v1821
    %3456 = vmatprep.subr.bf16.mxu0 %v1818
    %3457 = vmatpush2.bf16.msra.mxu0 %v1817
    %3458 = vmatprep.subr.bf16.mxu0 %v1814
    %3459 = vmatpush2.bf16.msra.mxu0 %v1813
    %3460 = vmatprep.subr.bf16.mxu0 %v1810
    %3461 = vmatpush2.bf16.msra.mxu0 %v1809
    %3462 = vmatprep.subr.bf16.mxu0 %v1806
    %3463 = vmatpush2.bf16.msra.mxu0 %v1805
    %3464 = vmatprep.subr.bf16.mxu0 %v1802
    %3465 = vmatpush2.bf16.msra.mxu0 %v1801
    %3466 = vmatprep.subr.bf16.mxu0 %v1798
    %3467 = vmatpush2.bf16.msra.mxu0 %v1797
    %3468 = vmatprep.subr.bf16.mxu0 %v1794
    %3469 = vmatpush2.bf16.msra.mxu0 %v1793
    %3470 = vmatprep.mubr.bf16.mxu0 %v3396
    %3471 = vmatmul.mubr.bf16.gmra.mxu0 %v3298
    %v3472 = vpop.f32.mrf.mxu0
    %v3473 = vadd.f32 %v405, %v3472
    %v3474 = vpop.f32.mrf.mxu0
    %v3475 = vadd.f32 %v409, %v3474
    %v3476 = vpop.f32.mrf.mxu0
    %v3477 = vpop.f32.mrf.mxu0
    %3478 = vdwg.mxu0
    %v3479 = vtanh.pop %v3432
    %v3480 = vtanh.pop %v3434
    %v3481 = vtanh.pop %v3473
    %v3482 = vmul.f32 %v3479, 0.5
    %v3483 = vmul.f32 %v3480, 0.5
    %v3484 = vmul.f32 %v3481, 0.5
    %v3485 = vadd.f32 %v3482, 0.5
    %v3486 = vadd.f32 %v3483, 0.5
    %v3487 = vadd.f32 %v3484, 0.5
    %v3488 = vtanh.pop %v3475
    %v3489 = vmul.f32 %v3486, %v3189
    %v3490 = vmul.f32 %v3485, %v3488
    %v3491 = vadd.f32 %v3489, %v3490
    %v3492 = vtanh.pop %v3491
    %v3493 = vmul.f32 %v3487, %v3492
    %v3494 = vpack.c.bf16 %v3297, %v3297
    %v3495 = vpack.c.bf16 %v3395, %v3395
    %3496 = vmatprep.subr.bf16.mxu0 %v1103
    %3497 = vmatpush1.bf16.msra.mxu0 %v1102
    %3498 = vmatprep.subr.bf16.mxu0 %v1099
    %3499 = vmatpush1.bf16.msra.mxu0 %v1098
    %3500 = vmatprep.subr.bf16.mxu0 %v1095
    %3501 = vmatpush1.bf16.msra.mxu0 %v1094
    %3502 = vmatprep.subr.bf16.mxu0 %v1091
    %3503 = vmatpush1.bf16.msra.mxu0 %v1090
    %3504 = vmatprep.subr.bf16.mxu0 %v1087
    %3505 = vmatpush1.bf16.msra.mxu0 %v1086
    %3506 = vmatprep.subr.bf16.mxu0 %v1083
    %3507 = vmatpush1.bf16.msra.mxu0 %v1082
    %3508 = vmatprep.subr.bf16.mxu0 %v1079
    %3509 = vmatpush1.bf16.msra.mxu0 %v1078
    %3510 = vmatprep.subr.bf16.mxu0 %v1075
    %3511 = vmatpush1.bf16.msra.mxu0 %v1074
    %3512 = vmatprep.subr.bf16.mxu0 %v1135
    %3513 = vmatpush2.bf16.msra.mxu0 %v1134
    %3514 = vmatprep.subr.bf16.mxu0 %v1131
    %3515 = vmatpush2.bf16.msra.mxu0 %v1130
    %3516 = vmatprep.subr.bf16.mxu0 %v1127
    %3517 = vmatpush2.bf16.msra.mxu0 %v1126
    %3518 = vmatprep.subr.bf16.mxu0 %v1123
    %3519 = vmatpush2.bf16.msra.mxu0 %v1122
    %3520 = vmatprep.subr.bf16.mxu0 %v1119
    %3521 = vmatpush2.bf16.msra.mxu0 %v1118
    %3522 = vmatprep.subr.bf16.mxu0 %v1115
    %3523 = vmatpush2.bf16.msra.mxu0 %v1114
    %3524 = vmatprep.subr.bf16.mxu0 %v1111
    %3525 = vmatpush2.bf16.msra.mxu0 %v1110
    %3526 = vmatprep.subr.bf16.mxu0 %v1107
    %3527 = vmatpush2.bf16.msra.mxu0 %v1106
    %3528 = vmatprep.mubr.bf16.mxu0 %v3495
    %3529 = vmatmul.mubr.bf16.gmra.mxu0 %v3494
    %v3530 = vpop.f32.mrf.mxu0
    %v3531 = vadd.f32 %v375, %v3530
    %v3532 = vpop.f32.mrf.mxu0
    %v3533 = vadd.f32 %v379, %v3532
    %v3534 = vpop.f32.mrf.mxu0
    %v3535 = vpop.f32.mrf.mxu0
    %3536 = vdwg.mxu0
    %3537 = vmatprep.subr.bf16.mxu0 %v1105
    %3538 = vmatpush1.bf16.msra.mxu0 %v1104
    %3539 = vmatprep.subr.bf16.mxu0 %v1101
    %3540 = vmatpush1.bf16.msra.mxu0 %v1100
    %3541 = vmatprep.subr.bf16.mxu0 %v1097
    %3542 = vmatpush1.bf16.msra.mxu0 %v1096
    %3543 = vmatprep.subr.bf16.mxu0 %v1093
    %3544 = vmatpush1.bf16.msra.mxu0 %v1092
    %3545 = vmatprep.subr.bf16.mxu0 %v1089
    %3546 = vmatpush1.bf16.msra.mxu0 %v1088
    %3547 = vmatprep.subr.bf16.mxu0 %v1085
    %3548 = vmatpush1.bf16.msra.mxu0 %v1084
    %3549 = vmatprep.subr.bf16.mxu0 %v1081
    %3550 = vmatpush1.bf16.msra.mxu0 %v1080
    %3551 = vmatprep.subr.bf16.mxu0 %v1077
    %3552 = vmatpush1.bf16.msra.mxu0 %v1076
    %3553 = vmatprep.subr.bf16.mxu0 %v1137
    %3554 = vmatpush2.bf16.msra.mxu0 %v1136
    %3555 = vmatprep.subr.bf16.mxu0 %v1133
    %3556 = vmatpush2.bf16.msra.mxu0 %v1132
    %3557 = vmatprep.subr.bf16.mxu0 %v1129
    %3558 = vmatpush2.bf16.msra.mxu0 %v1128
    %3559 = vmatprep.subr.bf16.mxu0 %v1125
    %3560 = vmatpush2.bf16.msra.mxu0 %v1124
    %3561 = vmatprep.subr.bf16.mxu0 %v1121
    %3562 = vmatpush2.bf16.msra.mxu0 %v1120
    %3563 = vmatprep.subr.bf16.mxu0 %v1117
    %3564 = vmatpush2.bf16.msra.mxu0 %v1116
    %3565 = vmatprep.subr.bf16.mxu0 %v1113
    %3566 = vmatpush2.bf16.msra.mxu0 %v1112
    %3567 = vmatprep.subr.bf16.mxu0 %v1109
    %3568 = vmatpush2.bf16.msra.mxu0 %v1108
    %3569 = vmatprep.mubr.bf16.mxu0 %v3495
    %3570 = vmatmul.mubr.bf16.gmra.mxu0 %v3494
    %v3571 = vpop.f32.mrf.mxu0
    %v3572 = vadd.f32 %v383, %v3571
    %v3573 = vpop.f32.mrf.mxu0
    %v3574 = vadd.f32 %v387, %v3573
    %v3575 = vpop.f32.mrf.mxu0
    %v3576 = vpop.f32.mrf.mxu0
    %3577 = vdwg.mxu0
    %v3578 = vtanh.pop %v3531
    %v3579 = vtanh.pop %v3533
    %v3580 = vtanh.pop %v3572
    %v3581 = vmul.f32 %v3578, 0.5
    %v3582 = vmul.f32 %v3579, 0.5
    %v3583 = vmul.f32 %v3580, 0.5
    %v3584 = vadd.f32 %v3581, 0.5
    %v3585 = vadd.f32 %v3582, 0.5
    %v3586 = vadd.f32 %v3583, 0.5
    %v3587 = vtanh.pop %v3574
    %v3588 = vmul.f32 %v3585, %v3393
    %v3589 = vmul.f32 %v3584, %v3587
    %v3590 = vadd.f32 %v3588, %v3589
    %v3591 = vtanh.pop %v3590
    %v3592 = vmul.f32 %v3586, %v3591
    %v3593 = vpack.c.bf16 %v3493, %v3493
    %3594 = vmatprep.subr.bf16.mxu0 %v1788
    %3595 = vmatpush1.bf16.msra.mxu0 %v1787
    %3596 = vmatprep.subr.bf16.mxu0 %v1784
    %3597 = vmatpush1.bf16.msra.mxu0 %v1783
    %3598 = vmatprep.subr.bf16.mxu0 %v1780
    %3599 = vmatpush1.bf16.msra.mxu0 %v1779
    %3600 = vmatprep.subr.bf16.mxu0 %v1776
    %3601 = vmatpush1.bf16.msra.mxu0 %v1775
    %3602 = vmatprep.subr.bf16.mxu0 %v1772
    %3603 = vmatpush1.bf16.msra.mxu0 %v1771
    %3604 = vmatprep.subr.bf16.mxu0 %v1768
    %3605 = vmatpush1.bf16.msra.mxu0 %v1767
    %3606 = vmatprep.subr.bf16.mxu0 %v1764
    %3607 = vmatpush1.bf16.msra.mxu0 %v1763
    %3608 = vmatprep.subr.bf16.mxu0 %v1760
    %3609 = vmatpush1.bf16.msra.mxu0 %v1759
    %3610 = vmatprep.subr.bf16.mxu0 %v1820
    %3611 = vmatpush2.bf16.msra.mxu0 %v1819
    %3612 = vmatprep.subr.bf16.mxu0 %v1816
    %3613 = vmatpush2.bf16.msra.mxu0 %v1815
    %3614 = vmatprep.subr.bf16.mxu0 %v1812
    %3615 = vmatpush2.bf16.msra.mxu0 %v1811
    %3616 = vmatprep.subr.bf16.mxu0 %v1808
    %3617 = vmatpush2.bf16.msra.mxu0 %v1807
    %3618 = vmatprep.subr.bf16.mxu0 %v1804
    %3619 = vmatpush2.bf16.msra.mxu0 %v1803
    %3620 = vmatprep.subr.bf16.mxu0 %v1800
    %3621 = vmatpush2.bf16.msra.mxu0 %v1799
    %3622 = vmatprep.subr.bf16.mxu0 %v1796
    %3623 = vmatpush2.bf16.msra.mxu0 %v1795
    %3624 = vmatprep.subr.bf16.mxu0 %v1792
    %3625 = vmatpush2.bf16.msra.mxu0 %v1791
    %3626 = vmatprep.mubr.bf16.mxu0 %v3593
    %3627 = vmatmul.mubr.bf16.gmra.mxu0 %v3495
    %v3628 = vpop.f32.mrf.mxu0
    %v3629 = vadd.f32 %v397, %v3628
    %v3630 = vpop.f32.mrf.mxu0
    %v3631 = vadd.f32 %v401, %v3630
    %v3632 = vpop.f32.mrf.mxu0
    %v3633 = vpop.f32.mrf.mxu0
    %3634 = vdwg.mxu0
    %3635 = vmatprep.subr.bf16.mxu0 %v1790
    %3636 = vmatpush1.bf16.msra.mxu0 %v1789
    %3637 = vmatprep.subr.bf16.mxu0 %v1786
    %3638 = vmatpush1.bf16.msra.mxu0 %v1785
    %3639 = vmatprep.subr.bf16.mxu0 %v1782
    %3640 = vmatpush1.bf16.msra.mxu0 %v1781
    %3641 = vmatprep.subr.bf16.mxu0 %v1778
    %3642 = vmatpush1.bf16.msra.mxu0 %v1777
    %3643 = vmatprep.subr.bf16.mxu0 %v1774
    %3644 = vmatpush1.bf16.msra.mxu0 %v1773
    %3645 = vmatprep.subr.bf16.mxu0 %v1770
    %3646 = vmatpush1.bf16.msra.mxu0 %v1769
    %3647 = vmatprep.subr.bf16.mxu0 %v1766
    %3648 = vmatpush1.bf16.msra.mxu0 %v1765
    %3649 = vmatprep.subr.bf16.mxu0 %v1762
    %3650 = vmatpush1.bf16.msra.mxu0 %v1761
    %3651 = vmatprep.subr.bf16.mxu0 %v1822
    %3652 = vmatpush2.bf16.msra.mxu0 %v1821
    %3653 = vmatprep.subr.bf16.mxu0 %v1818
    %3654 = vmatpush2.bf16.msra.mxu0 %v1817
    %3655 = vmatprep.subr.bf16.mxu0 %v1814
    %3656 = vmatpush2.bf16.msra.mxu0 %v1813
    %3657 = vmatprep.subr.bf16.mxu0 %v1810
    %3658 = vmatpush2.bf16.msra.mxu0 %v1809
    %3659 = vmatprep.subr.bf16.mxu0 %v1806
    %3660 = vmatpush2.bf16.msra.mxu0 %v1805
    %3661 = vmatprep.subr.bf16.mxu0 %v1802
    %3662 = vmatpush2.bf16.msra.mxu0 %v1801
    %3663 = vmatprep.subr.bf16.mxu0 %v1798
    %3664 = vmatpush2.bf16.msra.mxu0 %v1797
    %3665 = vmatprep.subr.bf16.mxu0 %v1794
    %3666 = vmatpush2.bf16.msra.mxu0 %v1793
    %3667 = vmatprep.mubr.bf16.mxu0 %v3593
    %3668 = vmatmul.mubr.bf16.gmra.mxu0 %v3495
    %v3669 = vpop.f32.mrf.mxu0
    %v3670 = vadd.f32 %v405, %v3669
    %v3671 = vpop.f32.mrf.mxu0
    %v3672 = vadd.f32 %v409, %v3671
    %v3673 = vpop.f32.mrf.mxu0
    %v3674 = vpop.f32.mrf.mxu0
    %3675 = vdwg.mxu0
    %v3676 = vtanh.pop %v3629
    %v3677 = vtanh.pop %v3631
    %v3678 = vtanh.pop %v3670
    %v3679 = vmul.f32 %v3676, 0.5
    %v3680 = vmul.f32 %v3677, 0.5
    %v3681 = vmul.f32 %v3678, 0.5
    %v3682 = vadd.f32 %v3679, 0.5
    %v3683 = vadd.f32 %v3680, 0.5
    %v3684 = vadd.f32 %v3681, 0.5
    %v3685 = vtanh.pop %v3672
    %v3686 = vmul.f32 %v3683, %v3491
    %v3687 = vmul.f32 %v3682, %v3685
    %v3688 = vadd.f32 %v3686, %v3687
    %v3689 = vtanh.pop %v3688
    %v3690 = vmul.f32 %v3684, %v3689
    %v3691 = vpack.c.bf16 %v3592, %v3592
    %v3692 = vpack.c.bf16 %v3690, %v3690
    %3693 = vmatprep.subr.bf16.mxu0 %v1788
    %3694 = vmatpush1.bf16.msra.mxu0 %v1787
    %3695 = vmatprep.subr.bf16.mxu0 %v1784
    %3696 = vmatpush1.bf16.msra.mxu0 %v1783
    %3697 = vmatprep.subr.bf16.mxu0 %v1780
    %3698 = vmatpush1.bf16.msra.mxu0 %v1779
    %3699 = vmatprep.subr.bf16.mxu0 %v1776
    %3700 = vmatpush1.bf16.msra.mxu0 %v1775
    %3701 = vmatprep.subr.bf16.mxu0 %v1772
    %3702 = vmatpush1.bf16.msra.mxu0 %v1771
    %3703 = vmatprep.subr.bf16.mxu0 %v1768
    %3704 = vmatpush1.bf16.msra.mxu0 %v1767
    %3705 = vmatprep.subr.bf16.mxu0 %v1764
    %3706 = vmatpush1.bf16.msra.mxu0 %v1763
    %3707 = vmatprep.subr.bf16.mxu0 %v1760
    %3708 = vmatpush1.bf16.msra.mxu0 %v1759
    %3709 = vmatprep.subr.bf16.mxu0 %v1820
    %3710 = vmatpush2.bf16.msra.mxu0 %v1819
    %3711 = vmatprep.subr.bf16.mxu0 %v1816
    %3712 = vmatpush2.bf16.msra.mxu0 %v1815
    %3713 = vmatprep.subr.bf16.mxu0 %v1812
    %3714 = vmatpush2.bf16.msra.mxu0 %v1811
    %3715 = vmatprep.subr.bf16.mxu0 %v1808
    %3716 = vmatpush2.bf16.msra.mxu0 %v1807
    %3717 = vmatprep.subr.bf16.mxu0 %v1804
    %3718 = vmatpush2.bf16.msra.mxu0 %v1803
    %3719 = vmatprep.subr.bf16.mxu0 %v1800
    %3720 = vmatpush2.bf16.msra.mxu0 %v1799
    %3721 = vmatprep.subr.bf16.mxu0 %v1796
    %3722 = vmatpush2.bf16.msra.mxu0 %v1795
    %3723 = vmatprep.subr.bf16.mxu0 %v1792
    %3724 = vmatpush2.bf16.msra.mxu0 %v1791
    %3725 = vmatprep.mubr.bf16.mxu0 %v3692
    %3726 = vmatmul.mubr.bf16.gmra.mxu0 %v3691
    %v3727 = vpop.f32.mrf.mxu0
    %v3728 = vadd.f32 %v397, %v3727
    %v3729 = vpop.f32.mrf.mxu0
    %v3730 = vadd.f32 %v401, %v3729
    %v3731 = vpop.f32.mrf.mxu0
    %v3732 = vpop.f32.mrf.mxu0
    %3733 = vdwg.mxu0
    %3734 = vmatprep.subr.bf16.mxu0 %v1790
    %3735 = vmatpush1.bf16.msra.mxu0 %v1789
    %3736 = vmatprep.subr.bf16.mxu0 %v1786
    %3737 = vmatpush1.bf16.msra.mxu0 %v1785
    %3738 = vmatprep.subr.bf16.mxu0 %v1782
    %3739 = vmatpush1.bf16.msra.mxu0 %v1781
    %3740 = vmatprep.subr.bf16.mxu0 %v1778
    %3741 = vmatpush1.bf16.msra.mxu0 %v1777
    %3742 = vmatprep.subr.bf16.mxu0 %v1774
    %3743 = vmatpush1.bf16.msra.mxu0 %v1773
    %3744 = vmatprep.subr.bf16.mxu0 %v1770
    %3745 = vmatpush1.bf16.msra.mxu0 %v1769
    %3746 = vmatprep.subr.bf16.mxu0 %v1766
    %3747 = vmatpush1.bf16.msra.mxu0 %v1765
    %3748 = vmatprep.subr.bf16.mxu0 %v1762
    %3749 = vmatpush1.bf16.msra.mxu0 %v1761
    %3750 = vmatprep.subr.bf16.mxu0 %v1822
    %3751 = vmatpush2.bf16.msra.mxu0 %v1821
    %3752 = vmatprep.subr.bf16.mxu0 %v1818
    %3753 = vmatpush2.bf16.msra.mxu0 %v1817
    %3754 = vmatprep.subr.bf16.mxu0 %v1814
    %3755 = vmatpush2.bf16.msra.mxu0 %v1813
    %3756 = vmatprep.subr.bf16.mxu0 %v1810
    %3757 = vmatpush2.bf16.msra.mxu0 %v1809
    %3758 = vmatprep.subr.bf16.mxu0 %v1806
    %3759 = vmatpush2.bf16.msra.mxu0 %v1805
    %3760 = vmatprep.subr.bf16.mxu0 %v1802
    %3761 = vmatpush2.bf16.msra.mxu0 %v1801
    %3762 = vmatprep.subr.bf16.mxu0 %v1798
    %3763 = vmatpush2.bf16.msra.mxu0 %v1797
    %3764 = vmatprep.subr.bf16.mxu0 %v1794
    %3765 = vmatpush2.bf16.msra.mxu0 %v1793
    %3766 = vmatprep.mubr.bf16.mxu0 %v3692
    %3767 = vmatmul.mubr.bf16.gmra.mxu0 %v3691
    %v3768 = vpop.f32.mrf.mxu0
    %v3769 = vadd.f32 %v405, %v3768
    %v3770 = vpop.f32.mrf.mxu0
    %v3771 = vadd.f32 %v409, %v3770
    %v3772 = vpop.f32.mrf.mxu0
    %v3773 = vpop.f32.mrf.mxu0
    %3774 = vdwg.mxu0
    %v3775 = vtanh.pop %v3728
    %v3776 = vtanh.pop %v3730
    %v3777 = vtanh.pop %v3769
    %v3778 = vmul.f32 %v3775, 0.5
    %v3779 = vmul.f32 %v3776, 0.5
    %v3780 = vmul.f32 %v3777, 0.5
    %v3781 = vadd.f32 %v3778, 0.5
    %v3782 = vadd.f32 %v3779, 0.5
    %v3783 = vadd.f32 %v3780, 0.5
    %v3784 = vtanh.pop %v3771
    %v3785 = vmul.f32 %v3782, %v3688
    %v3786 = vmul.f32 %v3781, %v3784
    %v3787 = vadd.f32 %v3785, %v3786
    %v3788 = vtanh.pop %v3787
    %v3789 = vmul.f32 %v3783, %v3788
    %v3790 = vld [vmem:[%s8] sm:$0x1]
    %v3792 = vlaneseq
    %v3793 = vshrl.u32 %v3792, 7
    %v3794 = vsub.s32 0, %v3793
    %v3795 = vrot.slane %v3790, %v3794
    %v3797 = vmul.f32 %v3789, %v3795
    %3798 = vadd.xlane.f32.xlu0 %v3797
    %v3799 = vpop.xlane.xlu0 %3798
    %v3800 = vld [vmem:[#allocation3] sm:$0x1]
    %v3802 = vlaneseq
    %v3803 = vshrl.u32 %v3802, 7
    %v3804 = vsub.s32 0, %v3803
    %v3805 = vrot.slane %v3800, %v3804
    %v3807 = vadd.f32 %v3799, %v3805
    %v3808 = vmul.f32 %v3807, 0.5
    %v3809 = vtanh.pop %v3808
    %v3810 = vmul.f32 %v3809, 0.5
    %v3811 = vadd.f32 %v3810, 0.5
    %vm3812 = vcmask 7168
    %3813 = vst.msk [vmem:[%s10] sm:$0xff] %vm3812, %v3811
    // Predicated region
    $region54: #{classifier_forward.1} parent=1 // pred_check
      _
    $region55: #{classifier_forward.1} parent=1 // pred_check_branch
      %3815 = sbr.rel (0) target = $region57
    $region56: #{classifier_forward.1} parent=1 // pred_region
      _
    $region57: #{classifier_forward.1} parent=1 // pred_fallthru
      _
    // Predicated region
    $region58: #{classifier_forward.1} parent=1 // pred_check
      _
    $region59: #{classifier_forward.1} parent=1 // pred_check_branch
      %3817 = sbr.rel (0) target = $region61
    $region60: #{classifier_forward.1} parent=1 // pred_region
      _
    $region61: #{classifier_forward.1} parent=1 // pred_fallthru
      _
    %3818 = vsyncpa [#allocation5], 1
    %3819 = vsyncpa [#allocation7], 1

</llo_original>
